<compile_context>
chip_gen: v7x
topology: tpu7x:2x2x1
jax: 0.10.0
libtpu: 0.0.40
codegen_flags: <defaults>
</compile_context>

<pallas_src>
import jax
import jax.numpy as jnp
from jax.experimental import pallas as pl
from jax.experimental.pallas import tpu as pltpu

MASK_IDX = 0   # coordinate kept / fed to map_st   (mask = [1, 0])
OTHER_IDX = 1  # coordinate replaced by interpolated value

_HIGHEST = jax.lax.Precision.HIGHEST


def _softplus(z):
    # numerically stable softplus, same formulation in kernel and reference
    return jnp.maximum(z, 0.0) + jnp.log1p(jnp.exp(-jnp.abs(z)))


def _warp_from_params(qx, dxl2, dxl1, dxr1, dxr2, dyl2, dyl1, dyr1, dyr2, kl, kr):
    """Monotone piecewise-linear warp shared by kernel and reference.

    Algebraically identical to CouplingLayer.get_xy_compute + InterpGrad.forw_compute:
    the virtual knots at +-10000 define straight lines of slope kl / kr through
    (xL2, yL2) / (xR2, yR2), so the outer segments are evaluated as direct linear
    extrapolations (avoids the catastrophic f32 cancellation of the literal form).
    All ops are elementwise, so the same code runs on [1, TR] rows in the kernel
    and [R, 1] columns in the reference.
    """
    kl = kl * 2.0
    kr = kr * 2.0
    xL1 = -dxl1
    xL2 = -dxl1 - dxl2
    yL1 = -dyl1
    yL2 = -dyl1 - dyl2
    xR1 = dxr1
    xR2 = dxr1 + dxr2
    yR1 = dyr1
    yR2 = dyr1 + dyr2
    xL3 = xL2 - 10000.0
    xR3 = xR2 + 10000.0

    # clamp exactly like forw_compute (outer virtual knots scaled by 0.99)
    qx = jnp.clip(qx, xL3 * 0.99, xR3 * 0.99)

    # inner-segment slopes: 3 exact divides on a row tile -> cheap, accuracy matters
    s_L2L1 = (yL1 - yL2) / (xL1 - xL2)
    s_L1R1 = (yR1 - yL1) / (xR1 - xL1)
    s_R1R2 = (yR2 - yR1) / (xR2 - xR1)

    v0 = yL2 + kl * (qx - xL2)       # qx in [xL3, xL2)
    v1 = yL2 + s_L2L1 * (qx - xL2)   # [xL2, xL1)
    v2 = yL1 + s_L1R1 * (qx - xL1)   # [xL1, xR1)
    v3 = yR1 + s_R1R2 * (qx - xR1)   # [xR1, xR2)
    v4 = yR2 + kr * (qx - xR2)       # [xR2, xR3)

    # qx is clamped inside (xL3, xR3), so the threshold chain partitions exactly
    # like the original per-segment (qx >= xl) & (qx < xr) masks.
    return jnp.where(qx < xL2, v0,
           jnp.where(qx < xL1, v1,
           jnp.where(qx < xR1, v2,
           jnp.where(qx < xR2, v3, v4))))


def coupling_kernel(x_ref, t_ref, w1x_ref, w1t_ref, b1_ref, w2_ref, b2_ref, y_ref):
    # Feature-major tiles: x_ref [2, TR], t_ref [T, TR]; weights are tiny & resident.
    x0 = x_ref[MASK_IDX:MASK_IDX + 1, :]      # [1, TR] kept coordinate
    qx = x_ref[OTHER_IDX:OTHER_IDX + 1, :]    # [1, TR] query coordinate

    # ---- map_st: tiny MLP on (tanh(x0), t_feat) -> 10 positive params ----
    # No concat: split-weight form  hid = w1x * tanh(x0) + W1t^T @ t + b1
    th = jnp.tanh(x0)                                             # [1, TR]
    hid = w1x_ref[...] * th                                       # [H,1]*[1,TR] -> [H,TR]
    hid = hid + jnp.dot(w1t_ref[...], t_ref[...],
                        preferred_element_type=jnp.float32,
                        precision=_HIGHEST)                        # [H, TR]
    hid = jnp.maximum(hid + b1_ref[...], 0.0)
    z = jnp.dot(w2_ref[...], hid,
                preferred_element_type=jnp.float32,
                precision=_HIGHEST) + b2_ref[...]                  # [10, TR]
    dxdykk = _softplus(z)                                          # all > 0

    # ---- piecewise-linear warp, sublane row slices, lane-dense math ----
    params = tuple(dxdykk[i:i + 1, :] for i in range(10))
    out = _warp_from_params(qx, *params)                           # [1, TR]

    # y = x * mask ; y[(1-mask)] = warped value — two lane-dense row stores
    y_ref[MASK_IDX:MASK_IDX + 1, :] = x0
    y_ref[OTHER_IDX:OTHER_IDX + 1, :] = out


def coupling_forward(x, t_feat, w1, b1, w2, b2, *, tile_rows=512):
    """x: [R, 2], t_feat: [R, T]; returns (y [R, 2], None) like CouplingLayer.forward."""
    R, two = x.shape
    assert two == 2
    T = t_feat.shape[-1]
    Din, H = w1.shape
    assert Din == 1 + T
    n_out = w2.shape[-1]          # 10

    # Pad rows to a multiple of the tile and go feature-major (lane axis = rows).
    Rp = int(pl.cdiv(R, tile_rows)) * tile_rows
    xT = jnp.pad(jnp.transpose(x), ((0, 0), (0, Rp - R)))        # [2, Rp]
    tT = jnp.pad(jnp.transpose(t_feat), ((0, 0), (0, Rp - R)))   # [T, Rp]

    # Pre-transpose / split the weights in the wrapper (layout plumbing, not compute).
    w1x = jnp.transpose(w1[0:1, :])     # [H, 1]  (row that multiplies tanh(x0))
    w1t = jnp.transpose(w1[1:, :])      # [H, T]
    b1c = jnp.reshape(b1, (H, 1))       # [H, 1]
    w2t = jnp.transpose(w2)             # [10, H]
    b2c = jnp.reshape(b2, (n_out, 1))   # [10, 1]

    yT = pl.pallas_call(
        coupling_kernel,
        out_shape=jax.ShapeDtypeStruct((2, Rp), jnp.float32),
        grid_spec=pltpu.PrefetchScalarGridSpec(
            num_scalar_prefetch=0,
            grid=(Rp // tile_rows,),
            in_specs=[
                pl.BlockSpec((2, tile_rows), lambda i: (0, i)),
                pl.BlockSpec((T, tile_rows), lambda i: (0, i)),
                pl.BlockSpec((H, 1), lambda i: (0, 0)),
                pl.BlockSpec((H, T), lambda i: (0, 0)),
                pl.BlockSpec((H, 1), lambda i: (0, 0)),
                pl.BlockSpec((n_out, H), lambda i: (0, 0)),
                pl.BlockSpec((n_out, 1), lambda i: (0, 0)),
            ],
            out_specs=pl.BlockSpec((2, tile_rows), lambda i: (0, i)),
        ),
        compiler_params=pltpu.CompilerParams(
            dimension_semantics=("parallel",)),
    )(xT, tT, w1x, w1t, b1c, w2t, b2c)

    y = jnp.transpose(yT[:, :R])        # back to [R, 2]
    return y, None                       # matches CouplingLayer.forward's (y, None)


def coupling_reference(x, t_feat, w1, b1, w2, b2):
    """Pure-JAX reference mirroring the PyTorch forward semantics (row-major)."""
    xa = x[:, MASK_IDX:MASK_IDX + 1]
    qx = x[:, OTHER_IDX:OTHER_IDX + 1]
    inp = jnp.concatenate([jnp.tanh(xa), t_feat], axis=-1)
    hid = jnp.maximum(jnp.dot(inp, w1, precision=_HIGHEST) + b1, 0.0)
    dxdykk = _softplus(jnp.dot(hid, w2, precision=_HIGHEST) + b2)   # [R, 10]
    params = tuple(dxdykk[:, i:i + 1] for i in range(10))
    out = _warp_from_params(qx, *params)                             # [R, 1]
    return jnp.concatenate([xa, out], axis=-1)


if __name__ == "__main__":
    key = jax.random.PRNGKey(0)
    kx, kt, k1, k2, k3, k4 = jax.random.split(key, 6)

    N, P = 4, 256          # R = 1024 flattened points (2 grid steps of 512 rows)
    T, H = 8, 32           # t_feat dim, MLP hidden
    Din = 1 + T
    R = N * P

    x = jax.random.normal(kx, (R, 2), dtype=jnp.float32)
    t_feat = jax.random.normal(kt, (R, T), dtype=jnp.float32)
    w1 = 0.3 * jax.random.normal(k1, (Din, H), dtype=jnp.float32)
    b1 = 0.1 * jax.random.normal(k2, (1, H), dtype=jnp.float32)
    w2 = 0.3 * jax.random.normal(k3, (H, 10), dtype=jnp.float32)
    b2 = 0.1 * jax.random.normal(k4, (1, 10), dtype=jnp.float32)

    y, _ = coupling_forward(x, t_feat, w1, b1, w2, b2, tile_rows=512)
    y = jax.block_until_ready(y)

    y_ref = coupling_reference(x, t_feat, w1, b1, w2, b2)
    # f32 tolerance: MLP differences (~1e-6) can be amplified by steep inner-segment
    # slopes; the shared warp formulation keeps the worst case well below 1e-3.
    assert jnp.allclose(y, y_ref, atol=2e-3, rtol=2e-3), "mismatch vs reference"
    assert jnp.array_equal(y[:, MASK_IDX], x[:, MASK_IDX]), "kept coordinate changed"

    # reshape back to [N, P, 2] like the module's y shape
    _ = y.reshape(N, P, 2)
    print("KERNEL_OK")
</pallas_src>

<mosaic_0001>
module attributes {stable_mosaic.version = 11 : i64} {
  func.func @coupling_kernel(%arg0: i32, %arg1: memref<2x512xf32, #tpu.memory_space<vmem>>, %arg2: memref<8x512xf32, #tpu.memory_space<vmem>>, %arg3: memref<32x1xf32, #tpu.memory_space<vmem>>, %arg4: memref<32x8xf32, #tpu.memory_space<vmem>>, %arg5: memref<32x1xf32, #tpu.memory_space<vmem>>, %arg6: memref<10x32xf32, #tpu.memory_space<vmem>>, %arg7: memref<10x1xf32, #tpu.memory_space<vmem>>, %arg8: memref<2x512xf32, #tpu.memory_space<vmem>>) attributes {dimension_semantics = [#tpu.dimension_semantics<parallel>], iteration_bounds = array<i64: 2>, scalar_prefetch = 0 : i64, scratch_operands = 0 : i64, tpu.core_type = #tpu.core_type<tc>, window_params = [{transform_indices = @transform_0, window_bounds = array<i64: 2, 512>}, {transform_indices = @transform_1, window_bounds = array<i64: 8, 512>}, {pipeline_mode = #tpu.pipeline_mode<synchronous>, transform_indices = @transform_2, window_bounds = array<i64: 32, 1>}, {pipeline_mode = #tpu.pipeline_mode<synchronous>, transform_indices = @transform_3, window_bounds = array<i64: 32, 8>}, {pipeline_mode = #tpu.pipeline_mode<synchronous>, transform_indices = @transform_4, window_bounds = array<i64: 32, 1>}, {pipeline_mode = #tpu.pipeline_mode<synchronous>, transform_indices = @transform_5, window_bounds = array<i64: 10, 32>}, {pipeline_mode = #tpu.pipeline_mode<synchronous>, transform_indices = @transform_6, window_bounds = array<i64: 10, 1>}, {transform_indices = @transform_7, window_bounds = array<i64: 2, 512>}]} {
    %c0 = arith.constant 0 : index
    %c0_0 = arith.constant 0 : index
    %0 = vector.load %arg1[%c0, %c0_0] : memref<2x512xf32, #tpu.memory_space<vmem>>, vector<1x512xf32>
    %c1 = arith.constant 1 : index
    %c0_1 = arith.constant 0 : index
    %1 = vector.load %arg1[%c1, %c0_1] : memref<2x512xf32, #tpu.memory_space<vmem>>, vector<1x512xf32>
    %2 = math.tanh %0 : vector<1x512xf32>
    %c0_2 = arith.constant 0 : index
    %c0_3 = arith.constant 0 : index
    %3 = vector.load %arg3[%c0_2, %c0_3] : memref<32x1xf32, #tpu.memory_space<vmem>>, vector<32x1xf32>
    %4 = vector.broadcast %3 : vector<32x1xf32> to vector<32x512xf32>
    %5 = vector.broadcast %2 : vector<1x512xf32> to vector<32x512xf32>
    %6 = arith.mulf %4, %5 : vector<32x512xf32>
    %c0_4 = arith.constant 0 : index
    %c0_5 = arith.constant 0 : index
    %7 = vector.load %arg4[%c0_4, %c0_5] : memref<32x8xf32, #tpu.memory_space<vmem>>, vector<32x8xf32>
    %c0_6 = arith.constant 0 : index
    %c0_7 = arith.constant 0 : index
    %8 = vector.load %arg2[%c0_6, %c0_7] : memref<8x512xf32, #tpu.memory_space<vmem>>, vector<8x512xf32>
    %cst = arith.constant dense<0.000000e+00> : vector<32x512xf32>
    %9 = tpu.matmul %7, %8, %cst {dimension_numbers = #tpu.dot_dimension_numbers<[1], [0], [0], [1], [0, 0, 1, 1], [], []>, precision = #tpu.contract_precision<fp32>} : vector<32x8xf32>, vector<8x512xf32>, vector<32x512xf32> -> vector<32x512xf32>
    %10 = arith.addf %6, %9 : vector<32x512xf32>
    %c0_8 = arith.constant 0 : index
    %c0_9 = arith.constant 0 : index
    %11 = vector.load %arg5[%c0_8, %c0_9] : memref<32x1xf32, #tpu.memory_space<vmem>>, vector<32x1xf32>
    %12 = vector.broadcast %11 : vector<32x1xf32> to vector<32x512xf32>
    %13 = arith.addf %10, %12 : vector<32x512xf32>
    %cst_10 = arith.constant 0.000000e+00 : f32
    %14 = vector.broadcast %cst_10 : f32 to vector<32x512xf32>
    %15 = arith.maximumf %13, %14 : vector<32x512xf32>
    %c0_11 = arith.constant 0 : index
    %c0_12 = arith.constant 0 : index
    %16 = vector.load %arg6[%c0_11, %c0_12] : memref<10x32xf32, #tpu.memory_space<vmem>>, vector<10x32xf32>
    %cst_13 = arith.constant dense<0.000000e+00> : vector<10x512xf32>
    %17 = tpu.matmul %16, %15, %cst_13 {dimension_numbers = #tpu.dot_dimension_numbers<[1], [0], [0], [1], [0, 0, 1, 1], [], []>, precision = #tpu.contract_precision<fp32>} : vector<10x32xf32>, vector<32x512xf32>, vector<10x512xf32> -> vector<10x512xf32>
    %c0_14 = arith.constant 0 : index
    %c0_15 = arith.constant 0 : index
    %18 = vector.load %arg7[%c0_14, %c0_15] : memref<10x1xf32, #tpu.memory_space<vmem>>, vector<10x1xf32>
    %19 = vector.broadcast %18 : vector<10x1xf32> to vector<10x512xf32>
    %20 = arith.addf %17, %19 : vector<10x512xf32>
    %cst_16 = arith.constant 0.000000e+00 : f32
    %21 = vector.broadcast %cst_16 : f32 to vector<10x512xf32>
    %22 = arith.maximumf %20, %21 : vector<10x512xf32>
    %23 = math.absf %20 : vector<10x512xf32>
    %cst_17 = arith.constant 0.000000e+00 : f32
    %24 = vector.broadcast %cst_17 : f32 to vector<10x512xf32>
    %25 = arith.subf %24, %23 : vector<10x512xf32>
    %26 = math.exp %25 : vector<10x512xf32>
    %27 = math.log1p %26 : vector<10x512xf32>
    %28 = arith.addf %22, %27 : vector<10x512xf32>
    %29 = vector.extract_strided_slice %28 {offsets = [0, 0], sizes = [1, 512], strides = [1, 1]} : vector<10x512xf32> to vector<1x512xf32>
    %30 = vector.extract_strided_slice %28 {offsets = [1, 0], sizes = [1, 512], strides = [1, 1]} : vector<10x512xf32> to vector<1x512xf32>
    %31 = vector.extract_strided_slice %28 {offsets = [2, 0], sizes = [1, 512], strides = [1, 1]} : vector<10x512xf32> to vector<1x512xf32>
    %32 = vector.extract_strided_slice %28 {offsets = [3, 0], sizes = [1, 512], strides = [1, 1]} : vector<10x512xf32> to vector<1x512xf32>
    %33 = vector.extract_strided_slice %28 {offsets = [4, 0], sizes = [1, 512], strides = [1, 1]} : vector<10x512xf32> to vector<1x512xf32>
    %34 = vector.extract_strided_slice %28 {offsets = [5, 0], sizes = [1, 512], strides = [1, 1]} : vector<10x512xf32> to vector<1x512xf32>
    %35 = vector.extract_strided_slice %28 {offsets = [6, 0], sizes = [1, 512], strides = [1, 1]} : vector<10x512xf32> to vector<1x512xf32>
    %36 = vector.extract_strided_slice %28 {offsets = [7, 0], sizes = [1, 512], strides = [1, 1]} : vector<10x512xf32> to vector<1x512xf32>
    %37 = vector.extract_strided_slice %28 {offsets = [8, 0], sizes = [1, 512], strides = [1, 1]} : vector<10x512xf32> to vector<1x512xf32>
    %38 = vector.extract_strided_slice %28 {offsets = [9, 0], sizes = [1, 512], strides = [1, 1]} : vector<10x512xf32> to vector<1x512xf32>
    %cst_18 = arith.constant 2.000000e+00 : f32
    %39 = vector.broadcast %cst_18 : f32 to vector<1x512xf32>
    %40 = arith.mulf %37, %39 : vector<1x512xf32>
    %cst_19 = arith.constant 2.000000e+00 : f32
    %41 = vector.broadcast %cst_19 : f32 to vector<1x512xf32>
    %42 = arith.mulf %38, %41 : vector<1x512xf32>
    %cst_20 = arith.constant 0.000000e+00 : f32
    %43 = vector.broadcast %cst_20 : f32 to vector<1x512xf32>
    %44 = arith.subf %43, %30 : vector<1x512xf32>
    %cst_21 = arith.constant 0.000000e+00 : f32
    %45 = vector.broadcast %cst_21 : f32 to vector<1x512xf32>
    %46 = arith.subf %45, %30 : vector<1x512xf32>
    %47 = arith.subf %46, %29 : vector<1x512xf32>
    %cst_22 = arith.constant 0.000000e+00 : f32
    %48 = vector.broadcast %cst_22 : f32 to vector<1x512xf32>
    %49 = arith.subf %48, %34 : vector<1x512xf32>
    %cst_23 = arith.constant 0.000000e+00 : f32
    %50 = vector.broadcast %cst_23 : f32 to vector<1x512xf32>
    %51 = arith.subf %50, %34 : vector<1x512xf32>
    %52 = arith.subf %51, %33 : vector<1x512xf32>
    %53 = arith.addf %31, %32 : vector<1x512xf32>
    %54 = arith.addf %35, %36 : vector<1x512xf32>
    %cst_24 = arith.constant 1.000000e+04 : f32
    %55 = vector.broadcast %cst_24 : f32 to vector<1x512xf32>
    %56 = arith.subf %47, %55 : vector<1x512xf32>
    %cst_25 = arith.constant 1.000000e+04 : f32
    %57 = vector.broadcast %cst_25 : f32 to vector<1x512xf32>
    %58 = arith.addf %53, %57 : vector<1x512xf32>
    %cst_26 = arith.constant 9.900000e-01 : f32
    %59 = vector.broadcast %cst_26 : f32 to vector<1x512xf32>
    %60 = arith.mulf %56, %59 : vector<1x512xf32>
    %cst_27 = arith.constant 9.900000e-01 : f32
    %61 = vector.broadcast %cst_27 : f32 to vector<1x512xf32>
    %62 = arith.mulf %58, %61 : vector<1x512xf32>
    %63 = arith.maximumf %60, %1 : vector<1x512xf32>
    %64 = arith.minimumf %62, %63 : vector<1x512xf32>
    %65 = arith.subf %49, %52 : vector<1x512xf32>
    %66 = arith.subf %44, %47 : vector<1x512xf32>
    %67 = arith.divf %65, %66 : vector<1x512xf32>
    %68 = arith.subf %35, %49 : vector<1x512xf32>
    %69 = arith.subf %31, %44 : vector<1x512xf32>
    %70 = arith.divf %68, %69 : vector<1x512xf32>
    %71 = arith.subf %54, %35 : vector<1x512xf32>
    %72 = arith.subf %53, %31 : vector<1x512xf32>
    %73 = arith.divf %71, %72 : vector<1x512xf32>
    %74 = arith.subf %64, %47 : vector<1x512xf32>
    %75 = arith.mulf %40, %74 : vector<1x512xf32>
    %76 = arith.addf %52, %75 : vector<1x512xf32>
    %77 = arith.subf %64, %47 : vector<1x512xf32>
    %78 = arith.mulf %67, %77 : vector<1x512xf32>
    %79 = arith.addf %52, %78 : vector<1x512xf32>
    %80 = arith.subf %64, %44 : vector<1x512xf32>
    %81 = arith.mulf %70, %80 : vector<1x512xf32>
    %82 = arith.addf %49, %81 : vector<1x512xf32>
    %83 = arith.subf %64, %31 : vector<1x512xf32>
    %84 = arith.mulf %73, %83 : vector<1x512xf32>
    %85 = arith.addf %35, %84 : vector<1x512xf32>
    %86 = arith.subf %64, %53 : vector<1x512xf32>
    %87 = arith.mulf %42, %86 : vector<1x512xf32>
    %88 = arith.addf %54, %87 : vector<1x512xf32>
    %89 = arith.cmpf olt, %64, %47 : vector<1x512xf32>
    %90 = arith.cmpf olt, %64, %44 : vector<1x512xf32>
    %91 = arith.cmpf olt, %64, %31 : vector<1x512xf32>
    %92 = arith.cmpf olt, %64, %53 : vector<1x512xf32>
    %93 = arith.select %92, %85, %88 : vector<1x512xi1>, vector<1x512xf32>
    %94 = arith.select %91, %82, %93 : vector<1x512xi1>, vector<1x512xf32>
    %95 = arith.select %90, %79, %94 : vector<1x512xi1>, vector<1x512xf32>
    %96 = arith.select %89, %76, %95 : vector<1x512xi1>, vector<1x512xf32>
    %c0_28 = arith.constant 0 : index
    %c0_29 = arith.constant 0 : index
    %97 = vector.load %arg8[%c0_28, %c0_29] : memref<2x512xf32, #tpu.memory_space<vmem>>, vector<1x512xf32>
    tpu.vector_store %arg8[%c0_28, %c0_29], %0 {strides = array<i32>} : memref<2x512xf32, #tpu.memory_space<vmem>>, vector<1x512xf32>,
    %c1_30 = arith.constant 1 : index
    %c0_31 = arith.constant 0 : index
    %98 = vector.load %arg8[%c1_30, %c0_31] : memref<2x512xf32, #tpu.memory_space<vmem>>, vector<1x512xf32>
    tpu.vector_store %arg8[%c1_30, %c0_31], %96 {strides = array<i32>} : memref<2x512xf32, #tpu.memory_space<vmem>>, vector<1x512xf32>,
    return
  }
  func.func @transform_0(%arg0: i32) -> (i32, i32) {
    %c0_i32 = arith.constant 0 : i32
    %c0_i32_0 = arith.constant 0 : i32
    return %c0_i32, %arg0 : i32, i32
  }
  func.func @transform_1(%arg0: i32) -> (i32, i32) {
    %c0_i32 = arith.constant 0 : i32
    %c0_i32_0 = arith.constant 0 : i32
    return %c0_i32, %arg0 : i32, i32
  }
  func.func @transform_2(%arg0: i32) -> (i32, i32) {
    %c0_i32 = arith.constant 0 : i32
    %c0_i32_0 = arith.constant 0 : i32
    %c0_i32_1 = arith.constant 0 : i32
    return %c0_i32, %c0_i32_0 : i32, i32
  }
  func.func @transform_3(%arg0: i32) -> (i32, i32) {
    %c0_i32 = arith.constant 0 : i32
    %c0_i32_0 = arith.constant 0 : i32
    %c0_i32_1 = arith.constant 0 : i32
    return %c0_i32, %c0_i32_0 : i32, i32
  }
  func.func @transform_4(%arg0: i32) -> (i32, i32) {
    %c0_i32 = arith.constant 0 : i32
    %c0_i32_0 = arith.constant 0 : i32
    %c0_i32_1 = arith.constant 0 : i32
    return %c0_i32, %c0_i32_0 : i32, i32
  }
  func.func @transform_5(%arg0: i32) -> (i32, i32) {
    %c0_i32 = arith.constant 0 : i32
    %c0_i32_0 = arith.constant 0 : i32
    %c0_i32_1 = arith.constant 0 : i32
    return %c0_i32, %c0_i32_0 : i32, i32
  }
  func.func @transform_6(%arg0: i32) -> (i32, i32) {
    %c0_i32 = arith.constant 0 : i32
    %c0_i32_0 = arith.constant 0 : i32
    %c0_i32_1 = arith.constant 0 : i32
    return %c0_i32, %c0_i32_0 : i32, i32
  }
  func.func @transform_7(%arg0: i32) -> (i32, i32) {
    %c0_i32 = arith.constant 0 : i32
    %c0_i32_0 = arith.constant 0 : i32
    return %c0_i32, %arg0 : i32, i32
  }
}

</mosaic_0001>

<llo_original>
// kernel: tpu_custom_call.1
$region0: #{tpu_custom_call.1}
  #allocation0 [shape = 'u32[]', space=smem, size = 0x4, offset = 0x4, fixed_abs, tag = 'smem constant byte address 0x4 - core index']
  #allocation1 [shape = 'u32[144,128]{1,0:T(1,128)}', space=vmem, size = 0x12000, scoped, tag = 'internal scratch']
  %s0 = inlined_call_operand.vmem [shape: f32[2,1024], index: 0, kind: input, shape index: {}]
  %s1 = inlined_call_operand.vmem [shape: f32[8,1024], index: 1, kind: input, shape index: {}]
  %s2 = inlined_call_operand.vmem [shape: f32[32,1], index: 2, kind: input, shape index: {}]
  %s3 = inlined_call_operand.vmem [shape: f32[32,8], index: 3, kind: input, shape index: {}]
  %s4 = inlined_call_operand.vmem [shape: f32[32,1], index: 4, kind: input, shape index: {}]
  %s5 = inlined_call_operand.vmem [shape: f32[10,32], index: 5, kind: input, shape index: {}]
  %s6 = inlined_call_operand.vmem [shape: f32[10,1], index: 6, kind: input, shape index: {}]
  %s7 = inlined_call_operand.hbm [shape: f32[2,1024], index: 7, kind: output, shape index: {}]
  %s8 = sld [smem:[#allocation0]]
  $region61: #{tpu_custom_call.1} parent=0
    _
  %s10 = ssub.s32 1, %s8
  %s11 = scalar_select 0, %s10, %s8
  $region1: #{tpu_custom_call.1} parent=0
    #allocation2 [shape = 'u8[8192]{0}', space=vmem, size = 0x2000, scoped, tag = 'output window, operand 0']
    #allocation3 [shape = 's32[2]{0}', space=sflag, size = 0x8, scoped, tag = 'scoped memory for tpu_custom_call.1']
    %12 = vsyncpa [#allocation3], 0
    %s13 = scalar_lea.sflag [#allocation3], 1
    %14 = vsyncpa %s13, 0
    loop: start=0, step=1, limit=4
    $region2: #{tpu_custom_call.1} parent=1 // loop_pre_header
      _
    $region3: #{tpu_custom_call.1} parent=1 // loop_header
      %s16 = sphi 0, %s20
      %p17 = scmp.ge.s32.totalorder %s16, 4
      %s26 = sphi 0, %s28
      %s29 = sphi 0, %s26
      %s30 = sphi 0, %s29
      %s46 = sphi 0, %s30
      %s52 = sphi 0, %s54
      %s55 = sphi 0, %s52
      %s56 = sphi 0, %s55
      %s72 = sphi 0, %s56
      %s76 = sphi 0, %s76
      %s78 = sphi 0, %s76
      %s79 = sphi 0, %s78
      %s93 = sphi 0, %s79
      %s97 = sphi 0, %s97
      %s99 = sphi 0, %s97
      %s100 = sphi 0, %s99
      %s114 = sphi 0, %s100
      %s118 = sphi 0, %s118
      %s120 = sphi 0, %s118
      %s121 = sphi 0, %s120
      %s135 = sphi 0, %s121
      %s139 = sphi 0, %s139
      %s141 = sphi 0, %s139
      %s142 = sphi 0, %s141
      %s156 = sphi 0, %s142
      %s160 = sphi 0, %s160
      %s162 = sphi 0, %s160
      %s163 = sphi 0, %s162
      %s177 = sphi 0, %s163
      %s183 = sphi 0, %s185
      %s186 = sphi 0, %s183
      %s187 = sphi 0, %s186
      %s203 = sphi 0, %s187
    $region4: #{tpu_custom_call.1} parent=1 // loop_header_branch
      %19 = sbr.rel (%p17) target = $region8
    $region5: #{tpu_custom_call.1} parent=1 // loop_body
      %s21 = ssub.s32 %s16, 1
      %s22 = ssub.s32 %s16, 2
      %s23 = sadd.s32 %s16, 1
      %s24 = ssub.s32 %s16, %s23
      %p25 = scmp.eq.s32.totalorder %s24, 0
      %s27 = sadd.s32 %s26, 1
      %s28 = scalar_select %p25, %s26, %s27
      %p31 = pneg %p25
      %p32 = scmp.eq.s32.totalorder %s16, 1
      %p33 = por %p31, %p32
      %p34 = scmp.ne.s32.totalorder %s26, %s29
      %p35 = scmp.eq.s32.totalorder %s16, 0
      %p36 = por %p34, %p35
      %p37 = scmp.ne.s32.totalorder %s26, %s29
      %p38 = scmp.eq.s32.totalorder %s21, 1
      %p39 = por %p37, %p38
      %p40 = scmp.ne.s32.totalorder %s29, %s30
      %p41 = scmp.eq.s32.totalorder %s21, 0
      %p42 = por %p40, %p41
      %p43 = scmp.ne.s32.totalorder %s29, %s30
      %p44 = scmp.eq.s32.totalorder %s22, 1
      %p45 = por %p43, %p44
      %p47 = scmp.ne.s32.totalorder %s30, %s46
      %p48 = scmp.eq.s32.totalorder %s22, 0
      %p49 = por %p47, %p48
      %s50 = ssub.s32 %s16, %s23
      %p51 = scmp.eq.s32.totalorder %s50, 0
      %s53 = sadd.s32 %s52, 1
      %s54 = scalar_select %p51, %s52, %s53
      %p57 = pneg %p51
      %p58 = scmp.eq.s32.totalorder %s16, 1
      %p59 = por %p57, %p58
      %p60 = scmp.ne.s32.totalorder %s52, %s55
      %p61 = scmp.eq.s32.totalorder %s16, 0
      %p62 = por %p60, %p61
      %p63 = scmp.ne.s32.totalorder %s52, %s55
      %p64 = scmp.eq.s32.totalorder %s21, 1
      %p65 = por %p63, %p64
      %p66 = scmp.ne.s32.totalorder %s55, %s56
      %p67 = scmp.eq.s32.totalorder %s21, 0
      %p68 = por %p66, %p67
      %p69 = scmp.ne.s32.totalorder %s55, %s56
      %p70 = scmp.eq.s32.totalorder %s22, 1
      %p71 = por %p69, %p70
      %p73 = scmp.ne.s32.totalorder %s56, %s72
      %p74 = scmp.eq.s32.totalorder %s22, 0
      %p75 = por %p73, %p74
      %s77 = sadd.s32 %s76, 1
      %p80 = scmp.eq.s32.totalorder %s16, 1
      %p81 = scmp.ne.s32.totalorder %s76, %s78
      %p82 = scmp.eq.s32.totalorder %s16, 0
      %p83 = por %p81, %p82
      %p84 = scmp.ne.s32.totalorder %s76, %s78
      %p85 = scmp.eq.s32.totalorder %s21, 1
      %p86 = por %p84, %p85
      %p87 = scmp.ne.s32.totalorder %s78, %s79
      %p88 = scmp.eq.s32.totalorder %s21, 0
      %p89 = por %p87, %p88
      %p90 = scmp.ne.s32.totalorder %s78, %s79
      %p91 = scmp.eq.s32.totalorder %s22, 1
      %p92 = por %p90, %p91
      %p94 = scmp.ne.s32.totalorder %s79, %s93
      %p95 = scmp.eq.s32.totalorder %s22, 0
      %p96 = por %p94, %p95
      %s98 = sadd.s32 %s97, 1
      %p101 = scmp.eq.s32.totalorder %s16, 1
      %p102 = scmp.ne.s32.totalorder %s97, %s99
      %p103 = scmp.eq.s32.totalorder %s16, 0
      %p104 = por %p102, %p103
      %p105 = scmp.ne.s32.totalorder %s97, %s99
      %p106 = scmp.eq.s32.totalorder %s21, 1
      %p107 = por %p105, %p106
      %p108 = scmp.ne.s32.totalorder %s99, %s100
      %p109 = scmp.eq.s32.totalorder %s21, 0
      %p110 = por %p108, %p109
      %p111 = scmp.ne.s32.totalorder %s99, %s100
      %p112 = scmp.eq.s32.totalorder %s22, 1
      %p113 = por %p111, %p112
      %p115 = scmp.ne.s32.totalorder %s100, %s114
      %p116 = scmp.eq.s32.totalorder %s22, 0
      %p117 = por %p115, %p116
      %s119 = sadd.s32 %s118, 1
      %p122 = scmp.eq.s32.totalorder %s16, 1
      %p123 = scmp.ne.s32.totalorder %s118, %s120
      %p124 = scmp.eq.s32.totalorder %s16, 0
      %p125 = por %p123, %p124
      %p126 = scmp.ne.s32.totalorder %s118, %s120
      %p127 = scmp.eq.s32.totalorder %s21, 1
      %p128 = por %p126, %p127
      %p129 = scmp.ne.s32.totalorder %s120, %s121
      %p130 = scmp.eq.s32.totalorder %s21, 0
      %p131 = por %p129, %p130
      %p132 = scmp.ne.s32.totalorder %s120, %s121
      %p133 = scmp.eq.s32.totalorder %s22, 1
      %p134 = por %p132, %p133
      %p136 = scmp.ne.s32.totalorder %s121, %s135
      %p137 = scmp.eq.s32.totalorder %s22, 0
      %p138 = por %p136, %p137
      %s140 = sadd.s32 %s139, 1
      %p143 = scmp.eq.s32.totalorder %s16, 1
      %p144 = scmp.ne.s32.totalorder %s139, %s141
      %p145 = scmp.eq.s32.totalorder %s16, 0
      %p146 = por %p144, %p145
      %p147 = scmp.ne.s32.totalorder %s139, %s141
      %p148 = scmp.eq.s32.totalorder %s21, 1
      %p149 = por %p147, %p148
      %p150 = scmp.ne.s32.totalorder %s141, %s142
      %p151 = scmp.eq.s32.totalorder %s21, 0
      %p152 = por %p150, %p151
      %p153 = scmp.ne.s32.totalorder %s141, %s142
      %p154 = scmp.eq.s32.totalorder %s22, 1
      %p155 = por %p153, %p154
      %p157 = scmp.ne.s32.totalorder %s142, %s156
      %p158 = scmp.eq.s32.totalorder %s22, 0
      %p159 = por %p157, %p158
      %s161 = sadd.s32 %s160, 1
      %p164 = scmp.eq.s32.totalorder %s16, 1
      %p165 = scmp.ne.s32.totalorder %s160, %s162
      %p166 = scmp.eq.s32.totalorder %s16, 0
      %p167 = por %p165, %p166
      %p168 = scmp.ne.s32.totalorder %s160, %s162
      %p169 = scmp.eq.s32.totalorder %s21, 1
      %p170 = por %p168, %p169
      %p171 = scmp.ne.s32.totalorder %s162, %s163
      %p172 = scmp.eq.s32.totalorder %s21, 0
      %p173 = por %p171, %p172
      %p174 = scmp.ne.s32.totalorder %s162, %s163
      %p175 = scmp.eq.s32.totalorder %s22, 1
      %p176 = por %p174, %p175
      %p178 = scmp.ne.s32.totalorder %s163, %s177
      %p179 = scmp.eq.s32.totalorder %s22, 0
      %p180 = por %p178, %p179
      %s181 = ssub.s32 %s16, %s23
      %p182 = scmp.eq.s32.totalorder %s181, 0
      %s184 = sadd.s32 %s183, 1
      %s185 = scalar_select %p182, %s183, %s184
      %p188 = pneg %p182
      %p189 = scmp.eq.s32.totalorder %s16, 1
      %p190 = por %p188, %p189
      %p191 = scmp.ne.s32.totalorder %s183, %s186
      %p192 = scmp.eq.s32.totalorder %s16, 0
      %p193 = por %p191, %p192
      %p194 = scmp.ne.s32.totalorder %s183, %s186
      %p195 = scmp.eq.s32.totalorder %s21, 1
      %p196 = por %p194, %p195
      %p197 = scmp.ne.s32.totalorder %s186, %s187
      %p198 = scmp.eq.s32.totalorder %s21, 0
      %p199 = por %p197, %p198
      %p200 = scmp.ne.s32.totalorder %s186, %s187
      %p201 = scmp.eq.s32.totalorder %s22, 1
      %p202 = por %p200, %p201
      %p204 = scmp.ne.s32.totalorder %s187, %s203
      %p205 = scmp.eq.s32.totalorder %s22, 0
      %p206 = por %p204, %p205
      %p207 = scmp.le.s32.totalorder 1, %s16
      %p208 = scmp.lt.s32.totalorder %s16, 3
      %p209 = pnand %p207, %p208
      %p210 = pneg %p209
      // Predicated region
      $region9: #{tpu_custom_call.1} parent=5 // pred_check
        _
      $region10: #{tpu_custom_call.1} parent=5 // pred_check_branch
        %212 = sbr.rel (%p209) target = $region12
      $region11: #{tpu_custom_call.1} parent=5 // pred_region
        %s213 = ssub.s32 %s16, 1
        // Predicated region
        $region13: #{tpu_custom_call.1} parent=11 // pred_check
          %p214 = pneg %p89
        $region14: #{tpu_custom_call.1} parent=11 // pred_check_branch
          %216 = sbr.rel (%p214) target = $region16
        $region15: #{tpu_custom_call.1} parent=11 // pred_region
          _
        $region16: #{tpu_custom_call.1} parent=11 // pred_fallthru
          _
        // Predicated region
        $region17: #{tpu_custom_call.1} parent=11 // pred_check
          %p217 = pneg %p110
        $region18: #{tpu_custom_call.1} parent=11 // pred_check_branch
          %219 = sbr.rel (%p217) target = $region20
        $region19: #{tpu_custom_call.1} parent=11 // pred_region
          _
        $region20: #{tpu_custom_call.1} parent=11 // pred_fallthru
          _
        // Predicated region
        $region21: #{tpu_custom_call.1} parent=11 // pred_check
          %p220 = pneg %p131
        $region22: #{tpu_custom_call.1} parent=11 // pred_check_branch
          %222 = sbr.rel (%p220) target = $region24
        $region23: #{tpu_custom_call.1} parent=11 // pred_region
          _
        $region24: #{tpu_custom_call.1} parent=11 // pred_fallthru
          _
        // Predicated region
        $region25: #{tpu_custom_call.1} parent=11 // pred_check
          %p223 = pneg %p152
        $region26: #{tpu_custom_call.1} parent=11 // pred_check_branch
          %225 = sbr.rel (%p223) target = $region28
        $region27: #{tpu_custom_call.1} parent=11 // pred_region
          _
        $region28: #{tpu_custom_call.1} parent=11 // pred_fallthru
          _
        // Predicated region
        $region29: #{tpu_custom_call.1} parent=11 // pred_check
          %p226 = pneg %p173
        $region30: #{tpu_custom_call.1} parent=11 // pred_check_branch
          %228 = sbr.rel (%p226) target = $region32
        $region31: #{tpu_custom_call.1} parent=11 // pred_region
          _
        $region32: #{tpu_custom_call.1} parent=11 // pred_fallthru
          _
      $region12: #{tpu_custom_call.1} parent=5 // pred_fallthru
        _
      %p229 = scmp.lt.s32.totalorder %s16, 2
      // Predicated region
      $region33: #{tpu_custom_call.1} parent=5 // pred_check
        %p230 = pneg %p229
      $region34: #{tpu_custom_call.1} parent=5 // pred_check_branch
        %232 = sbr.rel (%p230) target = $region36
      $region35: #{tpu_custom_call.1} parent=5 // pred_region
        // Predicated region
        $region37: #{tpu_custom_call.1} parent=35 // pred_check
          %p233 = pneg %p36
        $region38: #{tpu_custom_call.1} parent=35 // pred_check_branch
          %235 = sbr.rel (%p233) target = $region40
        $region39: #{tpu_custom_call.1} parent=35 // pred_region
          %s236 = smul.u32 4, %s16
          %p237 = scmp.lt.s32.totalorder %s236, 7
          %s238 = scalar_select %p237, %s236, 7
          %s239 = smul.addr %s238, 2
          %s240 = scalar_lea.vmem %s0, %s239
          %s241 = smul.u32 4, %s16
        $region40: #{tpu_custom_call.1} parent=35 // pred_fallthru
          _
        // Predicated region
        $region41: #{tpu_custom_call.1} parent=35 // pred_check
          %p242 = pneg %p62
        $region42: #{tpu_custom_call.1} parent=35 // pred_check_branch
          %244 = sbr.rel (%p242) target = $region44
        $region43: #{tpu_custom_call.1} parent=35 // pred_region
          %s245 = smul.u32 4, %s16
          %p246 = scmp.lt.s32.totalorder %s245, 7
          %s247 = scalar_select %p246, %s245, 7
          %s248 = smul.addr %s247, 8
          %s249 = scalar_lea.vmem %s1, %s248
          %s250 = smul.u32 4, %s16
        $region44: #{tpu_custom_call.1} parent=35 // pred_fallthru
          _
      $region36: #{tpu_custom_call.1} parent=5 // pred_fallthru
        _
      %p251 = scmp.le.s32.totalorder 1, %s16
      %p252 = scmp.lt.s32.totalorder %s16, 3
      %p253 = pnand %p251, %p252
      %p254 = pneg %p253
      // Predicated region
      $region45: #{tpu_custom_call.1} parent=5 // pred_check
        _
      $region46: #{tpu_custom_call.1} parent=5 // pred_check_branch
        %256 = sbr.rel (%p253) target = $region48
      $region47: #{tpu_custom_call.1} parent=5 // pred_region
        %s257 = ssub.s32 %s16, 1
        %s258 = smul.u32 4, %s21
        %p259 = scmp.lt.s32.totalorder %s258, 7
        %s260 = scalar_select %p259, %s258, 7
        %s261 = smul.addr %s260, 2
        %s262 = scalar_lea.vmem %s0, %s261
        %p263 = pneg %p42
        %p264 = pneg %p39
        %s265 = smul.u32 4, %s21
        %p266 = scmp.lt.s32.totalorder %s265, 7
        %s267 = scalar_select %p266, %s265, 7
        %s268 = smul.addr %s267, 8
        %s269 = scalar_lea.vmem %s1, %s268
        %p270 = pneg %p68
        %p271 = pneg %p65
        %p272 = pneg %p89
        %p273 = pneg %p86
        %p274 = pneg %p110
        %p275 = pneg %p107
        %p276 = pneg %p131
        %p277 = pneg %p128
        %p278 = pneg %p152
        %p279 = pneg %p149
        %p280 = pneg %p173
        %p281 = pneg %p170
        %p282 = pneg %p199
        %p283 = pneg %p196
        %s284 = sand.u32 %s186, 1
        %s285 = scalar_lea.sflag [#allocation3], %s284
        %s286 = sand.u32 %s186, 1
        %s287 = smul.addr %s286, 8
        %s288 = scalar_lea.vmem [#allocation2], %s287
        %s289 = smul.u32 4, %s21
        %p290 = scmp.lt.s32.totalorder %s289, 7
        %s291 = scalar_select %p290, %s289, 7
        %s292 = smul.addr %s291, 2
        %s293 = scalar_lea.vmem %s0, %s292
        %s294 = smul.u32 4, %s21
        %s295 = smul.u32 4, %s21
        %p296 = scmp.lt.s32.totalorder %s295, 7
        %s297 = scalar_select %p296, %s295, 7
        %s298 = smul.addr %s297, 8
        %s299 = scalar_lea.vmem %s1, %s298
        %s300 = smul.u32 4, %s21
        %s301 = smul.u32 4, %s21
        %v302 = vld [vmem:[%s293] ss:$2 sm:$0xf]
        %s303 = scalar_lea.vmem %s293, 1
        %v304 = vld [vmem:[%s303] ss:$2 sm:$0xf]
        %v305 = vtanh.pop %v302
        %v306 = vld [vmem:[%s2] sm:$0xff]
        %v307 = vld [vmem:[%s2 + $0x8] sm:$0xff]
        %v308 = vld [vmem:[%s2 + $0x10] sm:$0xff]
        %v309 = vld [vmem:[%s2 + $0x18] sm:$0xff]
        %311 = vset.pattern.permute.xlu0 0
        %312 = vperm.xlu0 %311, %v306
        %v313 = vpop.permute.xlu0 %312
        %316 = vset.pattern.permute.xlu0 0
        %317 = vperm.xlu0 %316, %v307
        %v318 = vpop.permute.xlu0 %317
        %321 = vset.pattern.permute.xlu0 0
        %322 = vperm.xlu0 %321, %v308
        %v323 = vpop.permute.xlu0 %322
        %326 = vset.pattern.permute.xlu0 0
        %327 = vperm.xlu0 %326, %v309
        %v328 = vpop.permute.xlu0 %327
        %v331 = vlaneseq
        %v332 = vshrl.u32 %v331, 7
        %v333 = vsub.s32 0, %v332
        %v334 = vrot.slane %v305, %v333
        %v335 = vlaneseq
        %v336 = vshrl.u32 %v335, 7
        %v337 = vsub.s32 1, %v336
        %v338 = vrot.slane %v305, %v337
        %v339 = vlaneseq
        %v340 = vshrl.u32 %v339, 7
        %v341 = vsub.s32 2, %v340
        %v342 = vrot.slane %v305, %v341
        %v343 = vlaneseq
        %v344 = vshrl.u32 %v343, 7
        %v345 = vsub.s32 3, %v344
        %v346 = vrot.slane %v305, %v345
        %v351 = vmul.f32 %v313, %v334
        %v352 = vmul.f32 %v313, %v338
        %v353 = vmul.f32 %v313, %v342
        %v354 = vmul.f32 %v313, %v346
        %v355 = vmul.f32 %v318, %v334
        %v356 = vmul.f32 %v318, %v338
        %v357 = vmul.f32 %v318, %v342
        %v358 = vmul.f32 %v318, %v346
        %v359 = vmul.f32 %v323, %v334
        %v360 = vmul.f32 %v323, %v338
        %v361 = vmul.f32 %v323, %v342
        %v362 = vmul.f32 %v323, %v346
        %v363 = vmul.f32 %v328, %v334
        %v364 = vmul.f32 %v328, %v338
        %v365 = vmul.f32 %v328, %v342
        %v366 = vmul.f32 %v328, %v346
        %v367 = vld [vmem:[%s3] sm:$0xff]
        %v368 = vld [vmem:[%s3 + $0x8] sm:$0xff]
        %v369 = vld [vmem:[%s3 + $0x10] sm:$0xff]
        %v370 = vld [vmem:[%s3 + $0x18] sm:$0xff]
        %v371 = vld [vmem:[%s299] sm:$0xff]
        %v372 = vld [vmem:[%s299 + $0x8] sm:$0xff]
        %v373 = vld [vmem:[%s299 + $0x10] sm:$0xff]
        %v374 = vld [vmem:[%s299 + $0x18] sm:$0xff]
        %vm375 = vcmask 64512
        %v377 = vsel %vm375, %v367, 0
        %v380 = vsel %vm375, %v368, 0
        %v383 = vsel %vm375, %v369, 0
        %v386 = vsel %vm375, %v370, 0
        %v388 = vand.u32 %v372, 4294901760
        %389 = vmatprep.subr.mxu0 %v388
        %v390 = vand.u32 %v371, 4294901760
        %391 = vmatpush1.msra.mxu0 %v390
        %392 = vmatprep.subr.mxu0 0.0
        %393 = vmatpush1.msra.mxu0 0.0
        %394 = vmatprep.subr.mxu0 0.0
        %395 = vmatpush1.msra.mxu0 0.0
        %396 = vmatprep.subr.mxu0 0.0
        %397 = vmatpush1.msra.mxu0 0.0
        %398 = vmatprep.subr.mxu0 0.0
        %399 = vmatpush1.msra.mxu0 0.0
        %400 = vmatprep.subr.mxu0 0.0
        %401 = vmatpush1.msra.mxu0 0.0
        %402 = vmatprep.subr.mxu0 0.0
        %403 = vmatpush1.msra.mxu0 0.0
        %404 = vmatprep.subr.mxu0 0.0
        %405 = vmatpush1.msra.mxu0 0.0
        %406 = vmatprep.subr.mxu0 0.0
        %407 = vmatpush1.msra.mxu0 0.0
        %408 = vmatprep.subr.mxu0 0.0
        %409 = vmatpush1.msra.mxu0 0.0
        %410 = vmatprep.subr.mxu0 0.0
        %411 = vmatpush1.msra.mxu0 0.0
        %412 = vmatprep.subr.mxu0 0.0
        %413 = vmatpush1.msra.mxu0 0.0
        %414 = vmatprep.subr.mxu0 0.0
        %415 = vmatpush1.msra.mxu0 0.0
        %416 = vmatprep.subr.mxu0 0.0
        %417 = vmatpush1.msra.mxu0 0.0
        %418 = vmatprep.subr.mxu0 0.0
        %419 = vmatpush1.msra.mxu0 0.0
        %420 = vmatprep.subr.mxu0 0.0
        %421 = vmatpush1.msra.mxu0 0.0
        %422 = vmatprep.subr.mxu0 0.0
        %423 = vmatpush1.msra.mxu0 0.0
        %424 = vmatprep.subr.mxu0 0.0
        %425 = vmatpush1.msra.mxu0 0.0
        %426 = vmatprep.subr.mxu0 0.0
        %427 = vmatpush1.msra.mxu0 0.0
        %428 = vmatprep.subr.mxu0 0.0
        %429 = vmatpush1.msra.mxu0 0.0
        %430 = vmatprep.subr.mxu0 0.0
        %431 = vmatpush1.msra.mxu0 0.0
        %432 = vmatprep.subr.mxu0 0.0
        %433 = vmatpush1.msra.mxu0 0.0
        %434 = vmatprep.subr.mxu0 0.0
        %435 = vmatpush1.msra.mxu0 0.0
        %436 = vmatprep.subr.mxu0 0.0
        %437 = vmatpush1.msra.mxu0 0.0
        %438 = vmatprep.subr.mxu0 0.0
        %439 = vmatpush1.msra.mxu0 0.0
        %440 = vmatprep.subr.mxu0 0.0
        %441 = vmatpush1.msra.mxu0 0.0
        %442 = vmatprep.subr.mxu0 0.0
        %443 = vmatpush1.msra.mxu0 0.0
        %444 = vmatprep.subr.mxu0 0.0
        %445 = vmatpush1.msra.mxu0 0.0
        %446 = vmatprep.subr.mxu0 0.0
        %447 = vmatpush1.msra.mxu0 0.0
        %448 = vmatprep.subr.mxu0 0.0
        %449 = vmatpush1.msra.mxu0 0.0
        %450 = vmatprep.subr.mxu0 0.0
        %451 = vmatpush1.msra.mxu0 0.0
        %452 = vmatprep.subr.mxu0 0.0
        %453 = vmatpush1.msra.mxu0 0.0
        %454 = vmatprep.mubr.f32.mxu0 0.0
        %v455 = vand.u32 %v377, 4294901760
        %v456 = vsub.f32 %v377, %v455
        %v457 = vand.u32 %v456, 4294901760
        %v458 = vsub.f32 %v456, %v457
        %v459 = vand.u32 %v458, 4294901760
        %460 = vmatmul.mubr.f32.gmra.mrb[0].mxu0 %v459
        %v461 = vpop.f32.mrb[0].mxu0
        %v462 = vadd.f32 0.0, %v461
        %v463 = vpop.f32.mrb[0].mxu0
        %v464 = vadd.f32 0.0, %v463
        %465 = vmatprep.mubr.f32.mxu0 0.0
        %v466 = vand.u32 %v380, 4294901760
        %v467 = vsub.f32 %v380, %v466
        %v468 = vand.u32 %v467, 4294901760
        %v469 = vsub.f32 %v467, %v468
        %v470 = vand.u32 %v469, 4294901760
        %471 = vmatmul.mubr.f32.gmra.mrb[0].mxu0 %v470
        %v472 = vpop.f32.mrb[0].mxu0
        %v473 = vadd.f32 0.0, %v472
        %v474 = vpop.f32.mrb[0].mxu0
        %v475 = vadd.f32 0.0, %v474
        %476 = vmatprep.mubr.f32.mxu0 0.0
        %v477 = vand.u32 %v383, 4294901760
        %v478 = vsub.f32 %v383, %v477
        %v479 = vand.u32 %v478, 4294901760
        %v480 = vsub.f32 %v478, %v479
        %v481 = vand.u32 %v480, 4294901760
        %482 = vmatmul.mubr.f32.gmra.mrb[0].mxu0 %v481
        %v483 = vpop.f32.mrb[0].mxu0
        %v484 = vadd.f32 0.0, %v483
        %v485 = vpop.f32.mrb[0].mxu0
        %v486 = vadd.f32 0.0, %v485
        %487 = vmatprep.mubr.f32.mxu0 0.0
        %v488 = vand.u32 %v386, 4294901760
        %v489 = vsub.f32 %v386, %v488
        %v490 = vand.u32 %v489, 4294901760
        %v491 = vsub.f32 %v489, %v490
        %v492 = vand.u32 %v491, 4294901760
        %493 = vmatmul.mubr.f32.gmra.mrb[0].mxu0 %v492
        %v494 = vpop.f32.mrb[0].mxu0
        %v495 = vadd.f32 0.0, %v494
        %v496 = vpop.f32.mrb[0].mxu0
        %v497 = vadd.f32 0.0, %v496
        %498 = vdwg.mxu0
        %v499 = vand.u32 %v372, 4294901760
        %v500 = vsub.f32 %v372, %v499
        %v501 = vand.u32 %v500, 4294901760
        %v502 = vsub.f32 %v500, %v501
        %v503 = vand.u32 %v502, 4294901760
        %504 = vmatprep.subr.mxu0 %v503
        %v505 = vand.u32 %v371, 4294901760
        %v506 = vsub.f32 %v371, %v505
        %v507 = vand.u32 %v506, 4294901760
        %v508 = vsub.f32 %v506, %v507
        %v509 = vand.u32 %v508, 4294901760
        %510 = vmatpush1.msra.mxu0 %v509
        %511 = vmatprep.subr.mxu0 0.0
        %512 = vmatpush1.msra.mxu0 0.0
        %513 = vmatprep.subr.mxu0 0.0
        %514 = vmatpush1.msra.mxu0 0.0
        %515 = vmatprep.subr.mxu0 0.0
        %516 = vmatpush1.msra.mxu0 0.0
        %517 = vmatprep.subr.mxu0 0.0
        %518 = vmatpush1.msra.mxu0 0.0
        %519 = vmatprep.subr.mxu0 0.0
        %520 = vmatpush1.msra.mxu0 0.0
        %521 = vmatprep.subr.mxu0 0.0
        %522 = vmatpush1.msra.mxu0 0.0
        %523 = vmatprep.subr.mxu0 0.0
        %524 = vmatpush1.msra.mxu0 0.0
        %525 = vmatprep.subr.mxu0 0.0
        %526 = vmatpush1.msra.mxu0 0.0
        %527 = vmatprep.subr.mxu0 0.0
        %528 = vmatpush1.msra.mxu0 0.0
        %529 = vmatprep.subr.mxu0 0.0
        %530 = vmatpush1.msra.mxu0 0.0
        %531 = vmatprep.subr.mxu0 0.0
        %532 = vmatpush1.msra.mxu0 0.0
        %533 = vmatprep.subr.mxu0 0.0
        %534 = vmatpush1.msra.mxu0 0.0
        %535 = vmatprep.subr.mxu0 0.0
        %536 = vmatpush1.msra.mxu0 0.0
        %537 = vmatprep.subr.mxu0 0.0
        %538 = vmatpush1.msra.mxu0 0.0
        %539 = vmatprep.subr.mxu0 0.0
        %540 = vmatpush1.msra.mxu0 0.0
        %541 = vmatprep.subr.mxu0 0.0
        %542 = vmatpush1.msra.mxu0 0.0
        %543 = vmatprep.subr.mxu0 0.0
        %544 = vmatpush1.msra.mxu0 0.0
        %545 = vmatprep.subr.mxu0 0.0
        %546 = vmatpush1.msra.mxu0 0.0
        %547 = vmatprep.subr.mxu0 0.0
        %548 = vmatpush1.msra.mxu0 0.0
        %549 = vmatprep.subr.mxu0 0.0
        %550 = vmatpush1.msra.mxu0 0.0
        %551 = vmatprep.subr.mxu0 0.0
        %552 = vmatpush1.msra.mxu0 0.0
        %553 = vmatprep.subr.mxu0 0.0
        %554 = vmatpush1.msra.mxu0 0.0
        %555 = vmatprep.subr.mxu0 0.0
        %556 = vmatpush1.msra.mxu0 0.0
        %557 = vmatprep.subr.mxu0 0.0
        %558 = vmatpush1.msra.mxu0 0.0
        %559 = vmatprep.subr.mxu0 0.0
        %560 = vmatpush1.msra.mxu0 0.0
        %561 = vmatprep.subr.mxu0 0.0
        %562 = vmatpush1.msra.mxu0 0.0
        %563 = vmatprep.subr.mxu0 0.0
        %564 = vmatpush1.msra.mxu0 0.0
        %565 = vmatprep.subr.mxu0 0.0
        %566 = vmatpush1.msra.mxu0 0.0
        %567 = vmatprep.subr.mxu0 0.0
        %568 = vmatpush1.msra.mxu0 0.0
        %569 = vmatprep.subr.mxu0 0.0
        %570 = vmatpush1.msra.mxu0 0.0
        %571 = vmatprep.subr.mxu0 0.0
        %572 = vmatpush1.msra.mxu0 0.0
        %573 = vmatprep.mubr.f32.mxu0 0.0
        %v574 = vand.u32 %v377, 4294901760
        %575 = vmatmul.mubr.f32.gmra.mrb[0].mxu0 %v574
        %v576 = vpop.f32.mrb[0].mxu0
        %v577 = vadd.f32 %v462, %v576
        %v578 = vpop.f32.mrb[0].mxu0
        %v579 = vadd.f32 %v464, %v578
        %580 = vmatprep.mubr.f32.mxu0 0.0
        %v581 = vand.u32 %v380, 4294901760
        %582 = vmatmul.mubr.f32.gmra.mrb[0].mxu0 %v581
        %v583 = vpop.f32.mrb[0].mxu0
        %v584 = vadd.f32 %v473, %v583
        %v585 = vpop.f32.mrb[0].mxu0
        %v586 = vadd.f32 %v475, %v585
        %587 = vmatprep.mubr.f32.mxu0 0.0
        %v588 = vand.u32 %v383, 4294901760
        %589 = vmatmul.mubr.f32.gmra.mrb[0].mxu0 %v588
        %v590 = vpop.f32.mrb[0].mxu0
        %v591 = vadd.f32 %v484, %v590
        %v592 = vpop.f32.mrb[0].mxu0
        %v593 = vadd.f32 %v486, %v592
        %594 = vmatprep.mubr.f32.mxu0 0.0
        %v595 = vand.u32 %v386, 4294901760
        %596 = vmatmul.mubr.f32.gmra.mrb[0].mxu0 %v595
        %v597 = vpop.f32.mrb[0].mxu0
        %v598 = vadd.f32 %v495, %v597
        %v599 = vpop.f32.mrb[0].mxu0
        %v600 = vadd.f32 %v497, %v599
        %601 = vdwg.mxu0
        %v602 = vand.u32 %v372, 4294901760
        %v603 = vsub.f32 %v372, %v602
        %604 = vmatprep.subr.mxu0 %v603
        %v605 = vand.u32 %v371, 4294901760
        %v606 = vsub.f32 %v371, %v605
        %607 = vmatpush1.msra.mxu0 %v606
        %608 = vmatprep.subr.mxu0 0.0
        %609 = vmatpush1.msra.mxu0 0.0
        %610 = vmatprep.subr.mxu0 0.0
        %611 = vmatpush1.msra.mxu0 0.0
        %612 = vmatprep.subr.mxu0 0.0
        %613 = vmatpush1.msra.mxu0 0.0
        %614 = vmatprep.subr.mxu0 0.0
        %615 = vmatpush1.msra.mxu0 0.0
        %616 = vmatprep.subr.mxu0 0.0
        %617 = vmatpush1.msra.mxu0 0.0
        %618 = vmatprep.subr.mxu0 0.0
        %619 = vmatpush1.msra.mxu0 0.0
        %620 = vmatprep.subr.mxu0 0.0
        %621 = vmatpush1.msra.mxu0 0.0
        %622 = vmatprep.subr.mxu0 0.0
        %623 = vmatpush1.msra.mxu0 0.0
        %624 = vmatprep.subr.mxu0 0.0
        %625 = vmatpush1.msra.mxu0 0.0
        %626 = vmatprep.subr.mxu0 0.0
        %627 = vmatpush1.msra.mxu0 0.0
        %628 = vmatprep.subr.mxu0 0.0
        %629 = vmatpush1.msra.mxu0 0.0
        %630 = vmatprep.subr.mxu0 0.0
        %631 = vmatpush1.msra.mxu0 0.0
        %632 = vmatprep.subr.mxu0 0.0
        %633 = vmatpush1.msra.mxu0 0.0
        %634 = vmatprep.subr.mxu0 0.0
        %635 = vmatpush1.msra.mxu0 0.0
        %636 = vmatprep.subr.mxu0 0.0
        %637 = vmatpush1.msra.mxu0 0.0
        %638 = vmatprep.subr.mxu0 0.0
        %639 = vmatpush1.msra.mxu0 0.0
        %640 = vmatprep.subr.mxu0 0.0
        %641 = vmatpush1.msra.mxu0 0.0
        %642 = vmatprep.subr.mxu0 0.0
        %643 = vmatpush1.msra.mxu0 0.0
        %644 = vmatprep.subr.mxu0 0.0
        %645 = vmatpush1.msra.mxu0 0.0
        %646 = vmatprep.subr.mxu0 0.0
        %647 = vmatpush1.msra.mxu0 0.0
        %648 = vmatprep.subr.mxu0 0.0
        %649 = vmatpush1.msra.mxu0 0.0
        %650 = vmatprep.subr.mxu0 0.0
        %651 = vmatpush1.msra.mxu0 0.0
        %652 = vmatprep.subr.mxu0 0.0
        %653 = vmatpush1.msra.mxu0 0.0
        %654 = vmatprep.subr.mxu0 0.0
        %655 = vmatpush1.msra.mxu0 0.0
        %656 = vmatprep.subr.mxu0 0.0
        %657 = vmatpush1.msra.mxu0 0.0
        %658 = vmatprep.subr.mxu0 0.0
        %659 = vmatpush1.msra.mxu0 0.0
        %660 = vmatprep.subr.mxu0 0.0
        %661 = vmatpush1.msra.mxu0 0.0
        %662 = vmatprep.subr.mxu0 0.0
        %663 = vmatpush1.msra.mxu0 0.0
        %664 = vmatprep.subr.mxu0 0.0
        %665 = vmatpush1.msra.mxu0 0.0
        %666 = vmatprep.subr.mxu0 0.0
        %667 = vmatpush1.msra.mxu0 0.0
        %668 = vmatprep.subr.mxu0 0.0
        %669 = vmatpush1.msra.mxu0 0.0
        %670 = vmatprep.mubr.f32.mxu0 0.0
        %v671 = vand.u32 %v377, 4294901760
        %v672 = vsub.f32 %v377, %v671
        %673 = vmatmul.mubr.f32.gmra.mrb[0].mxu0 %v672
        %v674 = vpop.f32.mrb[0].mxu0
        %v675 = vadd.f32 %v577, %v674
        %v676 = vpop.f32.mrb[0].mxu0
        %v677 = vadd.f32 %v579, %v676
        %678 = vmatprep.mubr.f32.mxu0 0.0
        %v679 = vand.u32 %v380, 4294901760
        %v680 = vsub.f32 %v380, %v679
        %681 = vmatmul.mubr.f32.gmra.mrb[0].mxu0 %v680
        %v682 = vpop.f32.mrb[0].mxu0
        %v683 = vadd.f32 %v584, %v682
        %v684 = vpop.f32.mrb[0].mxu0
        %v685 = vadd.f32 %v586, %v684
        %686 = vmatprep.mubr.f32.mxu0 0.0
        %v687 = vand.u32 %v383, 4294901760
        %v688 = vsub.f32 %v383, %v687
        %689 = vmatmul.mubr.f32.gmra.mrb[0].mxu0 %v688
        %v690 = vpop.f32.mrb[0].mxu0
        %v691 = vadd.f32 %v591, %v690
        %v692 = vpop.f32.mrb[0].mxu0
        %v693 = vadd.f32 %v593, %v692
        %694 = vmatprep.mubr.f32.mxu0 0.0
        %v695 = vand.u32 %v386, 4294901760
        %v696 = vsub.f32 %v386, %v695
        %697 = vmatmul.mubr.f32.gmra.mrb[0].mxu0 %v696
        %v698 = vpop.f32.mrb[0].mxu0
        %v699 = vadd.f32 %v598, %v698
        %v700 = vpop.f32.mrb[0].mxu0
        %v701 = vadd.f32 %v600, %v700
        %702 = vdwg.mxu0
        %v703 = vand.u32 %v372, 4294901760
        %704 = vmatprep.subr.mxu0 %v703
        %v705 = vand.u32 %v371, 4294901760
        %706 = vmatpush1.msra.mxu0 %v705
        %707 = vmatprep.subr.mxu0 0.0
        %708 = vmatpush1.msra.mxu0 0.0
        %709 = vmatprep.subr.mxu0 0.0
        %710 = vmatpush1.msra.mxu0 0.0
        %711 = vmatprep.subr.mxu0 0.0
        %712 = vmatpush1.msra.mxu0 0.0
        %713 = vmatprep.subr.mxu0 0.0
        %714 = vmatpush1.msra.mxu0 0.0
        %715 = vmatprep.subr.mxu0 0.0
        %716 = vmatpush1.msra.mxu0 0.0
        %717 = vmatprep.subr.mxu0 0.0
        %718 = vmatpush1.msra.mxu0 0.0
        %719 = vmatprep.subr.mxu0 0.0
        %720 = vmatpush1.msra.mxu0 0.0
        %721 = vmatprep.subr.mxu0 0.0
        %722 = vmatpush1.msra.mxu0 0.0
        %723 = vmatprep.subr.mxu0 0.0
        %724 = vmatpush1.msra.mxu0 0.0
        %725 = vmatprep.subr.mxu0 0.0
        %726 = vmatpush1.msra.mxu0 0.0
        %727 = vmatprep.subr.mxu0 0.0
        %728 = vmatpush1.msra.mxu0 0.0
        %729 = vmatprep.subr.mxu0 0.0
        %730 = vmatpush1.msra.mxu0 0.0
        %731 = vmatprep.subr.mxu0 0.0
        %732 = vmatpush1.msra.mxu0 0.0
        %733 = vmatprep.subr.mxu0 0.0
        %734 = vmatpush1.msra.mxu0 0.0
        %735 = vmatprep.subr.mxu0 0.0
        %736 = vmatpush1.msra.mxu0 0.0
        %737 = vmatprep.subr.mxu0 0.0
        %738 = vmatpush1.msra.mxu0 0.0
        %739 = vmatprep.subr.mxu0 0.0
        %740 = vmatpush1.msra.mxu0 0.0
        %741 = vmatprep.subr.mxu0 0.0
        %742 = vmatpush1.msra.mxu0 0.0
        %743 = vmatprep.subr.mxu0 0.0
        %744 = vmatpush1.msra.mxu0 0.0
        %745 = vmatprep.subr.mxu0 0.0
        %746 = vmatpush1.msra.mxu0 0.0
        %747 = vmatprep.subr.mxu0 0.0
        %748 = vmatpush1.msra.mxu0 0.0
        %749 = vmatprep.subr.mxu0 0.0
        %750 = vmatpush1.msra.mxu0 0.0
        %751 = vmatprep.subr.mxu0 0.0
        %752 = vmatpush1.msra.mxu0 0.0
        %753 = vmatprep.subr.mxu0 0.0
        %754 = vmatpush1.msra.mxu0 0.0
        %755 = vmatprep.subr.mxu0 0.0
        %756 = vmatpush1.msra.mxu0 0.0
        %757 = vmatprep.subr.mxu0 0.0
        %758 = vmatpush1.msra.mxu0 0.0
        %759 = vmatprep.subr.mxu0 0.0
        %760 = vmatpush1.msra.mxu0 0.0
        %761 = vmatprep.subr.mxu0 0.0
        %762 = vmatpush1.msra.mxu0 0.0
        %763 = vmatprep.subr.mxu0 0.0
        %764 = vmatpush1.msra.mxu0 0.0
        %765 = vmatprep.subr.mxu0 0.0
        %766 = vmatpush1.msra.mxu0 0.0
        %767 = vmatprep.subr.mxu0 0.0
        %768 = vmatpush1.msra.mxu0 0.0
        %769 = vmatprep.mubr.f32.mxu0 0.0
        %v770 = vand.u32 %v377, 4294901760
        %v771 = vsub.f32 %v377, %v770
        %v772 = vand.u32 %v771, 4294901760
        %773 = vmatmul.mubr.f32.gmra.mrb[0].mxu0 %v772
        %v774 = vpop.f32.mrb[0].mxu0
        %v775 = vadd.f32 %v675, %v774
        %v776 = vpop.f32.mrb[0].mxu0
        %v777 = vadd.f32 %v677, %v776
        %778 = vmatprep.mubr.f32.mxu0 0.0
        %v779 = vand.u32 %v380, 4294901760
        %v780 = vsub.f32 %v380, %v779
        %v781 = vand.u32 %v780, 4294901760
        %782 = vmatmul.mubr.f32.gmra.mrb[0].mxu0 %v781
        %v783 = vpop.f32.mrb[0].mxu0
        %v784 = vadd.f32 %v683, %v783
        %v785 = vpop.f32.mrb[0].mxu0
        %v786 = vadd.f32 %v685, %v785
        %787 = vmatprep.mubr.f32.mxu0 0.0
        %v788 = vand.u32 %v383, 4294901760
        %v789 = vsub.f32 %v383, %v788
        %v790 = vand.u32 %v789, 4294901760
        %791 = vmatmul.mubr.f32.gmra.mrb[0].mxu0 %v790
        %v792 = vpop.f32.mrb[0].mxu0
        %v793 = vadd.f32 %v691, %v792
        %v794 = vpop.f32.mrb[0].mxu0
        %v795 = vadd.f32 %v693, %v794
        %796 = vmatprep.mubr.f32.mxu0 0.0
        %v797 = vand.u32 %v386, 4294901760
        %v798 = vsub.f32 %v386, %v797
        %v799 = vand.u32 %v798, 4294901760
        %800 = vmatmul.mubr.f32.gmra.mrb[0].mxu0 %v799
        %v801 = vpop.f32.mrb[0].mxu0
        %v802 = vadd.f32 %v699, %v801
        %v803 = vpop.f32.mrb[0].mxu0
        %v804 = vadd.f32 %v701, %v803
        %805 = vdwg.mxu0
        %v806 = vand.u32 %v372, 4294901760
        %v807 = vsub.f32 %v372, %v806
        %v808 = vand.u32 %v807, 4294901760
        %809 = vmatprep.subr.mxu0 %v808
        %v810 = vand.u32 %v371, 4294901760
        %v811 = vsub.f32 %v371, %v810
        %v812 = vand.u32 %v811, 4294901760
        %813 = vmatpush1.msra.mxu0 %v812
        %814 = vmatprep.subr.mxu0 0.0
        %815 = vmatpush1.msra.mxu0 0.0
        %816 = vmatprep.subr.mxu0 0.0
        %817 = vmatpush1.msra.mxu0 0.0
        %818 = vmatprep.subr.mxu0 0.0
        %819 = vmatpush1.msra.mxu0 0.0
        %820 = vmatprep.subr.mxu0 0.0
        %821 = vmatpush1.msra.mxu0 0.0
        %822 = vmatprep.subr.mxu0 0.0
        %823 = vmatpush1.msra.mxu0 0.0
        %824 = vmatprep.subr.mxu0 0.0
        %825 = vmatpush1.msra.mxu0 0.0
        %826 = vmatprep.subr.mxu0 0.0
        %827 = vmatpush1.msra.mxu0 0.0
        %828 = vmatprep.subr.mxu0 0.0
        %829 = vmatpush1.msra.mxu0 0.0
        %830 = vmatprep.subr.mxu0 0.0
        %831 = vmatpush1.msra.mxu0 0.0
        %832 = vmatprep.subr.mxu0 0.0
        %833 = vmatpush1.msra.mxu0 0.0
        %834 = vmatprep.subr.mxu0 0.0
        %835 = vmatpush1.msra.mxu0 0.0
        %836 = vmatprep.subr.mxu0 0.0
        %837 = vmatpush1.msra.mxu0 0.0
        %838 = vmatprep.subr.mxu0 0.0
        %839 = vmatpush1.msra.mxu0 0.0
        %840 = vmatprep.subr.mxu0 0.0
        %841 = vmatpush1.msra.mxu0 0.0
        %842 = vmatprep.subr.mxu0 0.0
        %843 = vmatpush1.msra.mxu0 0.0
        %844 = vmatprep.subr.mxu0 0.0
        %845 = vmatpush1.msra.mxu0 0.0
        %846 = vmatprep.subr.mxu0 0.0
        %847 = vmatpush1.msra.mxu0 0.0
        %848 = vmatprep.subr.mxu0 0.0
        %849 = vmatpush1.msra.mxu0 0.0
        %850 = vmatprep.subr.mxu0 0.0
        %851 = vmatpush1.msra.mxu0 0.0
        %852 = vmatprep.subr.mxu0 0.0
        %853 = vmatpush1.msra.mxu0 0.0
        %854 = vmatprep.subr.mxu0 0.0
        %855 = vmatpush1.msra.mxu0 0.0
        %856 = vmatprep.subr.mxu0 0.0
        %857 = vmatpush1.msra.mxu0 0.0
        %858 = vmatprep.subr.mxu0 0.0
        %859 = vmatpush1.msra.mxu0 0.0
        %860 = vmatprep.subr.mxu0 0.0
        %861 = vmatpush1.msra.mxu0 0.0
        %862 = vmatprep.subr.mxu0 0.0
        %863 = vmatpush1.msra.mxu0 0.0
        %864 = vmatprep.subr.mxu0 0.0
        %865 = vmatpush1.msra.mxu0 0.0
        %866 = vmatprep.subr.mxu0 0.0
        %867 = vmatpush1.msra.mxu0 0.0
        %868 = vmatprep.subr.mxu0 0.0
        %869 = vmatpush1.msra.mxu0 0.0
        %870 = vmatprep.subr.mxu0 0.0
        %871 = vmatpush1.msra.mxu0 0.0
        %872 = vmatprep.subr.mxu0 0.0
        %873 = vmatpush1.msra.mxu0 0.0
        %874 = vmatprep.subr.mxu0 0.0
        %875 = vmatpush1.msra.mxu0 0.0
        %876 = vmatprep.mubr.f32.mxu0 0.0
        %v877 = vand.u32 %v377, 4294901760
        %878 = vmatmul.mubr.f32.gmra.mrb[0].mxu0 %v877
        %v879 = vpop.f32.mrb[0].mxu0
        %v880 = vadd.f32 %v775, %v879
        %v881 = vpop.f32.mrb[0].mxu0
        %v882 = vadd.f32 %v777, %v881
        %883 = vmatprep.mubr.f32.mxu0 0.0
        %v884 = vand.u32 %v380, 4294901760
        %885 = vmatmul.mubr.f32.gmra.mrb[0].mxu0 %v884
        %v886 = vpop.f32.mrb[0].mxu0
        %v887 = vadd.f32 %v784, %v886
        %v888 = vpop.f32.mrb[0].mxu0
        %v889 = vadd.f32 %v786, %v888
        %890 = vmatprep.mubr.f32.mxu0 0.0
        %v891 = vand.u32 %v383, 4294901760
        %892 = vmatmul.mubr.f32.gmra.mrb[0].mxu0 %v891
        %v893 = vpop.f32.mrb[0].mxu0
        %v894 = vadd.f32 %v793, %v893
        %v895 = vpop.f32.mrb[0].mxu0
        %v896 = vadd.f32 %v795, %v895
        %897 = vmatprep.mubr.f32.mxu0 0.0
        %v898 = vand.u32 %v386, 4294901760
        %899 = vmatmul.mubr.f32.gmra.mrb[0].mxu0 %v898
        %v900 = vpop.f32.mrb[0].mxu0
        %v901 = vadd.f32 %v802, %v900
        %v902 = vpop.f32.mrb[0].mxu0
        %v903 = vadd.f32 %v804, %v902
        %904 = vdwg.mxu0
        %v905 = vand.u32 %v372, 4294901760
        %906 = vmatprep.subr.mxu0 %v905
        %v907 = vand.u32 %v371, 4294901760
        %908 = vmatpush1.msra.mxu0 %v907
        %909 = vmatprep.subr.mxu0 0.0
        %910 = vmatpush1.msra.mxu0 0.0
        %911 = vmatprep.subr.mxu0 0.0
        %912 = vmatpush1.msra.mxu0 0.0
        %913 = vmatprep.subr.mxu0 0.0
        %914 = vmatpush1.msra.mxu0 0.0
        %915 = vmatprep.subr.mxu0 0.0
        %916 = vmatpush1.msra.mxu0 0.0
        %917 = vmatprep.subr.mxu0 0.0
        %918 = vmatpush1.msra.mxu0 0.0
        %919 = vmatprep.subr.mxu0 0.0
        %920 = vmatpush1.msra.mxu0 0.0
        %921 = vmatprep.subr.mxu0 0.0
        %922 = vmatpush1.msra.mxu0 0.0
        %923 = vmatprep.subr.mxu0 0.0
        %924 = vmatpush1.msra.mxu0 0.0
        %925 = vmatprep.subr.mxu0 0.0
        %926 = vmatpush1.msra.mxu0 0.0
        %927 = vmatprep.subr.mxu0 0.0
        %928 = vmatpush1.msra.mxu0 0.0
        %929 = vmatprep.subr.mxu0 0.0
        %930 = vmatpush1.msra.mxu0 0.0
        %931 = vmatprep.subr.mxu0 0.0
        %932 = vmatpush1.msra.mxu0 0.0
        %933 = vmatprep.subr.mxu0 0.0
        %934 = vmatpush1.msra.mxu0 0.0
        %935 = vmatprep.subr.mxu0 0.0
        %936 = vmatpush1.msra.mxu0 0.0
        %937 = vmatprep.subr.mxu0 0.0
        %938 = vmatpush1.msra.mxu0 0.0
        %939 = vmatprep.subr.mxu0 0.0
        %940 = vmatpush1.msra.mxu0 0.0
        %941 = vmatprep.subr.mxu0 0.0
        %942 = vmatpush1.msra.mxu0 0.0
        %943 = vmatprep.subr.mxu0 0.0
        %944 = vmatpush1.msra.mxu0 0.0
        %945 = vmatprep.subr.mxu0 0.0
        %946 = vmatpush1.msra.mxu0 0.0
        %947 = vmatprep.subr.mxu0 0.0
        %948 = vmatpush1.msra.mxu0 0.0
        %949 = vmatprep.subr.mxu0 0.0
        %950 = vmatpush1.msra.mxu0 0.0
        %951 = vmatprep.subr.mxu0 0.0
        %952 = vmatpush1.msra.mxu0 0.0
        %953 = vmatprep.subr.mxu0 0.0
        %954 = vmatpush1.msra.mxu0 0.0
        %955 = vmatprep.subr.mxu0 0.0
        %956 = vmatpush1.msra.mxu0 0.0
        %957 = vmatprep.subr.mxu0 0.0
        %958 = vmatpush1.msra.mxu0 0.0
        %959 = vmatprep.subr.mxu0 0.0
        %960 = vmatpush1.msra.mxu0 0.0
        %961 = vmatprep.subr.mxu0 0.0
        %962 = vmatpush1.msra.mxu0 0.0
        %963 = vmatprep.subr.mxu0 0.0
        %964 = vmatpush1.msra.mxu0 0.0
        %965 = vmatprep.subr.mxu0 0.0
        %966 = vmatpush1.msra.mxu0 0.0
        %967 = vmatprep.subr.mxu0 0.0
        %968 = vmatpush1.msra.mxu0 0.0
        %969 = vmatprep.subr.mxu0 0.0
        %970 = vmatpush1.msra.mxu0 0.0
        %971 = vmatprep.mubr.f32.mxu0 0.0
        %v972 = vand.u32 %v377, 4294901760
        %973 = vmatmul.mubr.f32.gmra.mrb[0].mxu0 %v972
        %v974 = vpop.f32.mrb[0].mxu0
        %v975 = vadd.f32 %v880, %v974
        %v976 = vpop.f32.mrb[0].mxu0
        %v977 = vadd.f32 %v882, %v976
        %978 = vmatprep.mubr.f32.mxu0 0.0
        %v979 = vand.u32 %v380, 4294901760
        %980 = vmatmul.mubr.f32.gmra.mrb[0].mxu0 %v979
        %v981 = vpop.f32.mrb[0].mxu0
        %v982 = vadd.f32 %v887, %v981
        %v983 = vpop.f32.mrb[0].mxu0
        %v984 = vadd.f32 %v889, %v983
        %985 = vmatprep.mubr.f32.mxu0 0.0
        %v986 = vand.u32 %v383, 4294901760
        %987 = vmatmul.mubr.f32.gmra.mrb[0].mxu0 %v986
        %v988 = vpop.f32.mrb[0].mxu0
        %v989 = vadd.f32 %v894, %v988
        %v990 = vpop.f32.mrb[0].mxu0
        %v991 = vadd.f32 %v896, %v990
        %992 = vmatprep.mubr.f32.mxu0 0.0
        %v993 = vand.u32 %v386, 4294901760
        %994 = vmatmul.mubr.f32.gmra.mrb[0].mxu0 %v993
        %v995 = vpop.f32.mrb[0].mxu0
        %v996 = vadd.f32 %v901, %v995
        %v997 = vpop.f32.mrb[0].mxu0
        %v998 = vadd.f32 %v903, %v997
        %999 = vdwg.mxu0
        %v1000 = vand.u32 %v374, 4294901760
        %1001 = vmatprep.subr.mxu0 %v1000
        %v1002 = vand.u32 %v373, 4294901760
        %1003 = vmatpush1.msra.mxu0 %v1002
        %1004 = vmatprep.subr.mxu0 0.0
        %1005 = vmatpush1.msra.mxu0 0.0
        %1006 = vmatprep.subr.mxu0 0.0
        %1007 = vmatpush1.msra.mxu0 0.0
        %1008 = vmatprep.subr.mxu0 0.0
        %1009 = vmatpush1.msra.mxu0 0.0
        %1010 = vmatprep.subr.mxu0 0.0
        %1011 = vmatpush1.msra.mxu0 0.0
        %1012 = vmatprep.subr.mxu0 0.0
        %1013 = vmatpush1.msra.mxu0 0.0
        %1014 = vmatprep.subr.mxu0 0.0
        %1015 = vmatpush1.msra.mxu0 0.0
        %1016 = vmatprep.subr.mxu0 0.0
        %1017 = vmatpush1.msra.mxu0 0.0
        %1018 = vmatprep.subr.mxu0 0.0
        %1019 = vmatpush1.msra.mxu0 0.0
        %1020 = vmatprep.subr.mxu0 0.0
        %1021 = vmatpush1.msra.mxu0 0.0
        %1022 = vmatprep.subr.mxu0 0.0
        %1023 = vmatpush1.msra.mxu0 0.0
        %1024 = vmatprep.subr.mxu0 0.0
        %1025 = vmatpush1.msra.mxu0 0.0
        %1026 = vmatprep.subr.mxu0 0.0
        %1027 = vmatpush1.msra.mxu0 0.0
        %1028 = vmatprep.subr.mxu0 0.0
        %1029 = vmatpush1.msra.mxu0 0.0
        %1030 = vmatprep.subr.mxu0 0.0
        %1031 = vmatpush1.msra.mxu0 0.0
        %1032 = vmatprep.subr.mxu0 0.0
        %1033 = vmatpush1.msra.mxu0 0.0
        %1034 = vmatprep.subr.mxu0 0.0
        %1035 = vmatpush1.msra.mxu0 0.0
        %1036 = vmatprep.subr.mxu0 0.0
        %1037 = vmatpush1.msra.mxu0 0.0
        %1038 = vmatprep.subr.mxu0 0.0
        %1039 = vmatpush1.msra.mxu0 0.0
        %1040 = vmatprep.subr.mxu0 0.0
        %1041 = vmatpush1.msra.mxu0 0.0
        %1042 = vmatprep.subr.mxu0 0.0
        %1043 = vmatpush1.msra.mxu0 0.0
        %1044 = vmatprep.subr.mxu0 0.0
        %1045 = vmatpush1.msra.mxu0 0.0
        %1046 = vmatprep.subr.mxu0 0.0
        %1047 = vmatpush1.msra.mxu0 0.0
        %1048 = vmatprep.subr.mxu0 0.0
        %1049 = vmatpush1.msra.mxu0 0.0
        %1050 = vmatprep.subr.mxu0 0.0
        %1051 = vmatpush1.msra.mxu0 0.0
        %1052 = vmatprep.subr.mxu0 0.0
        %1053 = vmatpush1.msra.mxu0 0.0
        %1054 = vmatprep.subr.mxu0 0.0
        %1055 = vmatpush1.msra.mxu0 0.0
        %1056 = vmatprep.subr.mxu0 0.0
        %1057 = vmatpush1.msra.mxu0 0.0
        %1058 = vmatprep.subr.mxu0 0.0
        %1059 = vmatpush1.msra.mxu0 0.0
        %1060 = vmatprep.subr.mxu0 0.0
        %1061 = vmatpush1.msra.mxu0 0.0
        %1062 = vmatprep.subr.mxu0 0.0
        %1063 = vmatpush1.msra.mxu0 0.0
        %1064 = vmatprep.subr.mxu0 0.0
        %1065 = vmatpush1.msra.mxu0 0.0
        %1066 = vmatprep.mubr.f32.mxu0 0.0
        %v1067 = vand.u32 %v377, 4294901760
        %v1068 = vsub.f32 %v377, %v1067
        %v1069 = vand.u32 %v1068, 4294901760
        %v1070 = vsub.f32 %v1068, %v1069
        %v1071 = vand.u32 %v1070, 4294901760
        %1072 = vmatmul.mubr.f32.gmra.mrb[0].mxu0 %v1071
        %v1073 = vpop.f32.mrb[0].mxu0
        %v1074 = vadd.f32 0.0, %v1073
        %v1075 = vpop.f32.mrb[0].mxu0
        %v1076 = vadd.f32 0.0, %v1075
        %1077 = vmatprep.mubr.f32.mxu0 0.0
        %v1078 = vand.u32 %v380, 4294901760
        %v1079 = vsub.f32 %v380, %v1078
        %v1080 = vand.u32 %v1079, 4294901760
        %v1081 = vsub.f32 %v1079, %v1080
        %v1082 = vand.u32 %v1081, 4294901760
        %1083 = vmatmul.mubr.f32.gmra.mrb[0].mxu0 %v1082
        %v1084 = vpop.f32.mrb[0].mxu0
        %v1085 = vadd.f32 0.0, %v1084
        %v1086 = vpop.f32.mrb[0].mxu0
        %v1087 = vadd.f32 0.0, %v1086
        %1088 = vmatprep.mubr.f32.mxu0 0.0
        %v1089 = vand.u32 %v383, 4294901760
        %v1090 = vsub.f32 %v383, %v1089
        %v1091 = vand.u32 %v1090, 4294901760
        %v1092 = vsub.f32 %v1090, %v1091
        %v1093 = vand.u32 %v1092, 4294901760
        %1094 = vmatmul.mubr.f32.gmra.mrb[0].mxu0 %v1093
        %v1095 = vpop.f32.mrb[0].mxu0
        %v1096 = vadd.f32 0.0, %v1095
        %v1097 = vpop.f32.mrb[0].mxu0
        %v1098 = vadd.f32 0.0, %v1097
        %1099 = vmatprep.mubr.f32.mxu0 0.0
        %v1100 = vand.u32 %v386, 4294901760
        %v1101 = vsub.f32 %v386, %v1100
        %v1102 = vand.u32 %v1101, 4294901760
        %v1103 = vsub.f32 %v1101, %v1102
        %v1104 = vand.u32 %v1103, 4294901760
        %1105 = vmatmul.mubr.f32.gmra.mrb[0].mxu0 %v1104
        %v1106 = vpop.f32.mrb[0].mxu0
        %v1107 = vadd.f32 0.0, %v1106
        %v1108 = vpop.f32.mrb[0].mxu0
        %v1109 = vadd.f32 0.0, %v1108
        %1110 = vdwg.mxu0
        %v1111 = vand.u32 %v374, 4294901760
        %v1112 = vsub.f32 %v374, %v1111
        %v1113 = vand.u32 %v1112, 4294901760
        %v1114 = vsub.f32 %v1112, %v1113
        %v1115 = vand.u32 %v1114, 4294901760
        %1116 = vmatprep.subr.mxu0 %v1115
        %v1117 = vand.u32 %v373, 4294901760
        %v1118 = vsub.f32 %v373, %v1117
        %v1119 = vand.u32 %v1118, 4294901760
        %v1120 = vsub.f32 %v1118, %v1119
        %v1121 = vand.u32 %v1120, 4294901760
        %1122 = vmatpush1.msra.mxu0 %v1121
        %1123 = vmatprep.subr.mxu0 0.0
        %1124 = vmatpush1.msra.mxu0 0.0
        %1125 = vmatprep.subr.mxu0 0.0
        %1126 = vmatpush1.msra.mxu0 0.0
        %1127 = vmatprep.subr.mxu0 0.0
        %1128 = vmatpush1.msra.mxu0 0.0
        %1129 = vmatprep.subr.mxu0 0.0
        %1130 = vmatpush1.msra.mxu0 0.0
        %1131 = vmatprep.subr.mxu0 0.0
        %1132 = vmatpush1.msra.mxu0 0.0
        %1133 = vmatprep.subr.mxu0 0.0
        %1134 = vmatpush1.msra.mxu0 0.0
        %1135 = vmatprep.subr.mxu0 0.0
        %1136 = vmatpush1.msra.mxu0 0.0
        %1137 = vmatprep.subr.mxu0 0.0
        %1138 = vmatpush1.msra.mxu0 0.0
        %1139 = vmatprep.subr.mxu0 0.0
        %1140 = vmatpush1.msra.mxu0 0.0
        %1141 = vmatprep.subr.mxu0 0.0
        %1142 = vmatpush1.msra.mxu0 0.0
        %1143 = vmatprep.subr.mxu0 0.0
        %1144 = vmatpush1.msra.mxu0 0.0
        %1145 = vmatprep.subr.mxu0 0.0
        %1146 = vmatpush1.msra.mxu0 0.0
        %1147 = vmatprep.subr.mxu0 0.0
        %1148 = vmatpush1.msra.mxu0 0.0
        %1149 = vmatprep.subr.mxu0 0.0
        %1150 = vmatpush1.msra.mxu0 0.0
        %1151 = vmatprep.subr.mxu0 0.0
        %1152 = vmatpush1.msra.mxu0 0.0
        %1153 = vmatprep.subr.mxu0 0.0
        %1154 = vmatpush1.msra.mxu0 0.0
        %1155 = vmatprep.subr.mxu0 0.0
        %1156 = vmatpush1.msra.mxu0 0.0
        %1157 = vmatprep.subr.mxu0 0.0
        %1158 = vmatpush1.msra.mxu0 0.0
        %1159 = vmatprep.subr.mxu0 0.0
        %1160 = vmatpush1.msra.mxu0 0.0
        %1161 = vmatprep.subr.mxu0 0.0
        %1162 = vmatpush1.msra.mxu0 0.0
        %1163 = vmatprep.subr.mxu0 0.0
        %1164 = vmatpush1.msra.mxu0 0.0
        %1165 = vmatprep.subr.mxu0 0.0
        %1166 = vmatpush1.msra.mxu0 0.0
        %1167 = vmatprep.subr.mxu0 0.0
        %1168 = vmatpush1.msra.mxu0 0.0
        %1169 = vmatprep.subr.mxu0 0.0
        %1170 = vmatpush1.msra.mxu0 0.0
        %1171 = vmatprep.subr.mxu0 0.0
        %1172 = vmatpush1.msra.mxu0 0.0
        %1173 = vmatprep.subr.mxu0 0.0
        %1174 = vmatpush1.msra.mxu0 0.0
        %1175 = vmatprep.subr.mxu0 0.0
        %1176 = vmatpush1.msra.mxu0 0.0
        %1177 = vmatprep.subr.mxu0 0.0
        %1178 = vmatpush1.msra.mxu0 0.0
        %1179 = vmatprep.subr.mxu0 0.0
        %1180 = vmatpush1.msra.mxu0 0.0
        %1181 = vmatprep.subr.mxu0 0.0
        %1182 = vmatpush1.msra.mxu0 0.0
        %1183 = vmatprep.subr.mxu0 0.0
        %1184 = vmatpush1.msra.mxu0 0.0
        %1185 = vmatprep.mubr.f32.mxu0 0.0
        %v1186 = vand.u32 %v377, 4294901760
        %1187 = vmatmul.mubr.f32.gmra.mrb[0].mxu0 %v1186
        %v1188 = vpop.f32.mrb[0].mxu0
        %v1189 = vadd.f32 %v1074, %v1188
        %v1190 = vpop.f32.mrb[0].mxu0
        %v1191 = vadd.f32 %v1076, %v1190
        %1192 = vmatprep.mubr.f32.mxu0 0.0
        %v1193 = vand.u32 %v380, 4294901760
        %1194 = vmatmul.mubr.f32.gmra.mrb[0].mxu0 %v1193
        %v1195 = vpop.f32.mrb[0].mxu0
        %v1196 = vadd.f32 %v1085, %v1195
        %v1197 = vpop.f32.mrb[0].mxu0
        %v1198 = vadd.f32 %v1087, %v1197
        %1199 = vmatprep.mubr.f32.mxu0 0.0
        %v1200 = vand.u32 %v383, 4294901760
        %1201 = vmatmul.mubr.f32.gmra.mrb[0].mxu0 %v1200
        %v1202 = vpop.f32.mrb[0].mxu0
        %v1203 = vadd.f32 %v1096, %v1202
        %v1204 = vpop.f32.mrb[0].mxu0
        %v1205 = vadd.f32 %v1098, %v1204
        %1206 = vmatprep.mubr.f32.mxu0 0.0
        %v1207 = vand.u32 %v386, 4294901760
        %1208 = vmatmul.mubr.f32.gmra.mrb[0].mxu0 %v1207
        %v1209 = vpop.f32.mrb[0].mxu0
        %v1210 = vadd.f32 %v1107, %v1209
        %v1211 = vpop.f32.mrb[0].mxu0
        %v1212 = vadd.f32 %v1109, %v1211
        %1213 = vdwg.mxu0
        %v1214 = vand.u32 %v374, 4294901760
        %v1215 = vsub.f32 %v374, %v1214
        %1216 = vmatprep.subr.mxu0 %v1215
        %v1217 = vand.u32 %v373, 4294901760
        %v1218 = vsub.f32 %v373, %v1217
        %1219 = vmatpush1.msra.mxu0 %v1218
        %1220 = vmatprep.subr.mxu0 0.0
        %1221 = vmatpush1.msra.mxu0 0.0
        %1222 = vmatprep.subr.mxu0 0.0
        %1223 = vmatpush1.msra.mxu0 0.0
        %1224 = vmatprep.subr.mxu0 0.0
        %1225 = vmatpush1.msra.mxu0 0.0
        %1226 = vmatprep.subr.mxu0 0.0
        %1227 = vmatpush1.msra.mxu0 0.0
        %1228 = vmatprep.subr.mxu0 0.0
        %1229 = vmatpush1.msra.mxu0 0.0
        %1230 = vmatprep.subr.mxu0 0.0
        %1231 = vmatpush1.msra.mxu0 0.0
        %1232 = vmatprep.subr.mxu0 0.0
        %1233 = vmatpush1.msra.mxu0 0.0
        %1234 = vmatprep.subr.mxu0 0.0
        %1235 = vmatpush1.msra.mxu0 0.0
        %1236 = vmatprep.subr.mxu0 0.0
        %1237 = vmatpush1.msra.mxu0 0.0
        %1238 = vmatprep.subr.mxu0 0.0
        %1239 = vmatpush1.msra.mxu0 0.0
        %1240 = vmatprep.subr.mxu0 0.0
        %1241 = vmatpush1.msra.mxu0 0.0
        %1242 = vmatprep.subr.mxu0 0.0
        %1243 = vmatpush1.msra.mxu0 0.0
        %1244 = vmatprep.subr.mxu0 0.0
        %1245 = vmatpush1.msra.mxu0 0.0
        %1246 = vmatprep.subr.mxu0 0.0
        %1247 = vmatpush1.msra.mxu0 0.0
        %1248 = vmatprep.subr.mxu0 0.0
        %1249 = vmatpush1.msra.mxu0 0.0
        %1250 = vmatprep.subr.mxu0 0.0
        %1251 = vmatpush1.msra.mxu0 0.0
        %1252 = vmatprep.subr.mxu0 0.0
        %1253 = vmatpush1.msra.mxu0 0.0
        %1254 = vmatprep.subr.mxu0 0.0
        %1255 = vmatpush1.msra.mxu0 0.0
        %1256 = vmatprep.subr.mxu0 0.0
        %1257 = vmatpush1.msra.mxu0 0.0
        %1258 = vmatprep.subr.mxu0 0.0
        %1259 = vmatpush1.msra.mxu0 0.0
        %1260 = vmatprep.subr.mxu0 0.0
        %1261 = vmatpush1.msra.mxu0 0.0
        %1262 = vmatprep.subr.mxu0 0.0
        %1263 = vmatpush1.msra.mxu0 0.0
        %1264 = vmatprep.subr.mxu0 0.0
        %1265 = vmatpush1.msra.mxu0 0.0
        %1266 = vmatprep.subr.mxu0 0.0
        %1267 = vmatpush1.msra.mxu0 0.0
        %1268 = vmatprep.subr.mxu0 0.0
        %1269 = vmatpush1.msra.mxu0 0.0
        %1270 = vmatprep.subr.mxu0 0.0
        %1271 = vmatpush1.msra.mxu0 0.0
        %1272 = vmatprep.subr.mxu0 0.0
        %1273 = vmatpush1.msra.mxu0 0.0
        %1274 = vmatprep.subr.mxu0 0.0
        %1275 = vmatpush1.msra.mxu0 0.0
        %1276 = vmatprep.subr.mxu0 0.0
        %1277 = vmatpush1.msra.mxu0 0.0
        %1278 = vmatprep.subr.mxu0 0.0
        %1279 = vmatpush1.msra.mxu0 0.0
        %1280 = vmatprep.subr.mxu0 0.0
        %1281 = vmatpush1.msra.mxu0 0.0
        %1282 = vmatprep.mubr.f32.mxu0 0.0
        %v1283 = vand.u32 %v377, 4294901760
        %v1284 = vsub.f32 %v377, %v1283
        %1285 = vmatmul.mubr.f32.gmra.mrb[0].mxu0 %v1284
        %v1286 = vpop.f32.mrb[0].mxu0
        %v1287 = vadd.f32 %v1189, %v1286
        %v1288 = vpop.f32.mrb[0].mxu0
        %v1289 = vadd.f32 %v1191, %v1288
        %1290 = vmatprep.mubr.f32.mxu0 0.0
        %v1291 = vand.u32 %v380, 4294901760
        %v1292 = vsub.f32 %v380, %v1291
        %1293 = vmatmul.mubr.f32.gmra.mrb[0].mxu0 %v1292
        %v1294 = vpop.f32.mrb[0].mxu0
        %v1295 = vadd.f32 %v1196, %v1294
        %v1296 = vpop.f32.mrb[0].mxu0
        %v1297 = vadd.f32 %v1198, %v1296
        %1298 = vmatprep.mubr.f32.mxu0 0.0
        %v1299 = vand.u32 %v383, 4294901760
        %v1300 = vsub.f32 %v383, %v1299
        %1301 = vmatmul.mubr.f32.gmra.mrb[0].mxu0 %v1300
        %v1302 = vpop.f32.mrb[0].mxu0
        %v1303 = vadd.f32 %v1203, %v1302
        %v1304 = vpop.f32.mrb[0].mxu0
        %v1305 = vadd.f32 %v1205, %v1304
        %1306 = vmatprep.mubr.f32.mxu0 0.0
        %v1307 = vand.u32 %v386, 4294901760
        %v1308 = vsub.f32 %v386, %v1307
        %1309 = vmatmul.mubr.f32.gmra.mrb[0].mxu0 %v1308
        %v1310 = vpop.f32.mrb[0].mxu0
        %v1311 = vadd.f32 %v1210, %v1310
        %v1312 = vpop.f32.mrb[0].mxu0
        %v1313 = vadd.f32 %v1212, %v1312
        %1314 = vdwg.mxu0
        %v1315 = vand.u32 %v374, 4294901760
        %1316 = vmatprep.subr.mxu0 %v1315
        %v1317 = vand.u32 %v373, 4294901760
        %1318 = vmatpush1.msra.mxu0 %v1317
        %1319 = vmatprep.subr.mxu0 0.0
        %1320 = vmatpush1.msra.mxu0 0.0
        %1321 = vmatprep.subr.mxu0 0.0
        %1322 = vmatpush1.msra.mxu0 0.0
        %1323 = vmatprep.subr.mxu0 0.0
        %1324 = vmatpush1.msra.mxu0 0.0
        %1325 = vmatprep.subr.mxu0 0.0
        %1326 = vmatpush1.msra.mxu0 0.0
        %1327 = vmatprep.subr.mxu0 0.0
        %1328 = vmatpush1.msra.mxu0 0.0
        %1329 = vmatprep.subr.mxu0 0.0
        %1330 = vmatpush1.msra.mxu0 0.0
        %1331 = vmatprep.subr.mxu0 0.0
        %1332 = vmatpush1.msra.mxu0 0.0
        %1333 = vmatprep.subr.mxu0 0.0
        %1334 = vmatpush1.msra.mxu0 0.0
        %1335 = vmatprep.subr.mxu0 0.0
        %1336 = vmatpush1.msra.mxu0 0.0
        %1337 = vmatprep.subr.mxu0 0.0
        %1338 = vmatpush1.msra.mxu0 0.0
        %1339 = vmatprep.subr.mxu0 0.0
        %1340 = vmatpush1.msra.mxu0 0.0
        %1341 = vmatprep.subr.mxu0 0.0
        %1342 = vmatpush1.msra.mxu0 0.0
        %1343 = vmatprep.subr.mxu0 0.0
        %1344 = vmatpush1.msra.mxu0 0.0
        %1345 = vmatprep.subr.mxu0 0.0
        %1346 = vmatpush1.msra.mxu0 0.0
        %1347 = vmatprep.subr.mxu0 0.0
        %1348 = vmatpush1.msra.mxu0 0.0
        %1349 = vmatprep.subr.mxu0 0.0
        %1350 = vmatpush1.msra.mxu0 0.0
        %1351 = vmatprep.subr.mxu0 0.0
        %1352 = vmatpush1.msra.mxu0 0.0
        %1353 = vmatprep.subr.mxu0 0.0
        %1354 = vmatpush1.msra.mxu0 0.0
        %1355 = vmatprep.subr.mxu0 0.0
        %1356 = vmatpush1.msra.mxu0 0.0
        %1357 = vmatprep.subr.mxu0 0.0
        %1358 = vmatpush1.msra.mxu0 0.0
        %1359 = vmatprep.subr.mxu0 0.0
        %1360 = vmatpush1.msra.mxu0 0.0
        %1361 = vmatprep.subr.mxu0 0.0
        %1362 = vmatpush1.msra.mxu0 0.0
        %1363 = vmatprep.subr.mxu0 0.0
        %1364 = vmatpush1.msra.mxu0 0.0
        %1365 = vmatprep.subr.mxu0 0.0
        %1366 = vmatpush1.msra.mxu0 0.0
        %1367 = vmatprep.subr.mxu0 0.0
        %1368 = vmatpush1.msra.mxu0 0.0
        %1369 = vmatprep.subr.mxu0 0.0
        %1370 = vmatpush1.msra.mxu0 0.0
        %1371 = vmatprep.subr.mxu0 0.0
        %1372 = vmatpush1.msra.mxu0 0.0
        %1373 = vmatprep.subr.mxu0 0.0
        %1374 = vmatpush1.msra.mxu0 0.0
        %1375 = vmatprep.subr.mxu0 0.0
        %1376 = vmatpush1.msra.mxu0 0.0
        %1377 = vmatprep.subr.mxu0 0.0
        %1378 = vmatpush1.msra.mxu0 0.0
        %1379 = vmatprep.subr.mxu0 0.0
        %1380 = vmatpush1.msra.mxu0 0.0
        %1381 = vmatprep.mubr.f32.mxu0 0.0
        %v1382 = vand.u32 %v377, 4294901760
        %v1383 = vsub.f32 %v377, %v1382
        %v1384 = vand.u32 %v1383, 4294901760
        %1385 = vmatmul.mubr.f32.gmra.mrb[0].mxu0 %v1384
        %v1386 = vpop.f32.mrb[0].mxu0
        %v1387 = vadd.f32 %v1287, %v1386
        %v1388 = vpop.f32.mrb[0].mxu0
        %v1389 = vadd.f32 %v1289, %v1388
        %1390 = vmatprep.mubr.f32.mxu0 0.0
        %v1391 = vand.u32 %v380, 4294901760
        %v1392 = vsub.f32 %v380, %v1391
        %v1393 = vand.u32 %v1392, 4294901760
        %1394 = vmatmul.mubr.f32.gmra.mrb[0].mxu0 %v1393
        %v1395 = vpop.f32.mrb[0].mxu0
        %v1396 = vadd.f32 %v1295, %v1395
        %v1397 = vpop.f32.mrb[0].mxu0
        %v1398 = vadd.f32 %v1297, %v1397
        %1399 = vmatprep.mubr.f32.mxu0 0.0
        %v1400 = vand.u32 %v383, 4294901760
        %v1401 = vsub.f32 %v383, %v1400
        %v1402 = vand.u32 %v1401, 4294901760
        %1403 = vmatmul.mubr.f32.gmra.mrb[0].mxu0 %v1402
        %v1404 = vpop.f32.mrb[0].mxu0
        %v1405 = vadd.f32 %v1303, %v1404
        %v1406 = vpop.f32.mrb[0].mxu0
        %v1407 = vadd.f32 %v1305, %v1406
        %1408 = vmatprep.mubr.f32.mxu0 0.0
        %v1409 = vand.u32 %v386, 4294901760
        %v1410 = vsub.f32 %v386, %v1409
        %v1411 = vand.u32 %v1410, 4294901760
        %1412 = vmatmul.mubr.f32.gmra.mrb[0].mxu0 %v1411
        %v1413 = vpop.f32.mrb[0].mxu0
        %v1414 = vadd.f32 %v1311, %v1413
        %v1415 = vpop.f32.mrb[0].mxu0
        %v1416 = vadd.f32 %v1313, %v1415
        %1417 = vdwg.mxu0
        %v1418 = vand.u32 %v374, 4294901760
        %v1419 = vsub.f32 %v374, %v1418
        %v1420 = vand.u32 %v1419, 4294901760
        %1421 = vmatprep.subr.mxu0 %v1420
        %v1422 = vand.u32 %v373, 4294901760
        %v1423 = vsub.f32 %v373, %v1422
        %v1424 = vand.u32 %v1423, 4294901760
        %1425 = vmatpush1.msra.mxu0 %v1424
        %1426 = vmatprep.subr.mxu0 0.0
        %1427 = vmatpush1.msra.mxu0 0.0
        %1428 = vmatprep.subr.mxu0 0.0
        %1429 = vmatpush1.msra.mxu0 0.0
        %1430 = vmatprep.subr.mxu0 0.0
        %1431 = vmatpush1.msra.mxu0 0.0
        %1432 = vmatprep.subr.mxu0 0.0
        %1433 = vmatpush1.msra.mxu0 0.0
        %1434 = vmatprep.subr.mxu0 0.0
        %1435 = vmatpush1.msra.mxu0 0.0
        %1436 = vmatprep.subr.mxu0 0.0
        %1437 = vmatpush1.msra.mxu0 0.0
        %1438 = vmatprep.subr.mxu0 0.0
        %1439 = vmatpush1.msra.mxu0 0.0
        %1440 = vmatprep.subr.mxu0 0.0
        %1441 = vmatpush1.msra.mxu0 0.0
        %1442 = vmatprep.subr.mxu0 0.0
        %1443 = vmatpush1.msra.mxu0 0.0
        %1444 = vmatprep.subr.mxu0 0.0
        %1445 = vmatpush1.msra.mxu0 0.0
        %1446 = vmatprep.subr.mxu0 0.0
        %1447 = vmatpush1.msra.mxu0 0.0
        %1448 = vmatprep.subr.mxu0 0.0
        %1449 = vmatpush1.msra.mxu0 0.0
        %1450 = vmatprep.subr.mxu0 0.0
        %1451 = vmatpush1.msra.mxu0 0.0
        %1452 = vmatprep.subr.mxu0 0.0
        %1453 = vmatpush1.msra.mxu0 0.0
        %1454 = vmatprep.subr.mxu0 0.0
        %1455 = vmatpush1.msra.mxu0 0.0
        %1456 = vmatprep.subr.mxu0 0.0
        %1457 = vmatpush1.msra.mxu0 0.0
        %1458 = vmatprep.subr.mxu0 0.0
        %1459 = vmatpush1.msra.mxu0 0.0
        %1460 = vmatprep.subr.mxu0 0.0
        %1461 = vmatpush1.msra.mxu0 0.0
        %1462 = vmatprep.subr.mxu0 0.0
        %1463 = vmatpush1.msra.mxu0 0.0
        %1464 = vmatprep.subr.mxu0 0.0
        %1465 = vmatpush1.msra.mxu0 0.0
        %1466 = vmatprep.subr.mxu0 0.0
        %1467 = vmatpush1.msra.mxu0 0.0
        %1468 = vmatprep.subr.mxu0 0.0
        %1469 = vmatpush1.msra.mxu0 0.0
        %1470 = vmatprep.subr.mxu0 0.0
        %1471 = vmatpush1.msra.mxu0 0.0
        %1472 = vmatprep.subr.mxu0 0.0
        %1473 = vmatpush1.msra.mxu0 0.0
        %1474 = vmatprep.subr.mxu0 0.0
        %1475 = vmatpush1.msra.mxu0 0.0
        %1476 = vmatprep.subr.mxu0 0.0
        %1477 = vmatpush1.msra.mxu0 0.0
        %1478 = vmatprep.subr.mxu0 0.0
        %1479 = vmatpush1.msra.mxu0 0.0
        %1480 = vmatprep.subr.mxu0 0.0
        %1481 = vmatpush1.msra.mxu0 0.0
        %1482 = vmatprep.subr.mxu0 0.0
        %1483 = vmatpush1.msra.mxu0 0.0
        %1484 = vmatprep.subr.mxu0 0.0
        %1485 = vmatpush1.msra.mxu0 0.0
        %1486 = vmatprep.subr.mxu0 0.0
        %1487 = vmatpush1.msra.mxu0 0.0
        %1488 = vmatprep.mubr.f32.mxu0 0.0
        %v1489 = vand.u32 %v377, 4294901760
        %1490 = vmatmul.mubr.f32.gmra.mrb[0].mxu0 %v1489
        %v1491 = vpop.f32.mrb[0].mxu0
        %v1492 = vadd.f32 %v1387, %v1491
        %v1493 = vpop.f32.mrb[0].mxu0
        %v1494 = vadd.f32 %v1389, %v1493
        %1495 = vmatprep.mubr.f32.mxu0 0.0
        %v1496 = vand.u32 %v380, 4294901760
        %1497 = vmatmul.mubr.f32.gmra.mrb[0].mxu0 %v1496
        %v1498 = vpop.f32.mrb[0].mxu0
        %v1499 = vadd.f32 %v1396, %v1498
        %v1500 = vpop.f32.mrb[0].mxu0
        %v1501 = vadd.f32 %v1398, %v1500
        %1502 = vmatprep.mubr.f32.mxu0 0.0
        %v1503 = vand.u32 %v383, 4294901760
        %1504 = vmatmul.mubr.f32.gmra.mrb[0].mxu0 %v1503
        %v1505 = vpop.f32.mrb[0].mxu0
        %v1506 = vadd.f32 %v1405, %v1505
        %v1507 = vpop.f32.mrb[0].mxu0
        %v1508 = vadd.f32 %v1407, %v1507
        %1509 = vmatprep.mubr.f32.mxu0 0.0
        %v1510 = vand.u32 %v386, 4294901760
        %1511 = vmatmul.mubr.f32.gmra.mrb[0].mxu0 %v1510
        %v1512 = vpop.f32.mrb[0].mxu0
        %v1513 = vadd.f32 %v1414, %v1512
        %v1514 = vpop.f32.mrb[0].mxu0
        %v1515 = vadd.f32 %v1416, %v1514
        %1516 = vdwg.mxu0
        %v1517 = vand.u32 %v374, 4294901760
        %1518 = vmatprep.subr.mxu0 %v1517
        %v1519 = vand.u32 %v373, 4294901760
        %1520 = vmatpush1.msra.mxu0 %v1519
        %1521 = vmatprep.subr.mxu0 0.0
        %1522 = vmatpush1.msra.mxu0 0.0
        %1523 = vmatprep.subr.mxu0 0.0
        %1524 = vmatpush1.msra.mxu0 0.0
        %1525 = vmatprep.subr.mxu0 0.0
        %1526 = vmatpush1.msra.mxu0 0.0
        %1527 = vmatprep.subr.mxu0 0.0
        %1528 = vmatpush1.msra.mxu0 0.0
        %1529 = vmatprep.subr.mxu0 0.0
        %1530 = vmatpush1.msra.mxu0 0.0
        %1531 = vmatprep.subr.mxu0 0.0
        %1532 = vmatpush1.msra.mxu0 0.0
        %1533 = vmatprep.subr.mxu0 0.0
        %1534 = vmatpush1.msra.mxu0 0.0
        %1535 = vmatprep.subr.mxu0 0.0
        %1536 = vmatpush1.msra.mxu0 0.0
        %1537 = vmatprep.subr.mxu0 0.0
        %1538 = vmatpush1.msra.mxu0 0.0
        %1539 = vmatprep.subr.mxu0 0.0
        %1540 = vmatpush1.msra.mxu0 0.0
        %1541 = vmatprep.subr.mxu0 0.0
        %1542 = vmatpush1.msra.mxu0 0.0
        %1543 = vmatprep.subr.mxu0 0.0
        %1544 = vmatpush1.msra.mxu0 0.0
        %1545 = vmatprep.subr.mxu0 0.0
        %1546 = vmatpush1.msra.mxu0 0.0
        %1547 = vmatprep.subr.mxu0 0.0
        %1548 = vmatpush1.msra.mxu0 0.0
        %1549 = vmatprep.subr.mxu0 0.0
        %1550 = vmatpush1.msra.mxu0 0.0
        %1551 = vmatprep.subr.mxu0 0.0
        %1552 = vmatpush1.msra.mxu0 0.0
        %1553 = vmatprep.subr.mxu0 0.0
        %1554 = vmatpush1.msra.mxu0 0.0
        %1555 = vmatprep.subr.mxu0 0.0
        %1556 = vmatpush1.msra.mxu0 0.0
        %1557 = vmatprep.subr.mxu0 0.0
        %1558 = vmatpush1.msra.mxu0 0.0
        %1559 = vmatprep.subr.mxu0 0.0
        %1560 = vmatpush1.msra.mxu0 0.0
        %1561 = vmatprep.subr.mxu0 0.0
        %1562 = vmatpush1.msra.mxu0 0.0
        %1563 = vmatprep.subr.mxu0 0.0
        %1564 = vmatpush1.msra.mxu0 0.0
        %1565 = vmatprep.subr.mxu0 0.0
        %1566 = vmatpush1.msra.mxu0 0.0
        %1567 = vmatprep.subr.mxu0 0.0
        %1568 = vmatpush1.msra.mxu0 0.0
        %1569 = vmatprep.subr.mxu0 0.0
        %1570 = vmatpush1.msra.mxu0 0.0
        %1571 = vmatprep.subr.mxu0 0.0
        %1572 = vmatpush1.msra.mxu0 0.0
        %1573 = vmatprep.subr.mxu0 0.0
        %1574 = vmatpush1.msra.mxu0 0.0
        %1575 = vmatprep.subr.mxu0 0.0
        %1576 = vmatpush1.msra.mxu0 0.0
        %1577 = vmatprep.subr.mxu0 0.0
        %1578 = vmatpush1.msra.mxu0 0.0
        %1579 = vmatprep.subr.mxu0 0.0
        %1580 = vmatpush1.msra.mxu0 0.0
        %1581 = vmatprep.subr.mxu0 0.0
        %1582 = vmatpush1.msra.mxu0 0.0
        %1583 = vmatprep.mubr.f32.mxu0 0.0
        %v1584 = vand.u32 %v377, 4294901760
        %1585 = vmatmul.mubr.f32.gmra.mrb[0].mxu0 %v1584
        %v1586 = vpop.f32.mrb[0].mxu0
        %v1587 = vadd.f32 %v1492, %v1586
        %v1588 = vpop.f32.mrb[0].mxu0
        %v1589 = vadd.f32 %v1494, %v1588
        %1590 = vmatprep.mubr.f32.mxu0 0.0
        %v1591 = vand.u32 %v380, 4294901760
        %1592 = vmatmul.mubr.f32.gmra.mrb[0].mxu0 %v1591
        %v1593 = vpop.f32.mrb[0].mxu0
        %v1594 = vadd.f32 %v1499, %v1593
        %v1595 = vpop.f32.mrb[0].mxu0
        %v1596 = vadd.f32 %v1501, %v1595
        %1597 = vmatprep.mubr.f32.mxu0 0.0
        %v1598 = vand.u32 %v383, 4294901760
        %1599 = vmatmul.mubr.f32.gmra.mrb[0].mxu0 %v1598
        %v1600 = vpop.f32.mrb[0].mxu0
        %v1601 = vadd.f32 %v1506, %v1600
        %v1602 = vpop.f32.mrb[0].mxu0
        %v1603 = vadd.f32 %v1508, %v1602
        %1604 = vmatprep.mubr.f32.mxu0 0.0
        %v1605 = vand.u32 %v386, 4294901760
        %1606 = vmatmul.mubr.f32.gmra.mrb[0].mxu0 %v1605
        %v1607 = vpop.f32.mrb[0].mxu0
        %v1608 = vadd.f32 %v1513, %v1607
        %v1609 = vpop.f32.mrb[0].mxu0
        %v1610 = vadd.f32 %v1515, %v1609
        %1611 = vdwg.mxu0
        %v1612 = vadd.f32 %v351, %v975
        %v1613 = vadd.f32 %v352, %v977
        %v1614 = vadd.f32 %v353, %v1587
        %v1615 = vadd.f32 %v354, %v1589
        %v1616 = vadd.f32 %v355, %v982
        %v1617 = vadd.f32 %v356, %v984
        %v1618 = vadd.f32 %v357, %v1594
        %v1619 = vadd.f32 %v358, %v1596
        %v1620 = vadd.f32 %v359, %v989
        %v1621 = vadd.f32 %v360, %v991
        %v1622 = vadd.f32 %v361, %v1601
        %v1623 = vadd.f32 %v362, %v1603
        %v1624 = vadd.f32 %v363, %v996
        %v1625 = vadd.f32 %v364, %v998
        %v1626 = vadd.f32 %v365, %v1608
        %v1627 = vadd.f32 %v366, %v1610
        %v1628 = vld [vmem:[%s4] sm:$0xff]
        %v1629 = vld [vmem:[%s4 + $0x8] sm:$0xff]
        %v1630 = vld [vmem:[%s4 + $0x10] sm:$0xff]
        %v1631 = vld [vmem:[%s4 + $0x18] sm:$0xff]
        %1633 = vset.pattern.permute.xlu0 0
        %1634 = vperm.xlu0 %1633, %v1628
        %v1635 = vpop.permute.xlu0 %1634
        %1638 = vset.pattern.permute.xlu0 0
        %1639 = vperm.xlu0 %1638, %v1629
        %v1640 = vpop.permute.xlu0 %1639
        %1643 = vset.pattern.permute.xlu0 0
        %1644 = vperm.xlu0 %1643, %v1630
        %v1645 = vpop.permute.xlu0 %1644
        %1648 = vset.pattern.permute.xlu0 0
        %1649 = vperm.xlu0 %1648, %v1631
        %v1650 = vpop.permute.xlu0 %1649
        %v1652 = vadd.f32 %v1612, %v1635
        %v1653 = vadd.f32 %v1613, %v1635
        %v1654 = vadd.f32 %v1614, %v1635
        %v1655 = vadd.f32 %v1615, %v1635
        %v1656 = vadd.f32 %v1616, %v1640
        %v1657 = vadd.f32 %v1617, %v1640
        %v1658 = vadd.f32 %v1618, %v1640
        %v1659 = vadd.f32 %v1619, %v1640
        %v1660 = vadd.f32 %v1620, %v1645
        %v1661 = vadd.f32 %v1621, %v1645
        %v1662 = vadd.f32 %v1622, %v1645
        %v1663 = vadd.f32 %v1623, %v1645
        %v1664 = vadd.f32 %v1624, %v1650
        %v1665 = vadd.f32 %v1625, %v1650
        %v1666 = vadd.f32 %v1626, %v1650
        %v1667 = vadd.f32 %v1627, %v1650
        %v1668 = vmax.f32 %v1652, 0.0
        %v1669 = vmax.f32 %v1653, 0.0
        %v1670 = vmax.f32 %v1654, 0.0
        %v1671 = vmax.f32 %v1655, 0.0
        %v1672 = vmax.f32 %v1656, 0.0
        %v1673 = vmax.f32 %v1657, 0.0
        %v1674 = vmax.f32 %v1658, 0.0
        %v1675 = vmax.f32 %v1659, 0.0
        %v1676 = vmax.f32 %v1660, 0.0
        %v1677 = vmax.f32 %v1661, 0.0
        %v1678 = vmax.f32 %v1662, 0.0
        %v1679 = vmax.f32 %v1663, 0.0
        %v1680 = vmax.f32 %v1664, 0.0
        %v1681 = vmax.f32 %v1665, 0.0
        %v1682 = vmax.f32 %v1666, 0.0
        %v1683 = vmax.f32 %v1667, 0.0
        %v1684 = vld [vmem:[%s5] sm:$0xff]
        %v1685 = vld [vmem:[%s5 + $0x8] sm:$0x3]
        %v1686 = vld [vmem:[%s6] sm:$0xff]
        %v1687 = vld [vmem:[%s6 + $0x8] sm:$0x3]
        %1689 = vset.pattern.permute.xlu0 0
        %1690 = vperm.xlu0 %1689, %v1686
        %v1691 = vpop.permute.xlu0 %1690
        %1694 = vset.pattern.permute.xlu0 0
        %1695 = vperm.xlu0 %1694, %v1687
        %v1696 = vpop.permute.xlu0 %1695
        %vm1698 = vcmask 261120
        %v1700 = vsel %vm1698, %v1684, 0
        %v1703 = vsel %vm1698, %v1685, 0
        %v1705 = vand.u32 %v1669, 4294901760
        %1706 = vmatprep.subr.mxu0 %v1705
        %v1707 = vand.u32 %v1668, 4294901760
        %1708 = vmatpush1.msra.mxu0 %v1707
        %v1709 = vand.u32 %v1673, 4294901760
        %1710 = vmatprep.subr.mxu0 %v1709
        %v1711 = vand.u32 %v1672, 4294901760
        %1712 = vmatpush1.msra.mxu0 %v1711
        %v1713 = vand.u32 %v1677, 4294901760
        %1714 = vmatprep.subr.mxu0 %v1713
        %v1715 = vand.u32 %v1676, 4294901760
        %1716 = vmatpush1.msra.mxu0 %v1715
        %v1717 = vand.u32 %v1681, 4294901760
        %1718 = vmatprep.subr.mxu0 %v1717
        %v1719 = vand.u32 %v1680, 4294901760
        %1720 = vmatpush1.msra.mxu0 %v1719
        %1721 = vmatprep.subr.mxu0 0.0
        %1722 = vmatpush1.msra.mxu0 0.0
        %1723 = vmatprep.subr.mxu0 0.0
        %1724 = vmatpush1.msra.mxu0 0.0
        %1725 = vmatprep.subr.mxu0 0.0
        %1726 = vmatpush1.msra.mxu0 0.0
        %1727 = vmatprep.subr.mxu0 0.0
        %1728 = vmatpush1.msra.mxu0 0.0
        %1729 = vmatprep.subr.mxu0 0.0
        %1730 = vmatpush1.msra.mxu0 0.0
        %1731 = vmatprep.subr.mxu0 0.0
        %1732 = vmatpush1.msra.mxu0 0.0
        %1733 = vmatprep.subr.mxu0 0.0
        %1734 = vmatpush1.msra.mxu0 0.0
        %1735 = vmatprep.subr.mxu0 0.0
        %1736 = vmatpush1.msra.mxu0 0.0
        %1737 = vmatprep.subr.mxu0 0.0
        %1738 = vmatpush1.msra.mxu0 0.0
        %1739 = vmatprep.subr.mxu0 0.0
        %1740 = vmatpush1.msra.mxu0 0.0
        %1741 = vmatprep.subr.mxu0 0.0
        %1742 = vmatpush1.msra.mxu0 0.0
        %1743 = vmatprep.subr.mxu0 0.0
        %1744 = vmatpush1.msra.mxu0 0.0
        %1745 = vmatprep.subr.mxu0 0.0
        %1746 = vmatpush1.msra.mxu0 0.0
        %1747 = vmatprep.subr.mxu0 0.0
        %1748 = vmatpush1.msra.mxu0 0.0
        %1749 = vmatprep.subr.mxu0 0.0
        %1750 = vmatpush1.msra.mxu0 0.0
        %1751 = vmatprep.subr.mxu0 0.0
        %1752 = vmatpush1.msra.mxu0 0.0
        %1753 = vmatprep.subr.mxu0 0.0
        %1754 = vmatpush1.msra.mxu0 0.0
        %1755 = vmatprep.subr.mxu0 0.0
        %1756 = vmatpush1.msra.mxu0 0.0
        %1757 = vmatprep.subr.mxu0 0.0
        %1758 = vmatpush1.msra.mxu0 0.0
        %1759 = vmatprep.subr.mxu0 0.0
        %1760 = vmatpush1.msra.mxu0 0.0
        %1761 = vmatprep.subr.mxu0 0.0
        %1762 = vmatpush1.msra.mxu0 0.0
        %1763 = vmatprep.subr.mxu0 0.0
        %1764 = vmatpush1.msra.mxu0 0.0
        %1765 = vmatprep.subr.mxu0 0.0
        %1766 = vmatpush1.msra.mxu0 0.0
        %1767 = vmatprep.subr.mxu0 0.0
        %1768 = vmatpush1.msra.mxu0 0.0
        %1769 = vmatprep.subr.mxu0 0.0
        %1770 = vmatpush1.msra.mxu0 0.0
        %1771 = vmatprep.subr.mxu0 0.0
        %1772 = vmatpush1.msra.mxu0 0.0
        %1773 = vmatprep.subr.mxu0 0.0
        %1774 = vmatpush1.msra.mxu0 0.0
        %1775 = vmatprep.subr.mxu0 0.0
        %1776 = vmatpush1.msra.mxu0 0.0
        %1777 = vmatprep.mubr.f32.mxu0 0.0
        %v1778 = vand.u32 %v1700, 4294901760
        %v1779 = vsub.f32 %v1700, %v1778
        %v1780 = vand.u32 %v1779, 4294901760
        %v1781 = vsub.f32 %v1779, %v1780
        %v1782 = vand.u32 %v1781, 4294901760
        %1783 = vmatmul.mubr.f32.gmra.mrb[0].mxu0 %v1782
        %v1784 = vpop.f32.mrb[0].mxu0
        %v1785 = vadd.f32 %v1691, %v1784
        %v1786 = vpop.f32.mrb[0].mxu0
        %v1787 = vadd.f32 %v1691, %v1786
        %1788 = vmatprep.mubr.f32.mxu0 0.0
        %v1789 = vand.u32 %v1703, 4294901760
        %v1790 = vsub.f32 %v1703, %v1789
        %v1791 = vand.u32 %v1790, 4294901760
        %v1792 = vsub.f32 %v1790, %v1791
        %v1793 = vand.u32 %v1792, 4294901760
        %1794 = vmatmul.mubr.f32.gmra.mrb[0].mxu0 %v1793
        %v1795 = vpop.f32.mrb[0].mxu0
        %v1796 = vadd.f32 %v1696, %v1795
        %v1797 = vpop.f32.mrb[0].mxu0
        %v1798 = vadd.f32 %v1696, %v1797
        %1799 = vdwg.mxu0
        %v1800 = vand.u32 %v1669, 4294901760
        %v1801 = vsub.f32 %v1669, %v1800
        %v1802 = vand.u32 %v1801, 4294901760
        %v1803 = vsub.f32 %v1801, %v1802
        %v1804 = vand.u32 %v1803, 4294901760
        %1805 = vmatprep.subr.mxu0 %v1804
        %v1806 = vand.u32 %v1668, 4294901760
        %v1807 = vsub.f32 %v1668, %v1806
        %v1808 = vand.u32 %v1807, 4294901760
        %v1809 = vsub.f32 %v1807, %v1808
        %v1810 = vand.u32 %v1809, 4294901760
        %1811 = vmatpush1.msra.mxu0 %v1810
        %v1812 = vand.u32 %v1673, 4294901760
        %v1813 = vsub.f32 %v1673, %v1812
        %v1814 = vand.u32 %v1813, 4294901760
        %v1815 = vsub.f32 %v1813, %v1814
        %v1816 = vand.u32 %v1815, 4294901760
        %1817 = vmatprep.subr.mxu0 %v1816
        %v1818 = vand.u32 %v1672, 4294901760
        %v1819 = vsub.f32 %v1672, %v1818
        %v1820 = vand.u32 %v1819, 4294901760
        %v1821 = vsub.f32 %v1819, %v1820
        %v1822 = vand.u32 %v1821, 4294901760
        %1823 = vmatpush1.msra.mxu0 %v1822
        %v1824 = vand.u32 %v1677, 4294901760
        %v1825 = vsub.f32 %v1677, %v1824
        %v1826 = vand.u32 %v1825, 4294901760
        %v1827 = vsub.f32 %v1825, %v1826
        %v1828 = vand.u32 %v1827, 4294901760
        %1829 = vmatprep.subr.mxu0 %v1828
        %v1830 = vand.u32 %v1676, 4294901760
        %v1831 = vsub.f32 %v1676, %v1830
        %v1832 = vand.u32 %v1831, 4294901760
        %v1833 = vsub.f32 %v1831, %v1832
        %v1834 = vand.u32 %v1833, 4294901760
        %1835 = vmatpush1.msra.mxu0 %v1834
        %v1836 = vand.u32 %v1681, 4294901760
        %v1837 = vsub.f32 %v1681, %v1836
        %v1838 = vand.u32 %v1837, 4294901760
        %v1839 = vsub.f32 %v1837, %v1838
        %v1840 = vand.u32 %v1839, 4294901760
        %1841 = vmatprep.subr.mxu0 %v1840
        %v1842 = vand.u32 %v1680, 4294901760
        %v1843 = vsub.f32 %v1680, %v1842
        %v1844 = vand.u32 %v1843, 4294901760
        %v1845 = vsub.f32 %v1843, %v1844
        %v1846 = vand.u32 %v1845, 4294901760
        %1847 = vmatpush1.msra.mxu0 %v1846
        %1848 = vmatprep.subr.mxu0 0.0
        %1849 = vmatpush1.msra.mxu0 0.0
        %1850 = vmatprep.subr.mxu0 0.0
        %1851 = vmatpush1.msra.mxu0 0.0
        %1852 = vmatprep.subr.mxu0 0.0
        %1853 = vmatpush1.msra.mxu0 0.0
        %1854 = vmatprep.subr.mxu0 0.0
        %1855 = vmatpush1.msra.mxu0 0.0
        %1856 = vmatprep.subr.mxu0 0.0
        %1857 = vmatpush1.msra.mxu0 0.0
        %1858 = vmatprep.subr.mxu0 0.0
        %1859 = vmatpush1.msra.mxu0 0.0
        %1860 = vmatprep.subr.mxu0 0.0
        %1861 = vmatpush1.msra.mxu0 0.0
        %1862 = vmatprep.subr.mxu0 0.0
        %1863 = vmatpush1.msra.mxu0 0.0
        %1864 = vmatprep.subr.mxu0 0.0
        %1865 = vmatpush1.msra.mxu0 0.0
        %1866 = vmatprep.subr.mxu0 0.0
        %1867 = vmatpush1.msra.mxu0 0.0
        %1868 = vmatprep.subr.mxu0 0.0
        %1869 = vmatpush1.msra.mxu0 0.0
        %1870 = vmatprep.subr.mxu0 0.0
        %1871 = vmatpush1.msra.mxu0 0.0
        %1872 = vmatprep.subr.mxu0 0.0
        %1873 = vmatpush1.msra.mxu0 0.0
        %1874 = vmatprep.subr.mxu0 0.0
        %1875 = vmatpush1.msra.mxu0 0.0
        %1876 = vmatprep.subr.mxu0 0.0
        %1877 = vmatpush1.msra.mxu0 0.0
        %1878 = vmatprep.subr.mxu0 0.0
        %1879 = vmatpush1.msra.mxu0 0.0
        %1880 = vmatprep.subr.mxu0 0.0
        %1881 = vmatpush1.msra.mxu0 0.0
        %1882 = vmatprep.subr.mxu0 0.0
        %1883 = vmatpush1.msra.mxu0 0.0
        %1884 = vmatprep.subr.mxu0 0.0
        %1885 = vmatpush1.msra.mxu0 0.0
        %1886 = vmatprep.subr.mxu0 0.0
        %1887 = vmatpush1.msra.mxu0 0.0
        %1888 = vmatprep.subr.mxu0 0.0
        %1889 = vmatpush1.msra.mxu0 0.0
        %1890 = vmatprep.subr.mxu0 0.0
        %1891 = vmatpush1.msra.mxu0 0.0
        %1892 = vmatprep.subr.mxu0 0.0
        %1893 = vmatpush1.msra.mxu0 0.0
        %1894 = vmatprep.subr.mxu0 0.0
        %1895 = vmatpush1.msra.mxu0 0.0
        %1896 = vmatprep.subr.mxu0 0.0
        %1897 = vmatpush1.msra.mxu0 0.0
        %1898 = vmatprep.subr.mxu0 0.0
        %1899 = vmatpush1.msra.mxu0 0.0
        %1900 = vmatprep.subr.mxu0 0.0
        %1901 = vmatpush1.msra.mxu0 0.0
        %1902 = vmatprep.subr.mxu0 0.0
        %1903 = vmatpush1.msra.mxu0 0.0
        %1904 = vmatprep.mubr.f32.mxu0 0.0
        %v1905 = vand.u32 %v1700, 4294901760
        %1906 = vmatmul.mubr.f32.gmra.mrb[0].mxu0 %v1905
        %v1907 = vpop.f32.mrb[0].mxu0
        %v1908 = vadd.f32 %v1785, %v1907
        %v1909 = vpop.f32.mrb[0].mxu0
        %v1910 = vadd.f32 %v1787, %v1909
        %1911 = vmatprep.mubr.f32.mxu0 0.0
        %v1912 = vand.u32 %v1703, 4294901760
        %1913 = vmatmul.mubr.f32.gmra.mrb[0].mxu0 %v1912
        %v1914 = vpop.f32.mrb[0].mxu0
        %v1915 = vadd.f32 %v1796, %v1914
        %v1916 = vpop.f32.mrb[0].mxu0
        %v1917 = vadd.f32 %v1798, %v1916
        %1918 = vdwg.mxu0
        %v1919 = vand.u32 %v1669, 4294901760
        %v1920 = vsub.f32 %v1669, %v1919
        %1921 = vmatprep.subr.mxu0 %v1920
        %v1922 = vand.u32 %v1668, 4294901760
        %v1923 = vsub.f32 %v1668, %v1922
        %1924 = vmatpush1.msra.mxu0 %v1923
        %v1925 = vand.u32 %v1673, 4294901760
        %v1926 = vsub.f32 %v1673, %v1925
        %1927 = vmatprep.subr.mxu0 %v1926
        %v1928 = vand.u32 %v1672, 4294901760
        %v1929 = vsub.f32 %v1672, %v1928
        %1930 = vmatpush1.msra.mxu0 %v1929
        %v1931 = vand.u32 %v1677, 4294901760
        %v1932 = vsub.f32 %v1677, %v1931
        %1933 = vmatprep.subr.mxu0 %v1932
        %v1934 = vand.u32 %v1676, 4294901760
        %v1935 = vsub.f32 %v1676, %v1934
        %1936 = vmatpush1.msra.mxu0 %v1935
        %v1937 = vand.u32 %v1681, 4294901760
        %v1938 = vsub.f32 %v1681, %v1937
        %1939 = vmatprep.subr.mxu0 %v1938
        %v1940 = vand.u32 %v1680, 4294901760
        %v1941 = vsub.f32 %v1680, %v1940
        %1942 = vmatpush1.msra.mxu0 %v1941
        %1943 = vmatprep.subr.mxu0 0.0
        %1944 = vmatpush1.msra.mxu0 0.0
        %1945 = vmatprep.subr.mxu0 0.0
        %1946 = vmatpush1.msra.mxu0 0.0
        %1947 = vmatprep.subr.mxu0 0.0
        %1948 = vmatpush1.msra.mxu0 0.0
        %1949 = vmatprep.subr.mxu0 0.0
        %1950 = vmatpush1.msra.mxu0 0.0
        %1951 = vmatprep.subr.mxu0 0.0
        %1952 = vmatpush1.msra.mxu0 0.0
        %1953 = vmatprep.subr.mxu0 0.0
        %1954 = vmatpush1.msra.mxu0 0.0
        %1955 = vmatprep.subr.mxu0 0.0
        %1956 = vmatpush1.msra.mxu0 0.0
        %1957 = vmatprep.subr.mxu0 0.0
        %1958 = vmatpush1.msra.mxu0 0.0
        %1959 = vmatprep.subr.mxu0 0.0
        %1960 = vmatpush1.msra.mxu0 0.0
        %1961 = vmatprep.subr.mxu0 0.0
        %1962 = vmatpush1.msra.mxu0 0.0
        %1963 = vmatprep.subr.mxu0 0.0
        %1964 = vmatpush1.msra.mxu0 0.0
        %1965 = vmatprep.subr.mxu0 0.0
        %1966 = vmatpush1.msra.mxu0 0.0
        %1967 = vmatprep.subr.mxu0 0.0
        %1968 = vmatpush1.msra.mxu0 0.0
        %1969 = vmatprep.subr.mxu0 0.0
        %1970 = vmatpush1.msra.mxu0 0.0
        %1971 = vmatprep.subr.mxu0 0.0
        %1972 = vmatpush1.msra.mxu0 0.0
        %1973 = vmatprep.subr.mxu0 0.0
        %1974 = vmatpush1.msra.mxu0 0.0
        %1975 = vmatprep.subr.mxu0 0.0
        %1976 = vmatpush1.msra.mxu0 0.0
        %1977 = vmatprep.subr.mxu0 0.0
        %1978 = vmatpush1.msra.mxu0 0.0
        %1979 = vmatprep.subr.mxu0 0.0
        %1980 = vmatpush1.msra.mxu0 0.0
        %1981 = vmatprep.subr.mxu0 0.0
        %1982 = vmatpush1.msra.mxu0 0.0
        %1983 = vmatprep.subr.mxu0 0.0
        %1984 = vmatpush1.msra.mxu0 0.0
        %1985 = vmatprep.subr.mxu0 0.0
        %1986 = vmatpush1.msra.mxu0 0.0
        %1987 = vmatprep.subr.mxu0 0.0
        %1988 = vmatpush1.msra.mxu0 0.0
        %1989 = vmatprep.subr.mxu0 0.0
        %1990 = vmatpush1.msra.mxu0 0.0
        %1991 = vmatprep.subr.mxu0 0.0
        %1992 = vmatpush1.msra.mxu0 0.0
        %1993 = vmatprep.subr.mxu0 0.0
        %1994 = vmatpush1.msra.mxu0 0.0
        %1995 = vmatprep.subr.mxu0 0.0
        %1996 = vmatpush1.msra.mxu0 0.0
        %1997 = vmatprep.subr.mxu0 0.0
        %1998 = vmatpush1.msra.mxu0 0.0
        %1999 = vmatprep.mubr.f32.mxu0 0.0
        %v2000 = vand.u32 %v1700, 4294901760
        %v2001 = vsub.f32 %v1700, %v2000
        %2002 = vmatmul.mubr.f32.gmra.mrb[0].mxu0 %v2001
        %v2003 = vpop.f32.mrb[0].mxu0
        %v2004 = vadd.f32 %v1908, %v2003
        %v2005 = vpop.f32.mrb[0].mxu0
        %v2006 = vadd.f32 %v1910, %v2005
        %2007 = vmatprep.mubr.f32.mxu0 0.0
        %v2008 = vand.u32 %v1703, 4294901760
        %v2009 = vsub.f32 %v1703, %v2008
        %2010 = vmatmul.mubr.f32.gmra.mrb[0].mxu0 %v2009
        %v2011 = vpop.f32.mrb[0].mxu0
        %v2012 = vadd.f32 %v1915, %v2011
        %v2013 = vpop.f32.mrb[0].mxu0
        %v2014 = vadd.f32 %v1917, %v2013
        %2015 = vdwg.mxu0
        %v2016 = vand.u32 %v1669, 4294901760
        %2017 = vmatprep.subr.mxu0 %v2016
        %v2018 = vand.u32 %v1668, 4294901760
        %2019 = vmatpush1.msra.mxu0 %v2018
        %v2020 = vand.u32 %v1673, 4294901760
        %2021 = vmatprep.subr.mxu0 %v2020
        %v2022 = vand.u32 %v1672, 4294901760
        %2023 = vmatpush1.msra.mxu0 %v2022
        %v2024 = vand.u32 %v1677, 4294901760
        %2025 = vmatprep.subr.mxu0 %v2024
        %v2026 = vand.u32 %v1676, 4294901760
        %2027 = vmatpush1.msra.mxu0 %v2026
        %v2028 = vand.u32 %v1681, 4294901760
        %2029 = vmatprep.subr.mxu0 %v2028
        %v2030 = vand.u32 %v1680, 4294901760
        %2031 = vmatpush1.msra.mxu0 %v2030
        %2032 = vmatprep.subr.mxu0 0.0
        %2033 = vmatpush1.msra.mxu0 0.0
        %2034 = vmatprep.subr.mxu0 0.0
        %2035 = vmatpush1.msra.mxu0 0.0
        %2036 = vmatprep.subr.mxu0 0.0
        %2037 = vmatpush1.msra.mxu0 0.0
        %2038 = vmatprep.subr.mxu0 0.0
        %2039 = vmatpush1.msra.mxu0 0.0
        %2040 = vmatprep.subr.mxu0 0.0
        %2041 = vmatpush1.msra.mxu0 0.0
        %2042 = vmatprep.subr.mxu0 0.0
        %2043 = vmatpush1.msra.mxu0 0.0
        %2044 = vmatprep.subr.mxu0 0.0
        %2045 = vmatpush1.msra.mxu0 0.0
        %2046 = vmatprep.subr.mxu0 0.0
        %2047 = vmatpush1.msra.mxu0 0.0
        %2048 = vmatprep.subr.mxu0 0.0
        %2049 = vmatpush1.msra.mxu0 0.0
        %2050 = vmatprep.subr.mxu0 0.0
        %2051 = vmatpush1.msra.mxu0 0.0
        %2052 = vmatprep.subr.mxu0 0.0
        %2053 = vmatpush1.msra.mxu0 0.0
        %2054 = vmatprep.subr.mxu0 0.0
        %2055 = vmatpush1.msra.mxu0 0.0
        %2056 = vmatprep.subr.mxu0 0.0
        %2057 = vmatpush1.msra.mxu0 0.0
        %2058 = vmatprep.subr.mxu0 0.0
        %2059 = vmatpush1.msra.mxu0 0.0
        %2060 = vmatprep.subr.mxu0 0.0
        %2061 = vmatpush1.msra.mxu0 0.0
        %2062 = vmatprep.subr.mxu0 0.0
        %2063 = vmatpush1.msra.mxu0 0.0
        %2064 = vmatprep.subr.mxu0 0.0
        %2065 = vmatpush1.msra.mxu0 0.0
        %2066 = vmatprep.subr.mxu0 0.0
        %2067 = vmatpush1.msra.mxu0 0.0
        %2068 = vmatprep.subr.mxu0 0.0
        %2069 = vmatpush1.msra.mxu0 0.0
        %2070 = vmatprep.subr.mxu0 0.0
        %2071 = vmatpush1.msra.mxu0 0.0
        %2072 = vmatprep.subr.mxu0 0.0
        %2073 = vmatpush1.msra.mxu0 0.0
        %2074 = vmatprep.subr.mxu0 0.0
        %2075 = vmatpush1.msra.mxu0 0.0
        %2076 = vmatprep.subr.mxu0 0.0
        %2077 = vmatpush1.msra.mxu0 0.0
        %2078 = vmatprep.subr.mxu0 0.0
        %2079 = vmatpush1.msra.mxu0 0.0
        %2080 = vmatprep.subr.mxu0 0.0
        %2081 = vmatpush1.msra.mxu0 0.0
        %2082 = vmatprep.subr.mxu0 0.0
        %2083 = vmatpush1.msra.mxu0 0.0
        %2084 = vmatprep.subr.mxu0 0.0
        %2085 = vmatpush1.msra.mxu0 0.0
        %2086 = vmatprep.subr.mxu0 0.0
        %2087 = vmatpush1.msra.mxu0 0.0
        %2088 = vmatprep.mubr.f32.mxu0 0.0
        %v2089 = vand.u32 %v1700, 4294901760
        %v2090 = vsub.f32 %v1700, %v2089
        %v2091 = vand.u32 %v2090, 4294901760
        %2092 = vmatmul.mubr.f32.gmra.mrb[0].mxu0 %v2091
        %v2093 = vpop.f32.mrb[0].mxu0
        %v2094 = vadd.f32 %v2004, %v2093
        %v2095 = vpop.f32.mrb[0].mxu0
        %v2096 = vadd.f32 %v2006, %v2095
        %2097 = vmatprep.mubr.f32.mxu0 0.0
        %v2098 = vand.u32 %v1703, 4294901760
        %v2099 = vsub.f32 %v1703, %v2098
        %v2100 = vand.u32 %v2099, 4294901760
        %2101 = vmatmul.mubr.f32.gmra.mrb[0].mxu0 %v2100
        %v2102 = vpop.f32.mrb[0].mxu0
        %v2103 = vadd.f32 %v2012, %v2102
        %v2104 = vpop.f32.mrb[0].mxu0
        %v2105 = vadd.f32 %v2014, %v2104
        %2106 = vdwg.mxu0
        %v2107 = vand.u32 %v1669, 4294901760
        %v2108 = vsub.f32 %v1669, %v2107
        %v2109 = vand.u32 %v2108, 4294901760
        %2110 = vmatprep.subr.mxu0 %v2109
        %v2111 = vand.u32 %v1668, 4294901760
        %v2112 = vsub.f32 %v1668, %v2111
        %v2113 = vand.u32 %v2112, 4294901760
        %2114 = vmatpush1.msra.mxu0 %v2113
        %v2115 = vand.u32 %v1673, 4294901760
        %v2116 = vsub.f32 %v1673, %v2115
        %v2117 = vand.u32 %v2116, 4294901760
        %2118 = vmatprep.subr.mxu0 %v2117
        %v2119 = vand.u32 %v1672, 4294901760
        %v2120 = vsub.f32 %v1672, %v2119
        %v2121 = vand.u32 %v2120, 4294901760
        %2122 = vmatpush1.msra.mxu0 %v2121
        %v2123 = vand.u32 %v1677, 4294901760
        %v2124 = vsub.f32 %v1677, %v2123
        %v2125 = vand.u32 %v2124, 4294901760
        %2126 = vmatprep.subr.mxu0 %v2125
        %v2127 = vand.u32 %v1676, 4294901760
        %v2128 = vsub.f32 %v1676, %v2127
        %v2129 = vand.u32 %v2128, 4294901760
        %2130 = vmatpush1.msra.mxu0 %v2129
        %v2131 = vand.u32 %v1681, 4294901760
        %v2132 = vsub.f32 %v1681, %v2131
        %v2133 = vand.u32 %v2132, 4294901760
        %2134 = vmatprep.subr.mxu0 %v2133
        %v2135 = vand.u32 %v1680, 4294901760
        %v2136 = vsub.f32 %v1680, %v2135
        %v2137 = vand.u32 %v2136, 4294901760
        %2138 = vmatpush1.msra.mxu0 %v2137
        %2139 = vmatprep.subr.mxu0 0.0
        %2140 = vmatpush1.msra.mxu0 0.0
        %2141 = vmatprep.subr.mxu0 0.0
        %2142 = vmatpush1.msra.mxu0 0.0
        %2143 = vmatprep.subr.mxu0 0.0
        %2144 = vmatpush1.msra.mxu0 0.0
        %2145 = vmatprep.subr.mxu0 0.0
        %2146 = vmatpush1.msra.mxu0 0.0
        %2147 = vmatprep.subr.mxu0 0.0
        %2148 = vmatpush1.msra.mxu0 0.0
        %2149 = vmatprep.subr.mxu0 0.0
        %2150 = vmatpush1.msra.mxu0 0.0
        %2151 = vmatprep.subr.mxu0 0.0
        %2152 = vmatpush1.msra.mxu0 0.0
        %2153 = vmatprep.subr.mxu0 0.0
        %2154 = vmatpush1.msra.mxu0 0.0
        %2155 = vmatprep.subr.mxu0 0.0
        %2156 = vmatpush1.msra.mxu0 0.0
        %2157 = vmatprep.subr.mxu0 0.0
        %2158 = vmatpush1.msra.mxu0 0.0
        %2159 = vmatprep.subr.mxu0 0.0
        %2160 = vmatpush1.msra.mxu0 0.0
        %2161 = vmatprep.subr.mxu0 0.0
        %2162 = vmatpush1.msra.mxu0 0.0
        %2163 = vmatprep.subr.mxu0 0.0
        %2164 = vmatpush1.msra.mxu0 0.0
        %2165 = vmatprep.subr.mxu0 0.0
        %2166 = vmatpush1.msra.mxu0 0.0
        %2167 = vmatprep.subr.mxu0 0.0
        %2168 = vmatpush1.msra.mxu0 0.0
        %2169 = vmatprep.subr.mxu0 0.0
        %2170 = vmatpush1.msra.mxu0 0.0
        %2171 = vmatprep.subr.mxu0 0.0
        %2172 = vmatpush1.msra.mxu0 0.0
        %2173 = vmatprep.subr.mxu0 0.0
        %2174 = vmatpush1.msra.mxu0 0.0
        %2175 = vmatprep.subr.mxu0 0.0
        %2176 = vmatpush1.msra.mxu0 0.0
        %2177 = vmatprep.subr.mxu0 0.0
        %2178 = vmatpush1.msra.mxu0 0.0
        %2179 = vmatprep.subr.mxu0 0.0
        %2180 = vmatpush1.msra.mxu0 0.0
        %2181 = vmatprep.subr.mxu0 0.0
        %2182 = vmatpush1.msra.mxu0 0.0
        %2183 = vmatprep.subr.mxu0 0.0
        %2184 = vmatpush1.msra.mxu0 0.0
        %2185 = vmatprep.subr.mxu0 0.0
        %2186 = vmatpush1.msra.mxu0 0.0
        %2187 = vmatprep.subr.mxu0 0.0
        %2188 = vmatpush1.msra.mxu0 0.0
        %2189 = vmatprep.subr.mxu0 0.0
        %2190 = vmatpush1.msra.mxu0 0.0
        %2191 = vmatprep.subr.mxu0 0.0
        %2192 = vmatpush1.msra.mxu0 0.0
        %2193 = vmatprep.subr.mxu0 0.0
        %2194 = vmatpush1.msra.mxu0 0.0
        %2195 = vmatprep.mubr.f32.mxu0 0.0
        %v2196 = vand.u32 %v1700, 4294901760
        %2197 = vmatmul.mubr.f32.gmra.mrb[0].mxu0 %v2196
        %v2198 = vpop.f32.mrb[0].mxu0
        %v2199 = vadd.f32 %v2094, %v2198
        %v2200 = vpop.f32.mrb[0].mxu0
        %v2201 = vadd.f32 %v2096, %v2200
        %2202 = vmatprep.mubr.f32.mxu0 0.0
        %v2203 = vand.u32 %v1703, 4294901760
        %2204 = vmatmul.mubr.f32.gmra.mrb[0].mxu0 %v2203
        %v2205 = vpop.f32.mrb[0].mxu0
        %v2206 = vadd.f32 %v2103, %v2205
        %v2207 = vpop.f32.mrb[0].mxu0
        %v2208 = vadd.f32 %v2105, %v2207
        %2209 = vdwg.mxu0
        %v2210 = vand.u32 %v1669, 4294901760
        %2211 = vmatprep.subr.mxu0 %v2210
        %v2212 = vand.u32 %v1668, 4294901760
        %2213 = vmatpush1.msra.mxu0 %v2212
        %v2214 = vand.u32 %v1673, 4294901760
        %2215 = vmatprep.subr.mxu0 %v2214
        %v2216 = vand.u32 %v1672, 4294901760
        %2217 = vmatpush1.msra.mxu0 %v2216
        %v2218 = vand.u32 %v1677, 4294901760
        %2219 = vmatprep.subr.mxu0 %v2218
        %v2220 = vand.u32 %v1676, 4294901760
        %2221 = vmatpush1.msra.mxu0 %v2220
        %v2222 = vand.u32 %v1681, 4294901760
        %2223 = vmatprep.subr.mxu0 %v2222
        %v2224 = vand.u32 %v1680, 4294901760
        %2225 = vmatpush1.msra.mxu0 %v2224
        %2226 = vmatprep.subr.mxu0 0.0
        %2227 = vmatpush1.msra.mxu0 0.0
        %2228 = vmatprep.subr.mxu0 0.0
        %2229 = vmatpush1.msra.mxu0 0.0
        %2230 = vmatprep.subr.mxu0 0.0
        %2231 = vmatpush1.msra.mxu0 0.0
        %2232 = vmatprep.subr.mxu0 0.0
        %2233 = vmatpush1.msra.mxu0 0.0
        %2234 = vmatprep.subr.mxu0 0.0
        %2235 = vmatpush1.msra.mxu0 0.0
        %2236 = vmatprep.subr.mxu0 0.0
        %2237 = vmatpush1.msra.mxu0 0.0
        %2238 = vmatprep.subr.mxu0 0.0
        %2239 = vmatpush1.msra.mxu0 0.0
        %2240 = vmatprep.subr.mxu0 0.0
        %2241 = vmatpush1.msra.mxu0 0.0
        %2242 = vmatprep.subr.mxu0 0.0
        %2243 = vmatpush1.msra.mxu0 0.0
        %2244 = vmatprep.subr.mxu0 0.0
        %2245 = vmatpush1.msra.mxu0 0.0
        %2246 = vmatprep.subr.mxu0 0.0
        %2247 = vmatpush1.msra.mxu0 0.0
        %2248 = vmatprep.subr.mxu0 0.0
        %2249 = vmatpush1.msra.mxu0 0.0
        %2250 = vmatprep.subr.mxu0 0.0
        %2251 = vmatpush1.msra.mxu0 0.0
        %2252 = vmatprep.subr.mxu0 0.0
        %2253 = vmatpush1.msra.mxu0 0.0
        %2254 = vmatprep.subr.mxu0 0.0
        %2255 = vmatpush1.msra.mxu0 0.0
        %2256 = vmatprep.subr.mxu0 0.0
        %2257 = vmatpush1.msra.mxu0 0.0
        %2258 = vmatprep.subr.mxu0 0.0
        %2259 = vmatpush1.msra.mxu0 0.0
        %2260 = vmatprep.subr.mxu0 0.0
        %2261 = vmatpush1.msra.mxu0 0.0
        %2262 = vmatprep.subr.mxu0 0.0
        %2263 = vmatpush1.msra.mxu0 0.0
        %2264 = vmatprep.subr.mxu0 0.0
        %2265 = vmatpush1.msra.mxu0 0.0
        %2266 = vmatprep.subr.mxu0 0.0
        %2267 = vmatpush1.msra.mxu0 0.0
        %2268 = vmatprep.subr.mxu0 0.0
        %2269 = vmatpush1.msra.mxu0 0.0
        %2270 = vmatprep.subr.mxu0 0.0
        %2271 = vmatpush1.msra.mxu0 0.0
        %2272 = vmatprep.subr.mxu0 0.0
        %2273 = vmatpush1.msra.mxu0 0.0
        %2274 = vmatprep.subr.mxu0 0.0
        %2275 = vmatpush1.msra.mxu0 0.0
        %2276 = vmatprep.subr.mxu0 0.0
        %2277 = vmatpush1.msra.mxu0 0.0
        %2278 = vmatprep.subr.mxu0 0.0
        %2279 = vmatpush1.msra.mxu0 0.0
        %2280 = vmatprep.subr.mxu0 0.0
        %2281 = vmatpush1.msra.mxu0 0.0
        %2282 = vmatprep.mubr.f32.mxu0 0.0
        %v2283 = vand.u32 %v1700, 4294901760
        %2284 = vmatmul.mubr.f32.gmra.mrb[0].mxu0 %v2283
        %v2285 = vpop.f32.mrb[0].mxu0
        %v2286 = vadd.f32 %v2199, %v2285
        %v2287 = vpop.f32.mrb[0].mxu0
        %v2288 = vadd.f32 %v2201, %v2287
        %2289 = vmatprep.mubr.f32.mxu0 0.0
        %v2290 = vand.u32 %v1703, 4294901760
        %2291 = vmatmul.mubr.f32.gmra.mrb[0].mxu0 %v2290
        %v2292 = vpop.f32.mrb[0].mxu0
        %v2293 = vadd.f32 %v2206, %v2292
        %v2294 = vpop.f32.mrb[0].mxu0
        %v2295 = vadd.f32 %v2208, %v2294
        %2296 = vdwg.mxu0
        %v2297 = vand.u32 %v1671, 4294901760
        %2298 = vmatprep.subr.mxu0 %v2297
        %v2299 = vand.u32 %v1670, 4294901760
        %2300 = vmatpush1.msra.mxu0 %v2299
        %v2301 = vand.u32 %v1675, 4294901760
        %2302 = vmatprep.subr.mxu0 %v2301
        %v2303 = vand.u32 %v1674, 4294901760
        %2304 = vmatpush1.msra.mxu0 %v2303
        %v2305 = vand.u32 %v1679, 4294901760
        %2306 = vmatprep.subr.mxu0 %v2305
        %v2307 = vand.u32 %v1678, 4294901760
        %2308 = vmatpush1.msra.mxu0 %v2307
        %v2309 = vand.u32 %v1683, 4294901760
        %2310 = vmatprep.subr.mxu0 %v2309
        %v2311 = vand.u32 %v1682, 4294901760
        %2312 = vmatpush1.msra.mxu0 %v2311
        %2313 = vmatprep.subr.mxu0 0.0
        %2314 = vmatpush1.msra.mxu0 0.0
        %2315 = vmatprep.subr.mxu0 0.0
        %2316 = vmatpush1.msra.mxu0 0.0
        %2317 = vmatprep.subr.mxu0 0.0
        %2318 = vmatpush1.msra.mxu0 0.0
        %2319 = vmatprep.subr.mxu0 0.0
        %2320 = vmatpush1.msra.mxu0 0.0
        %2321 = vmatprep.subr.mxu0 0.0
        %2322 = vmatpush1.msra.mxu0 0.0
        %2323 = vmatprep.subr.mxu0 0.0
        %2324 = vmatpush1.msra.mxu0 0.0
        %2325 = vmatprep.subr.mxu0 0.0
        %2326 = vmatpush1.msra.mxu0 0.0
        %2327 = vmatprep.subr.mxu0 0.0
        %2328 = vmatpush1.msra.mxu0 0.0
        %2329 = vmatprep.subr.mxu0 0.0
        %2330 = vmatpush1.msra.mxu0 0.0
        %2331 = vmatprep.subr.mxu0 0.0
        %2332 = vmatpush1.msra.mxu0 0.0
        %2333 = vmatprep.subr.mxu0 0.0
        %2334 = vmatpush1.msra.mxu0 0.0
        %2335 = vmatprep.subr.mxu0 0.0
        %2336 = vmatpush1.msra.mxu0 0.0
        %2337 = vmatprep.subr.mxu0 0.0
        %2338 = vmatpush1.msra.mxu0 0.0
        %2339 = vmatprep.subr.mxu0 0.0
        %2340 = vmatpush1.msra.mxu0 0.0
        %2341 = vmatprep.subr.mxu0 0.0
        %2342 = vmatpush1.msra.mxu0 0.0
        %2343 = vmatprep.subr.mxu0 0.0
        %2344 = vmatpush1.msra.mxu0 0.0
        %2345 = vmatprep.subr.mxu0 0.0
        %2346 = vmatpush1.msra.mxu0 0.0
        %2347 = vmatprep.subr.mxu0 0.0
        %2348 = vmatpush1.msra.mxu0 0.0
        %2349 = vmatprep.subr.mxu0 0.0
        %2350 = vmatpush1.msra.mxu0 0.0
        %2351 = vmatprep.subr.mxu0 0.0
        %2352 = vmatpush1.msra.mxu0 0.0
        %2353 = vmatprep.subr.mxu0 0.0
        %2354 = vmatpush1.msra.mxu0 0.0
        %2355 = vmatprep.subr.mxu0 0.0
        %2356 = vmatpush1.msra.mxu0 0.0
        %2357 = vmatprep.subr.mxu0 0.0
        %2358 = vmatpush1.msra.mxu0 0.0
        %2359 = vmatprep.subr.mxu0 0.0
        %2360 = vmatpush1.msra.mxu0 0.0
        %2361 = vmatprep.subr.mxu0 0.0
        %2362 = vmatpush1.msra.mxu0 0.0
        %2363 = vmatprep.subr.mxu0 0.0
        %2364 = vmatpush1.msra.mxu0 0.0
        %2365 = vmatprep.subr.mxu0 0.0
        %2366 = vmatpush1.msra.mxu0 0.0
        %2367 = vmatprep.subr.mxu0 0.0
        %2368 = vmatpush1.msra.mxu0 0.0
        %2369 = vmatprep.mubr.f32.mxu0 0.0
        %v2370 = vand.u32 %v1700, 4294901760
        %v2371 = vsub.f32 %v1700, %v2370
        %v2372 = vand.u32 %v2371, 4294901760
        %v2373 = vsub.f32 %v2371, %v2372
        %v2374 = vand.u32 %v2373, 4294901760
        %2375 = vmatmul.mubr.f32.gmra.mrb[0].mxu0 %v2374
        %v2376 = vpop.f32.mrb[0].mxu0
        %v2377 = vadd.f32 %v1691, %v2376
        %v2378 = vpop.f32.mrb[0].mxu0
        %v2379 = vadd.f32 %v1691, %v2378
        %2380 = vmatprep.mubr.f32.mxu0 0.0
        %v2381 = vand.u32 %v1703, 4294901760
        %v2382 = vsub.f32 %v1703, %v2381
        %v2383 = vand.u32 %v2382, 4294901760
        %v2384 = vsub.f32 %v2382, %v2383
        %v2385 = vand.u32 %v2384, 4294901760
        %2386 = vmatmul.mubr.f32.gmra.mrb[0].mxu0 %v2385
        %v2387 = vpop.f32.mrb[0].mxu0
        %v2388 = vadd.f32 %v1696, %v2387
        %v2389 = vpop.f32.mrb[0].mxu0
        %v2390 = vadd.f32 %v1696, %v2389
        %2391 = vdwg.mxu0
        %v2392 = vand.u32 %v1671, 4294901760
        %v2393 = vsub.f32 %v1671, %v2392
        %v2394 = vand.u32 %v2393, 4294901760
        %v2395 = vsub.f32 %v2393, %v2394
        %v2396 = vand.u32 %v2395, 4294901760
        %2397 = vmatprep.subr.mxu0 %v2396
        %v2398 = vand.u32 %v1670, 4294901760
        %v2399 = vsub.f32 %v1670, %v2398
        %v2400 = vand.u32 %v2399, 4294901760
        %v2401 = vsub.f32 %v2399, %v2400
        %v2402 = vand.u32 %v2401, 4294901760
        %2403 = vmatpush1.msra.mxu0 %v2402
        %v2404 = vand.u32 %v1675, 4294901760
        %v2405 = vsub.f32 %v1675, %v2404
        %v2406 = vand.u32 %v2405, 4294901760
        %v2407 = vsub.f32 %v2405, %v2406
        %v2408 = vand.u32 %v2407, 4294901760
        %2409 = vmatprep.subr.mxu0 %v2408
        %v2410 = vand.u32 %v1674, 4294901760
        %v2411 = vsub.f32 %v1674, %v2410
        %v2412 = vand.u32 %v2411, 4294901760
        %v2413 = vsub.f32 %v2411, %v2412
        %v2414 = vand.u32 %v2413, 4294901760
        %2415 = vmatpush1.msra.mxu0 %v2414
        %v2416 = vand.u32 %v1679, 4294901760
        %v2417 = vsub.f32 %v1679, %v2416
        %v2418 = vand.u32 %v2417, 4294901760
        %v2419 = vsub.f32 %v2417, %v2418
        %v2420 = vand.u32 %v2419, 4294901760
        %2421 = vmatprep.subr.mxu0 %v2420
        %v2422 = vand.u32 %v1678, 4294901760
        %v2423 = vsub.f32 %v1678, %v2422
        %v2424 = vand.u32 %v2423, 4294901760
        %v2425 = vsub.f32 %v2423, %v2424
        %v2426 = vand.u32 %v2425, 4294901760
        %2427 = vmatpush1.msra.mxu0 %v2426
        %v2428 = vand.u32 %v1683, 4294901760
        %v2429 = vsub.f32 %v1683, %v2428
        %v2430 = vand.u32 %v2429, 4294901760
        %v2431 = vsub.f32 %v2429, %v2430
        %v2432 = vand.u32 %v2431, 4294901760
        %2433 = vmatprep.subr.mxu0 %v2432
        %v2434 = vand.u32 %v1682, 4294901760
        %v2435 = vsub.f32 %v1682, %v2434
        %v2436 = vand.u32 %v2435, 4294901760
        %v2437 = vsub.f32 %v2435, %v2436
        %v2438 = vand.u32 %v2437, 4294901760
        %2439 = vmatpush1.msra.mxu0 %v2438
        %2440 = vmatprep.subr.mxu0 0.0
        %2441 = vmatpush1.msra.mxu0 0.0
        %2442 = vmatprep.subr.mxu0 0.0
        %2443 = vmatpush1.msra.mxu0 0.0
        %2444 = vmatprep.subr.mxu0 0.0
        %2445 = vmatpush1.msra.mxu0 0.0
        %2446 = vmatprep.subr.mxu0 0.0
        %2447 = vmatpush1.msra.mxu0 0.0
        %2448 = vmatprep.subr.mxu0 0.0
        %2449 = vmatpush1.msra.mxu0 0.0
        %2450 = vmatprep.subr.mxu0 0.0
        %2451 = vmatpush1.msra.mxu0 0.0
        %2452 = vmatprep.subr.mxu0 0.0
        %2453 = vmatpush1.msra.mxu0 0.0
        %2454 = vmatprep.subr.mxu0 0.0
        %2455 = vmatpush1.msra.mxu0 0.0
        %2456 = vmatprep.subr.mxu0 0.0
        %2457 = vmatpush1.msra.mxu0 0.0
        %2458 = vmatprep.subr.mxu0 0.0
        %2459 = vmatpush1.msra.mxu0 0.0
        %2460 = vmatprep.subr.mxu0 0.0
        %2461 = vmatpush1.msra.mxu0 0.0
        %2462 = vmatprep.subr.mxu0 0.0
        %2463 = vmatpush1.msra.mxu0 0.0
        %2464 = vmatprep.subr.mxu0 0.0
        %2465 = vmatpush1.msra.mxu0 0.0
        %2466 = vmatprep.subr.mxu0 0.0
        %2467 = vmatpush1.msra.mxu0 0.0
        %2468 = vmatprep.subr.mxu0 0.0
        %2469 = vmatpush1.msra.mxu0 0.0
        %2470 = vmatprep.subr.mxu0 0.0
        %2471 = vmatpush1.msra.mxu0 0.0
        %2472 = vmatprep.subr.mxu0 0.0
        %2473 = vmatpush1.msra.mxu0 0.0
        %2474 = vmatprep.subr.mxu0 0.0
        %2475 = vmatpush1.msra.mxu0 0.0
        %2476 = vmatprep.subr.mxu0 0.0
        %2477 = vmatpush1.msra.mxu0 0.0
        %2478 = vmatprep.subr.mxu0 0.0
        %2479 = vmatpush1.msra.mxu0 0.0
        %2480 = vmatprep.subr.mxu0 0.0
        %2481 = vmatpush1.msra.mxu0 0.0
        %2482 = vmatprep.subr.mxu0 0.0
        %2483 = vmatpush1.msra.mxu0 0.0
        %2484 = vmatprep.subr.mxu0 0.0
        %2485 = vmatpush1.msra.mxu0 0.0
        %2486 = vmatprep.subr.mxu0 0.0
        %2487 = vmatpush1.msra.mxu0 0.0
        %2488 = vmatprep.subr.mxu0 0.0
        %2489 = vmatpush1.msra.mxu0 0.0
        %2490 = vmatprep.subr.mxu0 0.0
        %2491 = vmatpush1.msra.mxu0 0.0
        %2492 = vmatprep.subr.mxu0 0.0
        %2493 = vmatpush1.msra.mxu0 0.0
        %2494 = vmatprep.subr.mxu0 0.0
        %2495 = vmatpush1.msra.mxu0 0.0
        %2496 = vmatprep.mubr.f32.mxu0 0.0
        %v2497 = vand.u32 %v1700, 4294901760
        %2498 = vmatmul.mubr.f32.gmra.mrb[0].mxu0 %v2497
        %v2499 = vpop.f32.mrb[0].mxu0
        %v2500 = vadd.f32 %v2377, %v2499
        %v2501 = vpop.f32.mrb[0].mxu0
        %v2502 = vadd.f32 %v2379, %v2501
        %2503 = vmatprep.mubr.f32.mxu0 0.0
        %v2504 = vand.u32 %v1703, 4294901760
        %2505 = vmatmul.mubr.f32.gmra.mrb[0].mxu0 %v2504
        %v2506 = vpop.f32.mrb[0].mxu0
        %v2507 = vadd.f32 %v2388, %v2506
        %v2508 = vpop.f32.mrb[0].mxu0
        %v2509 = vadd.f32 %v2390, %v2508
        %2510 = vdwg.mxu0
        %v2511 = vand.u32 %v1671, 4294901760
        %v2512 = vsub.f32 %v1671, %v2511
        %2513 = vmatprep.subr.mxu0 %v2512
        %v2514 = vand.u32 %v1670, 4294901760
        %v2515 = vsub.f32 %v1670, %v2514
        %2516 = vmatpush1.msra.mxu0 %v2515
        %v2517 = vand.u32 %v1675, 4294901760
        %v2518 = vsub.f32 %v1675, %v2517
        %2519 = vmatprep.subr.mxu0 %v2518
        %v2520 = vand.u32 %v1674, 4294901760
        %v2521 = vsub.f32 %v1674, %v2520
        %2522 = vmatpush1.msra.mxu0 %v2521
        %v2523 = vand.u32 %v1679, 4294901760
        %v2524 = vsub.f32 %v1679, %v2523
        %2525 = vmatprep.subr.mxu0 %v2524
        %v2526 = vand.u32 %v1678, 4294901760
        %v2527 = vsub.f32 %v1678, %v2526
        %2528 = vmatpush1.msra.mxu0 %v2527
        %v2529 = vand.u32 %v1683, 4294901760
        %v2530 = vsub.f32 %v1683, %v2529
        %2531 = vmatprep.subr.mxu0 %v2530
        %v2532 = vand.u32 %v1682, 4294901760
        %v2533 = vsub.f32 %v1682, %v2532
        %2534 = vmatpush1.msra.mxu0 %v2533
        %2535 = vmatprep.subr.mxu0 0.0
        %2536 = vmatpush1.msra.mxu0 0.0
        %2537 = vmatprep.subr.mxu0 0.0
        %2538 = vmatpush1.msra.mxu0 0.0
        %2539 = vmatprep.subr.mxu0 0.0
        %2540 = vmatpush1.msra.mxu0 0.0
        %2541 = vmatprep.subr.mxu0 0.0
        %2542 = vmatpush1.msra.mxu0 0.0
        %2543 = vmatprep.subr.mxu0 0.0
        %2544 = vmatpush1.msra.mxu0 0.0
        %2545 = vmatprep.subr.mxu0 0.0
        %2546 = vmatpush1.msra.mxu0 0.0
        %2547 = vmatprep.subr.mxu0 0.0
        %2548 = vmatpush1.msra.mxu0 0.0
        %2549 = vmatprep.subr.mxu0 0.0
        %2550 = vmatpush1.msra.mxu0 0.0
        %2551 = vmatprep.subr.mxu0 0.0
        %2552 = vmatpush1.msra.mxu0 0.0
        %2553 = vmatprep.subr.mxu0 0.0
        %2554 = vmatpush1.msra.mxu0 0.0
        %2555 = vmatprep.subr.mxu0 0.0
        %2556 = vmatpush1.msra.mxu0 0.0
        %2557 = vmatprep.subr.mxu0 0.0
        %2558 = vmatpush1.msra.mxu0 0.0
        %2559 = vmatprep.subr.mxu0 0.0
        %2560 = vmatpush1.msra.mxu0 0.0
        %2561 = vmatprep.subr.mxu0 0.0
        %2562 = vmatpush1.msra.mxu0 0.0
        %2563 = vmatprep.subr.mxu0 0.0
        %2564 = vmatpush1.msra.mxu0 0.0
        %2565 = vmatprep.subr.mxu0 0.0
        %2566 = vmatpush1.msra.mxu0 0.0
        %2567 = vmatprep.subr.mxu0 0.0
        %2568 = vmatpush1.msra.mxu0 0.0
        %2569 = vmatprep.subr.mxu0 0.0
        %2570 = vmatpush1.msra.mxu0 0.0
        %2571 = vmatprep.subr.mxu0 0.0
        %2572 = vmatpush1.msra.mxu0 0.0
        %2573 = vmatprep.subr.mxu0 0.0
        %2574 = vmatpush1.msra.mxu0 0.0
        %2575 = vmatprep.subr.mxu0 0.0
        %2576 = vmatpush1.msra.mxu0 0.0
        %2577 = vmatprep.subr.mxu0 0.0
        %2578 = vmatpush1.msra.mxu0 0.0
        %2579 = vmatprep.subr.mxu0 0.0
        %2580 = vmatpush1.msra.mxu0 0.0
        %2581 = vmatprep.subr.mxu0 0.0
        %2582 = vmatpush1.msra.mxu0 0.0
        %2583 = vmatprep.subr.mxu0 0.0
        %2584 = vmatpush1.msra.mxu0 0.0
        %2585 = vmatprep.subr.mxu0 0.0
        %2586 = vmatpush1.msra.mxu0 0.0
        %2587 = vmatprep.subr.mxu0 0.0
        %2588 = vmatpush1.msra.mxu0 0.0
        %2589 = vmatprep.subr.mxu0 0.0
        %2590 = vmatpush1.msra.mxu0 0.0
        %2591 = vmatprep.mubr.f32.mxu0 0.0
        %v2592 = vand.u32 %v1700, 4294901760
        %v2593 = vsub.f32 %v1700, %v2592
        %2594 = vmatmul.mubr.f32.gmra.mrb[0].mxu0 %v2593
        %v2595 = vpop.f32.mrb[0].mxu0
        %v2596 = vadd.f32 %v2500, %v2595
        %v2597 = vpop.f32.mrb[0].mxu0
        %v2598 = vadd.f32 %v2502, %v2597
        %2599 = vmatprep.mubr.f32.mxu0 0.0
        %v2600 = vand.u32 %v1703, 4294901760
        %v2601 = vsub.f32 %v1703, %v2600
        %2602 = vmatmul.mubr.f32.gmra.mrb[0].mxu0 %v2601
        %v2603 = vpop.f32.mrb[0].mxu0
        %v2604 = vadd.f32 %v2507, %v2603
        %v2605 = vpop.f32.mrb[0].mxu0
        %v2606 = vadd.f32 %v2509, %v2605
        %2607 = vdwg.mxu0
        %v2608 = vand.u32 %v1671, 4294901760
        %2609 = vmatprep.subr.mxu0 %v2608
        %v2610 = vand.u32 %v1670, 4294901760
        %2611 = vmatpush1.msra.mxu0 %v2610
        %v2612 = vand.u32 %v1675, 4294901760
        %2613 = vmatprep.subr.mxu0 %v2612
        %v2614 = vand.u32 %v1674, 4294901760
        %2615 = vmatpush1.msra.mxu0 %v2614
        %v2616 = vand.u32 %v1679, 4294901760
        %2617 = vmatprep.subr.mxu0 %v2616
        %v2618 = vand.u32 %v1678, 4294901760
        %2619 = vmatpush1.msra.mxu0 %v2618
        %v2620 = vand.u32 %v1683, 4294901760
        %2621 = vmatprep.subr.mxu0 %v2620
        %v2622 = vand.u32 %v1682, 4294901760
        %2623 = vmatpush1.msra.mxu0 %v2622
        %2624 = vmatprep.subr.mxu0 0.0
        %2625 = vmatpush1.msra.mxu0 0.0
        %2626 = vmatprep.subr.mxu0 0.0
        %2627 = vmatpush1.msra.mxu0 0.0
        %2628 = vmatprep.subr.mxu0 0.0
        %2629 = vmatpush1.msra.mxu0 0.0
        %2630 = vmatprep.subr.mxu0 0.0
        %2631 = vmatpush1.msra.mxu0 0.0
        %2632 = vmatprep.subr.mxu0 0.0
        %2633 = vmatpush1.msra.mxu0 0.0
        %2634 = vmatprep.subr.mxu0 0.0
        %2635 = vmatpush1.msra.mxu0 0.0
        %2636 = vmatprep.subr.mxu0 0.0
        %2637 = vmatpush1.msra.mxu0 0.0
        %2638 = vmatprep.subr.mxu0 0.0
        %2639 = vmatpush1.msra.mxu0 0.0
        %2640 = vmatprep.subr.mxu0 0.0
        %2641 = vmatpush1.msra.mxu0 0.0
        %2642 = vmatprep.subr.mxu0 0.0
        %2643 = vmatpush1.msra.mxu0 0.0
        %2644 = vmatprep.subr.mxu0 0.0
        %2645 = vmatpush1.msra.mxu0 0.0
        %2646 = vmatprep.subr.mxu0 0.0
        %2647 = vmatpush1.msra.mxu0 0.0
        %2648 = vmatprep.subr.mxu0 0.0
        %2649 = vmatpush1.msra.mxu0 0.0
        %2650 = vmatprep.subr.mxu0 0.0
        %2651 = vmatpush1.msra.mxu0 0.0
        %2652 = vmatprep.subr.mxu0 0.0
        %2653 = vmatpush1.msra.mxu0 0.0
        %2654 = vmatprep.subr.mxu0 0.0
        %2655 = vmatpush1.msra.mxu0 0.0
        %2656 = vmatprep.subr.mxu0 0.0
        %2657 = vmatpush1.msra.mxu0 0.0
        %2658 = vmatprep.subr.mxu0 0.0
        %2659 = vmatpush1.msra.mxu0 0.0
        %2660 = vmatprep.subr.mxu0 0.0
        %2661 = vmatpush1.msra.mxu0 0.0
        %2662 = vmatprep.subr.mxu0 0.0
        %2663 = vmatpush1.msra.mxu0 0.0
        %2664 = vmatprep.subr.mxu0 0.0
        %2665 = vmatpush1.msra.mxu0 0.0
        %2666 = vmatprep.subr.mxu0 0.0
        %2667 = vmatpush1.msra.mxu0 0.0
        %2668 = vmatprep.subr.mxu0 0.0
        %2669 = vmatpush1.msra.mxu0 0.0
        %2670 = vmatprep.subr.mxu0 0.0
        %2671 = vmatpush1.msra.mxu0 0.0
        %2672 = vmatprep.subr.mxu0 0.0
        %2673 = vmatpush1.msra.mxu0 0.0
        %2674 = vmatprep.subr.mxu0 0.0
        %2675 = vmatpush1.msra.mxu0 0.0
        %2676 = vmatprep.subr.mxu0 0.0
        %2677 = vmatpush1.msra.mxu0 0.0
        %2678 = vmatprep.subr.mxu0 0.0
        %2679 = vmatpush1.msra.mxu0 0.0
        %2680 = vmatprep.mubr.f32.mxu0 0.0
        %v2681 = vand.u32 %v1700, 4294901760
        %v2682 = vsub.f32 %v1700, %v2681
        %v2683 = vand.u32 %v2682, 4294901760
        %2684 = vmatmul.mubr.f32.gmra.mrb[0].mxu0 %v2683
        %v2685 = vpop.f32.mrb[0].mxu0
        %v2686 = vadd.f32 %v2596, %v2685
        %v2687 = vpop.f32.mrb[0].mxu0
        %v2688 = vadd.f32 %v2598, %v2687
        %2689 = vmatprep.mubr.f32.mxu0 0.0
        %v2690 = vand.u32 %v1703, 4294901760
        %v2691 = vsub.f32 %v1703, %v2690
        %v2692 = vand.u32 %v2691, 4294901760
        %2693 = vmatmul.mubr.f32.gmra.mrb[0].mxu0 %v2692
        %v2694 = vpop.f32.mrb[0].mxu0
        %v2695 = vadd.f32 %v2604, %v2694
        %v2696 = vpop.f32.mrb[0].mxu0
        %v2697 = vadd.f32 %v2606, %v2696
        %2698 = vdwg.mxu0
        %v2699 = vand.u32 %v1671, 4294901760
        %v2700 = vsub.f32 %v1671, %v2699
        %v2701 = vand.u32 %v2700, 4294901760
        %2702 = vmatprep.subr.mxu0 %v2701
        %v2703 = vand.u32 %v1670, 4294901760
        %v2704 = vsub.f32 %v1670, %v2703
        %v2705 = vand.u32 %v2704, 4294901760
        %2706 = vmatpush1.msra.mxu0 %v2705
        %v2707 = vand.u32 %v1675, 4294901760
        %v2708 = vsub.f32 %v1675, %v2707
        %v2709 = vand.u32 %v2708, 4294901760
        %2710 = vmatprep.subr.mxu0 %v2709
        %v2711 = vand.u32 %v1674, 4294901760
        %v2712 = vsub.f32 %v1674, %v2711
        %v2713 = vand.u32 %v2712, 4294901760
        %2714 = vmatpush1.msra.mxu0 %v2713
        %v2715 = vand.u32 %v1679, 4294901760
        %v2716 = vsub.f32 %v1679, %v2715
        %v2717 = vand.u32 %v2716, 4294901760
        %2718 = vmatprep.subr.mxu0 %v2717
        %v2719 = vand.u32 %v1678, 4294901760
        %v2720 = vsub.f32 %v1678, %v2719
        %v2721 = vand.u32 %v2720, 4294901760
        %2722 = vmatpush1.msra.mxu0 %v2721
        %v2723 = vand.u32 %v1683, 4294901760
        %v2724 = vsub.f32 %v1683, %v2723
        %v2725 = vand.u32 %v2724, 4294901760
        %2726 = vmatprep.subr.mxu0 %v2725
        %v2727 = vand.u32 %v1682, 4294901760
        %v2728 = vsub.f32 %v1682, %v2727
        %v2729 = vand.u32 %v2728, 4294901760
        %2730 = vmatpush1.msra.mxu0 %v2729
        %2731 = vmatprep.subr.mxu0 0.0
        %2732 = vmatpush1.msra.mxu0 0.0
        %2733 = vmatprep.subr.mxu0 0.0
        %2734 = vmatpush1.msra.mxu0 0.0
        %2735 = vmatprep.subr.mxu0 0.0
        %2736 = vmatpush1.msra.mxu0 0.0
        %2737 = vmatprep.subr.mxu0 0.0
        %2738 = vmatpush1.msra.mxu0 0.0
        %2739 = vmatprep.subr.mxu0 0.0
        %2740 = vmatpush1.msra.mxu0 0.0
        %2741 = vmatprep.subr.mxu0 0.0
        %2742 = vmatpush1.msra.mxu0 0.0
        %2743 = vmatprep.subr.mxu0 0.0
        %2744 = vmatpush1.msra.mxu0 0.0
        %2745 = vmatprep.subr.mxu0 0.0
        %2746 = vmatpush1.msra.mxu0 0.0
        %2747 = vmatprep.subr.mxu0 0.0
        %2748 = vmatpush1.msra.mxu0 0.0
        %2749 = vmatprep.subr.mxu0 0.0
        %2750 = vmatpush1.msra.mxu0 0.0
        %2751 = vmatprep.subr.mxu0 0.0
        %2752 = vmatpush1.msra.mxu0 0.0
        %2753 = vmatprep.subr.mxu0 0.0
        %2754 = vmatpush1.msra.mxu0 0.0
        %2755 = vmatprep.subr.mxu0 0.0
        %2756 = vmatpush1.msra.mxu0 0.0
        %2757 = vmatprep.subr.mxu0 0.0
        %2758 = vmatpush1.msra.mxu0 0.0
        %2759 = vmatprep.subr.mxu0 0.0
        %2760 = vmatpush1.msra.mxu0 0.0
        %2761 = vmatprep.subr.mxu0 0.0
        %2762 = vmatpush1.msra.mxu0 0.0
        %2763 = vmatprep.subr.mxu0 0.0
        %2764 = vmatpush1.msra.mxu0 0.0
        %2765 = vmatprep.subr.mxu0 0.0
        %2766 = vmatpush1.msra.mxu0 0.0
        %2767 = vmatprep.subr.mxu0 0.0
        %2768 = vmatpush1.msra.mxu0 0.0
        %2769 = vmatprep.subr.mxu0 0.0
        %2770 = vmatpush1.msra.mxu0 0.0
        %2771 = vmatprep.subr.mxu0 0.0
        %2772 = vmatpush1.msra.mxu0 0.0
        %2773 = vmatprep.subr.mxu0 0.0
        %2774 = vmatpush1.msra.mxu0 0.0
        %2775 = vmatprep.subr.mxu0 0.0
        %2776 = vmatpush1.msra.mxu0 0.0
        %2777 = vmatprep.subr.mxu0 0.0
        %2778 = vmatpush1.msra.mxu0 0.0
        %2779 = vmatprep.subr.mxu0 0.0
        %2780 = vmatpush1.msra.mxu0 0.0
        %2781 = vmatprep.subr.mxu0 0.0
        %2782 = vmatpush1.msra.mxu0 0.0
        %2783 = vmatprep.subr.mxu0 0.0
        %2784 = vmatpush1.msra.mxu0 0.0
        %2785 = vmatprep.subr.mxu0 0.0
        %2786 = vmatpush1.msra.mxu0 0.0
        %2787 = vmatprep.mubr.f32.mxu0 0.0
        %v2788 = vand.u32 %v1700, 4294901760
        %2789 = vmatmul.mubr.f32.gmra.mrb[0].mxu0 %v2788
        %v2790 = vpop.f32.mrb[0].mxu0
        %v2791 = vadd.f32 %v2686, %v2790
        %v2792 = vpop.f32.mrb[0].mxu0
        %v2793 = vadd.f32 %v2688, %v2792
        %2794 = vmatprep.mubr.f32.mxu0 0.0
        %v2795 = vand.u32 %v1703, 4294901760
        %2796 = vmatmul.mubr.f32.gmra.mrb[0].mxu0 %v2795
        %v2797 = vpop.f32.mrb[0].mxu0
        %v2798 = vadd.f32 %v2695, %v2797
        %v2799 = vpop.f32.mrb[0].mxu0
        %v2800 = vadd.f32 %v2697, %v2799
        %2801 = vdwg.mxu0
        %v2802 = vand.u32 %v1671, 4294901760
        %2803 = vmatprep.subr.mxu0 %v2802
        %v2804 = vand.u32 %v1670, 4294901760
        %2805 = vmatpush1.msra.mxu0 %v2804
        %v2806 = vand.u32 %v1675, 4294901760
        %2807 = vmatprep.subr.mxu0 %v2806
        %v2808 = vand.u32 %v1674, 4294901760
        %2809 = vmatpush1.msra.mxu0 %v2808
        %v2810 = vand.u32 %v1679, 4294901760
        %2811 = vmatprep.subr.mxu0 %v2810
        %v2812 = vand.u32 %v1678, 4294901760
        %2813 = vmatpush1.msra.mxu0 %v2812
        %v2814 = vand.u32 %v1683, 4294901760
        %2815 = vmatprep.subr.mxu0 %v2814
        %v2816 = vand.u32 %v1682, 4294901760
        %2817 = vmatpush1.msra.mxu0 %v2816
        %2818 = vmatprep.subr.mxu0 0.0
        %2819 = vmatpush1.msra.mxu0 0.0
        %2820 = vmatprep.subr.mxu0 0.0
        %2821 = vmatpush1.msra.mxu0 0.0
        %2822 = vmatprep.subr.mxu0 0.0
        %2823 = vmatpush1.msra.mxu0 0.0
        %2824 = vmatprep.subr.mxu0 0.0
        %2825 = vmatpush1.msra.mxu0 0.0
        %2826 = vmatprep.subr.mxu0 0.0
        %2827 = vmatpush1.msra.mxu0 0.0
        %2828 = vmatprep.subr.mxu0 0.0
        %2829 = vmatpush1.msra.mxu0 0.0
        %2830 = vmatprep.subr.mxu0 0.0
        %2831 = vmatpush1.msra.mxu0 0.0
        %2832 = vmatprep.subr.mxu0 0.0
        %2833 = vmatpush1.msra.mxu0 0.0
        %2834 = vmatprep.subr.mxu0 0.0
        %2835 = vmatpush1.msra.mxu0 0.0
        %2836 = vmatprep.subr.mxu0 0.0
        %2837 = vmatpush1.msra.mxu0 0.0
        %2838 = vmatprep.subr.mxu0 0.0
        %2839 = vmatpush1.msra.mxu0 0.0
        %2840 = vmatprep.subr.mxu0 0.0
        %2841 = vmatpush1.msra.mxu0 0.0
        %2842 = vmatprep.subr.mxu0 0.0
        %2843 = vmatpush1.msra.mxu0 0.0
        %2844 = vmatprep.subr.mxu0 0.0
        %2845 = vmatpush1.msra.mxu0 0.0
        %2846 = vmatprep.subr.mxu0 0.0
        %2847 = vmatpush1.msra.mxu0 0.0
        %2848 = vmatprep.subr.mxu0 0.0
        %2849 = vmatpush1.msra.mxu0 0.0
        %2850 = vmatprep.subr.mxu0 0.0
        %2851 = vmatpush1.msra.mxu0 0.0
        %2852 = vmatprep.subr.mxu0 0.0
        %2853 = vmatpush1.msra.mxu0 0.0
        %2854 = vmatprep.subr.mxu0 0.0
        %2855 = vmatpush1.msra.mxu0 0.0
        %2856 = vmatprep.subr.mxu0 0.0
        %2857 = vmatpush1.msra.mxu0 0.0
        %2858 = vmatprep.subr.mxu0 0.0
        %2859 = vmatpush1.msra.mxu0 0.0
        %2860 = vmatprep.subr.mxu0 0.0
        %2861 = vmatpush1.msra.mxu0 0.0
        %2862 = vmatprep.subr.mxu0 0.0
        %2863 = vmatpush1.msra.mxu0 0.0
        %2864 = vmatprep.subr.mxu0 0.0
        %2865 = vmatpush1.msra.mxu0 0.0
        %2866 = vmatprep.subr.mxu0 0.0
        %2867 = vmatpush1.msra.mxu0 0.0
        %2868 = vmatprep.subr.mxu0 0.0
        %2869 = vmatpush1.msra.mxu0 0.0
        %2870 = vmatprep.subr.mxu0 0.0
        %2871 = vmatpush1.msra.mxu0 0.0
        %2872 = vmatprep.subr.mxu0 0.0
        %2873 = vmatpush1.msra.mxu0 0.0
        %2874 = vmatprep.mubr.f32.mxu0 0.0
        %v2875 = vand.u32 %v1700, 4294901760
        %2876 = vmatmul.mubr.f32.gmra.mrb[0].mxu0 %v2875
        %v2877 = vpop.f32.mrb[0].mxu0
        %v2878 = vadd.f32 %v2791, %v2877
        %v2879 = vpop.f32.mrb[0].mxu0
        %v2880 = vadd.f32 %v2793, %v2879
        %2881 = vmatprep.mubr.f32.mxu0 0.0
        %v2882 = vand.u32 %v1703, 4294901760
        %2883 = vmatmul.mubr.f32.gmra.mrb[0].mxu0 %v2882
        %v2884 = vpop.f32.mrb[0].mxu0
        %v2885 = vadd.f32 %v2798, %v2884
        %v2886 = vpop.f32.mrb[0].mxu0
        %v2887 = vadd.f32 %v2800, %v2886
        %2888 = vdwg.mxu0
        %v2889 = vmax.f32 %v2286, 0.0
        %v2890 = vmax.f32 %v2288, 0.0
        %v2891 = vmax.f32 %v2878, 0.0
        %v2892 = vmax.f32 %v2880, 0.0
        %v2893 = vmax.f32 %v2293, 0.0
        %v2894 = vmax.f32 %v2295, 0.0
        %v2895 = vmax.f32 %v2885, 0.0
        %v2896 = vmax.f32 %v2887, 0.0
        %v2897 = vand.u32 2147483647, %v2286
        %v2898 = vand.u32 2147483647, %v2288
        %v2899 = vand.u32 2147483647, %v2878
        %v2900 = vand.u32 2147483647, %v2880
        %v2901 = vand.u32 2147483647, %v2293
        %v2902 = vand.u32 2147483647, %v2295
        %v2903 = vand.u32 2147483647, %v2885
        %v2904 = vand.u32 2147483647, %v2887
        %v2905 = vsub.f32 0.0, %v2897
        %v2906 = vsub.f32 0.0, %v2898
        %v2907 = vsub.f32 0.0, %v2899
        %v2908 = vsub.f32 0.0, %v2900
        %v2909 = vsub.f32 0.0, %v2901
        %v2910 = vsub.f32 0.0, %v2902
        %v2911 = vsub.f32 0.0, %v2903
        %v2912 = vsub.f32 0.0, %v2904
        %v2913 = vmul.f32 %v2905, 1.442695
        %v2914 = vpow.pop %v2913
        %v2915 = vmul.f32 %v2906, 1.442695
        %v2916 = vpow.pop %v2915
        %v2917 = vmul.f32 %v2907, 1.442695
        %v2918 = vpow.pop %v2917
        %v2919 = vmul.f32 %v2908, 1.442695
        %v2920 = vpow.pop %v2919
        %v2921 = vmul.f32 %v2909, 1.442695
        %v2922 = vpow.pop %v2921
        %v2923 = vmul.f32 %v2910, 1.442695
        %v2924 = vpow.pop %v2923
        %v2925 = vmul.f32 %v2911, 1.442695
        %v2926 = vpow.pop %v2925
        %v2927 = vmul.f32 %v2912, 1.442695
        %v2928 = vpow.pop %v2927
        %v2929 = vadd.f32 %v2914, 1.0
        %v2930 = vlog2.pop %v2929
        %v2931 = vmul.f32 %v2930, 0.6931472
        %v2932 = vmul.f32 -0.5, %v2914
        %v2933 = vadd.f32 %v2932, 1.0
        %v2934 = vmul.f32 %v2933, %v2914
        %v2935 = vand.u32 2147483647, %v2914
        %vm2936 = vcmp.lt.f32.partialorder %v2935, 0.0004427343
        %v2937 = vsel %vm2936, %v2934, %v2931
        %v2938 = vadd.f32 %v2916, 1.0
        %v2939 = vlog2.pop %v2938
        %v2940 = vmul.f32 %v2939, 0.6931472
        %v2941 = vmul.f32 -0.5, %v2916
        %v2942 = vadd.f32 %v2941, 1.0
        %v2943 = vmul.f32 %v2942, %v2916
        %v2944 = vand.u32 2147483647, %v2916
        %vm2945 = vcmp.lt.f32.partialorder %v2944, 0.0004427343
        %v2946 = vsel %vm2945, %v2943, %v2940
        %v2947 = vadd.f32 %v2918, 1.0
        %v2948 = vlog2.pop %v2947
        %v2949 = vmul.f32 %v2948, 0.6931472
        %v2950 = vmul.f32 -0.5, %v2918
        %v2951 = vadd.f32 %v2950, 1.0
        %v2952 = vmul.f32 %v2951, %v2918
        %v2953 = vand.u32 2147483647, %v2918
        %vm2954 = vcmp.lt.f32.partialorder %v2953, 0.0004427343
        %v2955 = vsel %vm2954, %v2952, %v2949
        %v2956 = vadd.f32 %v2920, 1.0
        %v2957 = vlog2.pop %v2956
        %v2958 = vmul.f32 %v2957, 0.6931472
        %v2959 = vmul.f32 -0.5, %v2920
        %v2960 = vadd.f32 %v2959, 1.0
        %v2961 = vmul.f32 %v2960, %v2920
        %v2962 = vand.u32 2147483647, %v2920
        %vm2963 = vcmp.lt.f32.partialorder %v2962, 0.0004427343
        %v2964 = vsel %vm2963, %v2961, %v2958
        %v2965 = vadd.f32 %v2922, 1.0
        %v2966 = vlog2.pop %v2965
        %v2967 = vmul.f32 %v2966, 0.6931472
        %v2968 = vmul.f32 -0.5, %v2922
        %v2969 = vadd.f32 %v2968, 1.0
        %v2970 = vmul.f32 %v2969, %v2922
        %v2971 = vand.u32 2147483647, %v2922
        %vm2972 = vcmp.lt.f32.partialorder %v2971, 0.0004427343
        %v2973 = vsel %vm2972, %v2970, %v2967
        %v2974 = vadd.f32 %v2924, 1.0
        %v2975 = vlog2.pop %v2974
        %v2976 = vmul.f32 %v2975, 0.6931472
        %v2977 = vmul.f32 -0.5, %v2924
        %v2978 = vadd.f32 %v2977, 1.0
        %v2979 = vmul.f32 %v2978, %v2924
        %v2980 = vand.u32 2147483647, %v2924
        %vm2981 = vcmp.lt.f32.partialorder %v2980, 0.0004427343
        %v2982 = vsel %vm2981, %v2979, %v2976
        %v2983 = vadd.f32 %v2926, 1.0
        %v2984 = vlog2.pop %v2983
        %v2985 = vmul.f32 %v2984, 0.6931472
        %v2986 = vmul.f32 -0.5, %v2926
        %v2987 = vadd.f32 %v2986, 1.0
        %v2988 = vmul.f32 %v2987, %v2926
        %v2989 = vand.u32 2147483647, %v2926
        %vm2990 = vcmp.lt.f32.partialorder %v2989, 0.0004427343
        %v2991 = vsel %vm2990, %v2988, %v2985
        %v2992 = vadd.f32 %v2928, 1.0
        %v2993 = vlog2.pop %v2992
        %v2994 = vmul.f32 %v2993, 0.6931472
        %v2995 = vmul.f32 -0.5, %v2928
        %v2996 = vadd.f32 %v2995, 1.0
        %v2997 = vmul.f32 %v2996, %v2928
        %v2998 = vand.u32 2147483647, %v2928
        %vm2999 = vcmp.lt.f32.partialorder %v2998, 0.0004427343
        %v3000 = vsel %vm2999, %v2997, %v2994
        %v3001 = vadd.f32 %v2889, %v2937
        %v3002 = vadd.f32 %v2890, %v2946
        %v3003 = vadd.f32 %v2891, %v2955
        %v3004 = vadd.f32 %v2892, %v2964
        %v3005 = vadd.f32 %v2893, %v2973
        %v3006 = vadd.f32 %v2894, %v2982
        %v3007 = vadd.f32 %v2895, %v2991
        %v3008 = vadd.f32 %v2896, %v3000
        %v3009 = vmul.f32 %v3005, 2.0
        %v3010 = vmul.f32 %v3006, 2.0
        %v3011 = vmul.f32 %v3007, 2.0
        %v3012 = vmul.f32 %v3008, 2.0
        %v3013 = vsub.f32 0.0, %v3001
        %v3014 = vsub.f32 0.0, %v3002
        %v3015 = vsub.f32 0.0, %v3003
        %v3016 = vsub.f32 0.0, %v3004
        %v3021 = vrot.slane %v3001, 7
        %v3022 = vrot.slane %v3002, 7
        %v3023 = vrot.slane %v3003, 7
        %v3024 = vrot.slane %v3004, 7
        %v3029 = vsub.f32 %v3013, %v3021
        %v3030 = vsub.f32 %v3014, %v3022
        %v3031 = vsub.f32 %v3015, %v3023
        %v3032 = vsub.f32 %v3016, %v3024
        %v3033 = vrot.slane %v3001, 1
        %v3034 = vrot.slane %v3002, 1
        %v3035 = vrot.slane %v3003, 1
        %v3036 = vrot.slane %v3004, 1
        %v3041 = vadd.f32 %v3001, %v3033
        %v3042 = vadd.f32 %v3002, %v3034
        %v3043 = vadd.f32 %v3003, %v3035
        %v3044 = vadd.f32 %v3004, %v3036
        %v3045 = vsub.f32 %v3029, 10000.0
        %v3046 = vsub.f32 %v3030, 10000.0
        %v3047 = vsub.f32 %v3031, 10000.0
        %v3048 = vsub.f32 %v3032, 10000.0
        %v3049 = vadd.f32 %v3041, 10000.0
        %v3050 = vadd.f32 %v3042, 10000.0
        %v3051 = vadd.f32 %v3043, 10000.0
        %v3052 = vadd.f32 %v3044, 10000.0
        %v3053 = vmul.f32 %v3045, 0.99
        %v3054 = vmul.f32 %v3046, 0.99
        %v3055 = vmul.f32 %v3047, 0.99
        %v3056 = vmul.f32 %v3048, 0.99
        %v3057 = vmul.f32 %v3049, 0.99
        %v3058 = vmul.f32 %v3050, 0.99
        %v3059 = vmul.f32 %v3051, 0.99
        %v3060 = vmul.f32 %v3052, 0.99
        %v3062 = vlaneseq
        %v3063 = vshrl.u32 %v3062, 7
        %v3064 = vsub.s32 0, %v3063
        %v3065 = vrot.slane %v304, %v3064
        %v3066 = vlaneseq
        %v3067 = vshrl.u32 %v3066, 7
        %v3068 = vsub.s32 1, %v3067
        %v3069 = vrot.slane %v304, %v3068
        %v3070 = vlaneseq
        %v3071 = vshrl.u32 %v3070, 7
        %v3072 = vsub.s32 2, %v3071
        %v3073 = vrot.slane %v304, %v3072
        %v3074 = vlaneseq
        %v3075 = vshrl.u32 %v3074, 7
        %v3076 = vsub.s32 3, %v3075
        %v3077 = vrot.slane %v304, %v3076
        %v3082 = vmax.f32 %v3053, %v3065
        %v3083 = vmax.f32 %v3054, %v3069
        %v3084 = vmax.f32 %v3055, %v3073
        %v3085 = vmax.f32 %v3056, %v3077
        %v3090 = vrot.slane %v3082, 7
        %v3091 = vrot.slane %v3083, 7
        %v3092 = vrot.slane %v3084, 7
        %v3093 = vrot.slane %v3085, 7
        %v3098 = vmin.f32 %v3057, %v3090
        %v3099 = vmin.f32 %v3058, %v3091
        %v3100 = vmin.f32 %v3059, %v3092
        %v3101 = vmin.f32 %v3060, %v3093
        %v3102 = vsub.f32 %v3013, %v3029
        %v3103 = vsub.f32 %v3014, %v3030
        %v3104 = vsub.f32 %v3015, %v3031
        %v3105 = vsub.f32 %v3016, %v3032
        %v3110 = vrot.slane %v3102, 4
        %v3111 = vrot.slane %v3103, 4
        %v3112 = vrot.slane %v3104, 4
        %v3113 = vrot.slane %v3105, 4
        %v3118 = vrcp.pop %v3110
        %v3119 = vmul.f32 %v3102, %v3118
        %v3120 = vrcp.pop %v3111
        %v3121 = vmul.f32 %v3103, %v3120
        %v3122 = vrcp.pop %v3112
        %v3123 = vmul.f32 %v3104, %v3122
        %v3124 = vrcp.pop %v3113
        %v3125 = vmul.f32 %v3105, %v3124
        %v3130 = vrot.slane %v3013, 7
        %v3131 = vrot.slane %v3014, 7
        %v3132 = vrot.slane %v3015, 7
        %v3133 = vrot.slane %v3016, 7
        %v3138 = vsub.f32 %v3001, %v3130
        %v3139 = vsub.f32 %v3002, %v3131
        %v3140 = vsub.f32 %v3003, %v3132
        %v3141 = vsub.f32 %v3004, %v3133
        %v3146 = vrot.slane %v3138, 4
        %v3147 = vrot.slane %v3139, 4
        %v3148 = vrot.slane %v3140, 4
        %v3149 = vrot.slane %v3141, 4
        %v3154 = vrcp.pop %v3146
        %v3155 = vmul.f32 %v3138, %v3154
        %v3156 = vrcp.pop %v3147
        %v3157 = vmul.f32 %v3139, %v3156
        %v3158 = vrcp.pop %v3148
        %v3159 = vmul.f32 %v3140, %v3158
        %v3160 = vrcp.pop %v3149
        %v3161 = vmul.f32 %v3141, %v3160
        %v3162 = vsub.f32 %v3041, %v3001
        %v3163 = vsub.f32 %v3042, %v3002
        %v3164 = vsub.f32 %v3043, %v3003
        %v3165 = vsub.f32 %v3044, %v3004
        %v3170 = vrot.slane %v3162, 4
        %v3171 = vrot.slane %v3163, 4
        %v3172 = vrot.slane %v3164, 4
        %v3173 = vrot.slane %v3165, 4
        %v3178 = vrcp.pop %v3170
        %v3179 = vmul.f32 %v3162, %v3178
        %v3180 = vrcp.pop %v3171
        %v3181 = vmul.f32 %v3163, %v3180
        %v3182 = vrcp.pop %v3172
        %v3183 = vmul.f32 %v3164, %v3182
        %v3184 = vrcp.pop %v3173
        %v3185 = vmul.f32 %v3165, %v3184
        %v3190 = vrot.slane %v3029, 7
        %v3191 = vrot.slane %v3030, 7
        %v3192 = vrot.slane %v3031, 7
        %v3193 = vrot.slane %v3032, 7
        %v3198 = vsub.f32 %v3098, %v3190
        %v3199 = vsub.f32 %v3099, %v3191
        %v3200 = vsub.f32 %v3100, %v3192
        %v3201 = vsub.f32 %v3101, %v3193
        %v3206 = vrot.slane %v3198, 2
        %v3207 = vrot.slane %v3199, 2
        %v3208 = vrot.slane %v3200, 2
        %v3209 = vrot.slane %v3201, 2
        %v3214 = vmul.f32 %v3009, %v3206
        %v3215 = vmul.f32 %v3010, %v3207
        %v3216 = vmul.f32 %v3011, %v3208
        %v3217 = vmul.f32 %v3012, %v3209
        %v3222 = vrot.slane %v3214, 3
        %v3223 = vrot.slane %v3215, 3
        %v3224 = vrot.slane %v3216, 3
        %v3225 = vrot.slane %v3217, 3
        %v3230 = vadd.f32 %v3029, %v3222
        %v3231 = vadd.f32 %v3030, %v3223
        %v3232 = vadd.f32 %v3031, %v3224
        %v3233 = vadd.f32 %v3032, %v3225
        %v3234 = vrot.slane %v3198, 5
        %v3235 = vrot.slane %v3199, 5
        %v3236 = vrot.slane %v3200, 5
        %v3237 = vrot.slane %v3201, 5
        %v3242 = vmul.f32 %v3119, %v3234
        %v3243 = vmul.f32 %v3121, %v3235
        %v3244 = vmul.f32 %v3123, %v3236
        %v3245 = vmul.f32 %v3125, %v3237
        %v3246 = vadd.f32 %v3029, %v3242
        %v3247 = vadd.f32 %v3030, %v3243
        %v3248 = vadd.f32 %v3031, %v3244
        %v3249 = vadd.f32 %v3032, %v3245
        %v3250 = vsub.f32 %v3098, %v3130
        %v3251 = vsub.f32 %v3099, %v3131
        %v3252 = vsub.f32 %v3100, %v3132
        %v3253 = vsub.f32 %v3101, %v3133
        %v3258 = vrot.slane %v3250, 4
        %v3259 = vrot.slane %v3251, 4
        %v3260 = vrot.slane %v3252, 4
        %v3261 = vrot.slane %v3253, 4
        %v3266 = vmul.f32 %v3155, %v3258
        %v3267 = vmul.f32 %v3157, %v3259
        %v3268 = vmul.f32 %v3159, %v3260
        %v3269 = vmul.f32 %v3161, %v3261
        %v3274 = vrot.slane %v3266, 1
        %v3275 = vrot.slane %v3267, 1
        %v3276 = vrot.slane %v3268, 1
        %v3277 = vrot.slane %v3269, 1
        %v3282 = vadd.f32 %v3013, %v3274
        %v3283 = vadd.f32 %v3014, %v3275
        %v3284 = vadd.f32 %v3015, %v3276
        %v3285 = vadd.f32 %v3016, %v3277
        %v3286 = vsub.f32 %v3098, %v3001
        %v3287 = vsub.f32 %v3099, %v3002
        %v3288 = vsub.f32 %v3100, %v3003
        %v3289 = vsub.f32 %v3101, %v3004
        %v3294 = vrot.slane %v3286, 4
        %v3295 = vrot.slane %v3287, 4
        %v3296 = vrot.slane %v3288, 4
        %v3297 = vrot.slane %v3289, 4
        %v3302 = vmul.f32 %v3179, %v3294
        %v3303 = vmul.f32 %v3181, %v3295
        %v3304 = vmul.f32 %v3183, %v3296
        %v3305 = vmul.f32 %v3185, %v3297
        %v3306 = vadd.f32 %v3001, %v3302
        %v3307 = vadd.f32 %v3002, %v3303
        %v3308 = vadd.f32 %v3003, %v3304
        %v3309 = vadd.f32 %v3004, %v3305
        %v3310 = vsub.f32 %v3098, %v3041
        %v3311 = vsub.f32 %v3099, %v3042
        %v3312 = vsub.f32 %v3100, %v3043
        %v3313 = vsub.f32 %v3101, %v3044
        %v3318 = vrot.slane %v3310, 1
        %v3319 = vrot.slane %v3311, 1
        %v3320 = vrot.slane %v3312, 1
        %v3321 = vrot.slane %v3313, 1
        %v3326 = vmul.f32 %v3009, %v3318
        %v3327 = vmul.f32 %v3010, %v3319
        %v3328 = vmul.f32 %v3011, %v3320
        %v3329 = vmul.f32 %v3012, %v3321
        %v3334 = vrot.slane %v3326, 3
        %v3335 = vrot.slane %v3327, 3
        %v3336 = vrot.slane %v3328, 3
        %v3337 = vrot.slane %v3329, 3
        %v3342 = vadd.f32 %v3041, %v3334
        %v3343 = vadd.f32 %v3042, %v3335
        %v3344 = vadd.f32 %v3043, %v3336
        %v3345 = vadd.f32 %v3044, %v3337
        %vm3346 = vcmp.lt.f32.partialorder %v3098, %v3190
        %vm3347 = vcmp.lt.f32.partialorder %v3099, %v3191
        %vm3348 = vcmp.lt.f32.partialorder %v3100, %v3192
        %vm3349 = vcmp.lt.f32.partialorder %v3101, %v3193
        %vm3350 = vcmp.lt.f32.partialorder %v3098, %v3130
        %vm3351 = vcmp.lt.f32.partialorder %v3099, %v3131
        %vm3352 = vcmp.lt.f32.partialorder %v3100, %v3132
        %vm3353 = vcmp.lt.f32.partialorder %v3101, %v3133
        %vm3354 = vcmp.lt.f32.partialorder %v3098, %v3001
        %vm3355 = vcmp.lt.f32.partialorder %v3099, %v3002
        %vm3356 = vcmp.lt.f32.partialorder %v3100, %v3003
        %vm3357 = vcmp.lt.f32.partialorder %v3101, %v3004
        %vm3358 = vcmp.lt.f32.partialorder %v3098, %v3041
        %vm3359 = vcmp.lt.f32.partialorder %v3099, %v3042
        %vm3360 = vcmp.lt.f32.partialorder %v3100, %v3043
        %vm3361 = vcmp.lt.f32.partialorder %v3101, %v3044
        %v3366 = vrot.slane %v3306, 4
        %v3367 = vrot.slane %v3307, 4
        %v3368 = vrot.slane %v3308, 4
        %v3369 = vrot.slane %v3309, 4
        %v3378 = vrot.slane %v3342, 4
        %v3379 = vrot.slane %v3343, 4
        %v3380 = vrot.slane %v3344, 4
        %v3381 = vrot.slane %v3345, 4
        %v3386 = vsel %vm3358, %v3366, %v3378
        %v3387 = vsel %vm3359, %v3367, %v3379
        %v3388 = vsel %vm3360, %v3368, %v3380
        %v3389 = vsel %vm3361, %v3369, %v3381
        %v3394 = vrot.slane %v3282, 3
        %v3395 = vrot.slane %v3283, 3
        %v3396 = vrot.slane %v3284, 3
        %v3397 = vrot.slane %v3285, 3
        %v3402 = vsel %vm3354, %v3394, %v3386
        %v3403 = vsel %vm3355, %v3395, %v3387
        %v3404 = vsel %vm3356, %v3396, %v3388
        %v3405 = vsel %vm3357, %v3397, %v3389
        %v3410 = vrot.slane %v3246, 3
        %v3411 = vrot.slane %v3247, 3
        %v3412 = vrot.slane %v3248, 3
        %v3413 = vrot.slane %v3249, 3
        %v3418 = vsel %vm3350, %v3410, %v3402
        %v3419 = vsel %vm3351, %v3411, %v3403
        %v3420 = vsel %vm3352, %v3412, %v3404
        %v3421 = vsel %vm3353, %v3413, %v3405
        %v3426 = vrot.slane %v3230, 3
        %v3427 = vrot.slane %v3231, 3
        %v3428 = vrot.slane %v3232, 3
        %v3429 = vrot.slane %v3233, 3
        %v3434 = vsel %vm3346, %v3426, %v3418
        %v3435 = vsel %vm3347, %v3427, %v3419
        %v3436 = vsel %vm3348, %v3428, %v3420
        %v3437 = vsel %vm3349, %v3429, %v3421
        %v3438 = vlaneseq
        %vm3439 = vcmp.ge.s32.totalorder %v3438, 0
        %vm3440 = vcmp.lt.s32.totalorder %v3438, 512
        %vm3441 = vmand %vm3439, %vm3440
        %3442 = vst.msk [vmem:[%s288] ss:$2 sm:$0xf] %vm3441, %v302
        %v3447 = vcombine.low %v3434, %v3435
        %v3448 = vcombine.low %v3436, %v3437
        %v3450 = vunpack.c.l.s4 1966171168
        %v3451 = vunpack.c.0.s8 %v3450
        %v3452 = vlaneseq
        %v3453 = vshrl.u32 %v3452, 7
        %v3454 = vsub.s32 %v3451, %v3453
        %v3455 = vrot.slane %v3447, %v3454
        %v3457 = vunpack.c.l.s4 1966171168
        %v3458 = vunpack.c.0.s8 %v3457
        %v3459 = vlaneseq
        %v3460 = vshrl.u32 %v3459, 7
        %v3461 = vsub.s32 %v3458, %v3460
        %v3462 = vrot.slane %v3448, %v3461
        %v3463 = vcombine.low %v3455, %v3462
        %v3465 = vunpack.c.l.s4 1966171168
        %v3466 = vunpack.c.0.s8 %v3465
        %v3467 = vlaneseq
        %v3468 = vshrl.u32 %v3467, 7
        %v3469 = vsub.s32 %v3466, %v3468
        %v3470 = vrot.slane %v3463, %v3469
        %v3471 = vcombine.high %v3470, %v3470
        %s3473 = scalar_lea.vmem %s288, 1 [#allocation2]
        %3474 = vst.msk [vmem:[%s3473] ss:$2 sm:$0xf] %vm3441, %v3471
        %s3475 = sand.u32 %s186, 1
        %s3476 = scalar_lea.sflag [#allocation3], %s3475
        %s3477 = sand.u32 %s186, 1
        %s3478 = smul.addr %s3477, 8
        %s3479 = scalar_lea.vmem [#allocation2], %s3478
        // Predicated region
        $region49: #{tpu_custom_call.1} parent=47 // pred_check
          %p3480 = pneg %p196
        $region50: #{tpu_custom_call.1} parent=47 // pred_check_branch
          %3482 = sbr.rel (%p3480) target = $region52
        $region51: #{tpu_custom_call.1} parent=47 // pred_region
          %s3483 = smul.u32 4, %s21
          %s3485 = ssub.s32 128, 128
          %3486 = vsyncadd %s3476, %s3485
          %s3487 = smul.addr %s3483, 32
          %s3488 = scalar_lea.hbm %s7, %s3487
          %s3490 = sshll.u32 %s3479, 4
          %s3491 = int_to_ptr.vmem [resolvable:$true] %s3490
          %3493 = dma.vmem_to_hbm [thread:$0]  %s3491, 128, %s3488, %s3476
        $region52: #{tpu_custom_call.1} parent=47 // pred_fallthru
          _
      $region48: #{tpu_custom_call.1} parent=5 // pred_fallthru
        _
      %p3494 = scmp.le.s32.totalorder 2, %s16
      // Predicated region
      $region53: #{tpu_custom_call.1} parent=5 // pred_check
        %p3495 = pneg %p3494
      $region54: #{tpu_custom_call.1} parent=5 // pred_check_branch
        %3497 = sbr.rel (%p3495) target = $region56
      $region55: #{tpu_custom_call.1} parent=5 // pred_region
        %s3498 = ssub.s32 %s16, 2
        // Predicated region
        $region57: #{tpu_custom_call.1} parent=55 // pred_check
          %p3499 = pneg %p202
        $region58: #{tpu_custom_call.1} parent=55 // pred_check_branch
          %3501 = sbr.rel (%p3499) target = $region60
        $region59: #{tpu_custom_call.1} parent=55 // pred_region
          %s3502 = sand.u32 %s187, 1
          %s3503 = scalar_lea.sflag [#allocation3], %s3502
          %s3504 = sand.u32 %s187, 1
          %s3505 = smul.addr %s3504, 8
          %s3506 = scalar_lea.vmem [#allocation2], %s3505
          %3507 = dma.done %s3503, 128
        $region60: #{tpu_custom_call.1} parent=55 // pred_fallthru
          _
      $region56: #{tpu_custom_call.1} parent=5 // pred_fallthru
        _
    $region6: #{tpu_custom_call.1} parent=1 // loop_footer
      %s20 = sadd.s32 1, %s16
    $region7: #{tpu_custom_call.1} parent=1 // loop_footer_branch
      %15 = sbr.rel target = $region3
    $region8: #{tpu_custom_call.1} parent=1 // loop_exit
      _
    %3508 = vsyncpa [#allocation3], 1
    %s3509 = scalar_lea.sflag [#allocation3], 1
    %3510 = vsyncpa %s3509, 1

</llo_original>
